<compile_context>
chip_gen: v5e
topology: v5e:2x2
jax: 0.10.0
libtpu: 0.0.40
codegen_flags: <defaults>
</compile_context>

<pallas_src>
import functools
import math

import jax
import jax.numpy as jnp
from jax.experimental import pallas as pl
from jax.experimental.pallas import tpu as pltpu

HEADS = 128  # hard-coded in SelfAttention.__init__


def _full_spec(shape):
    """BlockSpec covering the whole array (grid=(1,))."""
    nd = len(shape)
    return pl.BlockSpec(shape, lambda i, _nd=nd: (0,) * _nd)


# ---------------------------------------------------------------- kernel ----

def fused_kernel(x_ref, xT_ref, wqT_ref, bqT_ref, wkv_ref, bkv_ref,
                 w1T_ref, b1T_ref, w2T_ref, b2T_ref, o_ref, octx_ref,
                 *, B, P, D):
    """SelfAttention + compress MLP + sum-normalize, fully fused.

    x_ref   : (B, G)    bulk input                     (G = gene_dim)
    xT_ref  : (G, B)    bulk transposed
    wqT_ref : (P, G)    query weight, transposed, d-major columns, softmax scale folded in
    bqT_ref : (P, 1)    query bias   (scaled, d-major)
    wkv_ref : (G, 2P)   key|value weights, d-major columns
    bkv_ref : (1, 2P)
    w1T_ref : (512, P)  compress layer-1 weight, transposed, d-major, zero rows past gene_dim
    b1T_ref : (512, 1)
    w2T_ref : (C, 512)  compress layer-2 weight, transposed
    b2T_ref : (C, 1)
    o_ref   : (C, B)    output (transposed; wrapper transposes back)
    octx_ref: (P, B)    VMEM scratch holding the attended context (d-major rows, batch on lanes)
    """
    H = HEADS

    # --- projections: one MXU pass each ---------------------------------------------------------
    # Q in column form (heads on sublanes) directly from a transposed matmul.
    qT = jnp.dot(wqT_ref[...], xT_ref[...],
                 preferred_element_type=jnp.float32) + bqT_ref[...]          # (P, B)
    # K and V merged into one row-form matmul.
    kv = jnp.dot(x_ref[...], wkv_ref[...],
                 preferred_element_type=jnp.float32) + bkv_ref[...]          # (B, 2P)

    # --- per-batch attention (B is small; statically unrolled) ----------------------------------
    # (For large batch, make this a grid axis with dimension_semantics=("parallel", ...) so the
    #  two v7x TensorCores split the work.)
    for b in range(B):
        # scores S[h, g] = sum_d Q[b,h,d] * K[b,g,d]    (softmax scale already folded into wq/bq)
        s = None
        for d in range(D):
            qcol = qT[d * H:(d + 1) * H, b:b + 1]          # (H, 1)  lane-broadcasts
            krow = kv[b:b + 1, d * H:(d + 1) * H]          # (1, H)  sublane-broadcasts
            prod = qcol * krow                             # (H, H)  VPU outer product
            s = prod if s is None else s + prod

        # numerically-stable softmax along g (lane axis)
        s = s - jnp.max(s, axis=-1, keepdims=True)
        e = jnp.exp(s)
        attn = e * pl.reciprocal(jnp.sum(e, axis=-1, keepdims=True), approx=True)   # (H, H)

        # context columns ctx[:, d] = attn @ V_d  -- D is tiny, so VPU multiply + lane reduction
        for d in range(D):
            vrow = kv[b:b + 1, P + d * H: P + (d + 1) * H]                     # (1, H)
            octx_ref[d * H:(d + 1) * H, b:b + 1] = jnp.sum(
                attn * vrow, axis=-1, keepdims=True)                           # (H, 1)

    # --- compress MLP, batched on the MXU (transposed layout: features on sublanes) -------------
    hT = jnp.dot(w1T_ref[...], octx_ref[...],
                 preferred_element_type=jnp.float32) + b1T_ref[...]           # (512, B)
    # ELU (alpha=1); Dropout = identity (eval).  min() avoids exp overflow on the dead branch.
    hT = jnp.where(hT > 0, hT, jnp.exp(jnp.minimum(hT, 0.0)) - 1.0)
    zT = jnp.dot(w2T_ref[...], hT,
                 preferred_element_type=jnp.float32) + b2T_ref[...]           # (C, B)
    # Softplus(beta=1), numerically stable.
    zT = jnp.maximum(zT, 0.0) + jnp.log(1.0 + jnp.exp(-jnp.abs(zT)))
    # normalized_1_sum over cell types (sublane axis); exact divide keeps rows summing to 1.
    o_ref[...] = zT / jnp.sum(zT, axis=0, keepdims=True)


# ---------------------------------------------------------------- wrapper ----

def _cost_estimate(B, G, P, C):
    H = HEADS
    D = P // H
    flops = (2 * B * G * 3 * P          # QKV projections
             + 4 * B * D * H * H        # attention scores + context (VPU)
             + 2 * B * P * 512          # compress layer 1
             + 2 * B * 512 * C)         # compress layer 2
    transcendentals = B * H * H + B * 512 + B * C
    bytes_accessed = 4 * (2 * B * G + P * G + P + G * 2 * P + 2 * P
                          + 512 * P + 512 + C * 512 + C + C * B)
    return pl.CostEstimate(flops=flops, transcendentals=transcendentals,
                           bytes_accessed=bytes_accessed)


def generator_bulk_to_sc(bulk, kparams, gene_dim, cell_type_dim):
    B = bulk.shape[0]
    G = gene_dim
    P = kparams['wqT'].shape[0]
    D = P // HEADS
    C = cell_type_dim

    x = bulk.astype(jnp.float32)
    xT = x.T  # (G, B); tiny one-time transpose so Q can be produced column-major in-kernel

    kernel = functools.partial(fused_kernel, B=B, P=P, D=D)

    outT = pl.pallas_call(
        kernel,
        grid=(1,),
        in_specs=[_full_spec((B, G)), _full_spec((G, B)),
                  _full_spec((P, G)), _full_spec((P, 1)),
                  _full_spec((G, 2 * P)), _full_spec((1, 2 * P)),
                  _full_spec((512, P)), _full_spec((512, 1)),
                  _full_spec((C, 512)), _full_spec((C, 1))],
        out_specs=_full_spec((C, B)),
        out_shape=jax.ShapeDtypeStruct((C, B), jnp.float32),
        scratch_shapes=[pltpu.VMEM((P, B), jnp.float32)],
        compiler_params=pltpu.CompilerParams(dimension_semantics=("arbitrary",)),
        cost_estimate=_cost_estimate(B, G, P, C),
    )(x, xT, kparams['wqT'], kparams['bqT'], kparams['wkv'], kparams['bkv'],
      kparams['w1T'], kparams['b1T'], kparams['w2T'], kparams['b2T'])

    return outT.T  # (B, C); 32-element transpose back to batch-major


# ------------------------------------------------------------ parameters ----

def init_params(key, gene_dim, cell_type_dim):
    """Math-layout params (weights stored (in, out)), mimicking nn.Linear U(-1/sqrt(fan_in), ...)."""
    P = (gene_dim + HEADS - 1) // HEADS * HEADS
    ks = jax.random.split(key, 10)

    def linear(kw, kb, fan_in, fan_out):
        bound = 1.0 / math.sqrt(fan_in)
        w = jax.random.uniform(kw, (fan_in, fan_out), jnp.float32, -bound, bound)
        b = jax.random.uniform(kb, (1, fan_out), jnp.float32, -bound, bound)
        return w, b

    wq, bq = linear(ks[0], ks[1], P, P)
    wk, bk = linear(ks[2], ks[3], P, P)
    wv, bv = linear(ks[4], ks[5], P, P)
    w1, b1 = linear(ks[6], ks[7], gene_dim, 512)
    w2, b2 = linear(ks[8], ks[9], 512, cell_type_dim)
    return dict(wq=wq, bq=bq, wk=wk, bk=bk, wv=wv, bv=bv,
                w1=w1, b1=b1, w2=w2, b2=b2)


def prepare_params(params, gene_dim):
    """One-time transform of math-layout params into the fused-kernel layout."""
    P = params['wq'].shape[0]
    D = P // HEADS
    scale = float(D) ** -0.5

    def pcol(w):  # permute last axis: column h*D + d  ->  d*HEADS + h  (d-major)
        lead = w.shape[:-1]
        return w.reshape(*lead, HEADS, D).swapaxes(-1, -2).reshape(*lead, P)

    # Q: scale folded in, d-major, rows sliced to gene_dim (padding rows hit zero inputs), transposed.
    wqT = pcol(params['wq'] * scale)[:gene_dim, :].T          # (P, G)
    bqT = pcol(params['bq'] * scale).T                        # (P, 1)
    # K | V merged, d-major, rows sliced to gene_dim, row-major.
    wkv = jnp.concatenate([pcol(params['wk'])[:gene_dim, :],
                           pcol(params['wv'])[:gene_dim, :]], axis=1)   # (G, 2P)
    bkv = jnp.concatenate([pcol(params['bk']), pcol(params['bv'])], axis=1)  # (1, 2P)
    # Compress layer 1: zero-pad rows (== attended[:, :gene_dim] slice), permute rows d-major, transpose.
    w1_pad = jnp.pad(params['w1'], ((0, P - gene_dim), (0, 0)))          # (P, 512)
    w1_perm = w1_pad.reshape(HEADS, D, 512).swapaxes(0, 1).reshape(P, 512)
    w1T = w1_perm.T                                                      # (512, P)
    b1T = params['b1'].T                                                 # (512, 1)
    w2T = params['w2'].T                                                 # (C, 512)
    b2T = params['b2'].T                                                 # (C, 1)
    return dict(wqT=wqT, bqT=bqT, wkv=wkv, bkv=bkv,
                w1T=w1T, b1T=b1T, w2T=w2T, b2T=b2T)


# -------------------------------------------------------------- reference ----

def reference(bulk, params, gene_dim):
    P = params['wq'].shape[0]
    D = P // HEADS
    B = bulk.shape[0]
    hp = jax.lax.Precision.HIGHEST
    x = jnp.pad(bulk, ((0, 0), (0, P - gene_dim)))
    q = jnp.dot(x, params['wq'], precision=hp) + params['bq']
    k = jnp.dot(x, params['wk'], precision=hp) + params['bk']
    v = jnp.dot(x, params['wv'], precision=hp) + params['bv']
    qh, kh, vh = (t.reshape(B, HEADS, D) for t in (q, k, v))
    att = jnp.einsum('bhd,bgd->bhg', qh, kh, precision=hp) * (float(D) ** -0.5)
    att = jax.nn.softmax(att, axis=-1)
    attended = jnp.einsum('bhg,bgd->bhd', att, vh, precision=hp).reshape(B, P)
    attended = attended[:, :gene_dim]
    h = jnp.dot(attended, params['w1'], precision=hp) + params['b1']
    h = jnp.where(h > 0, h, jnp.exp(h) - 1.0)
    z = jnp.dot(h, params['w2'], precision=hp) + params['b2']
    z = jnp.maximum(z, 0.0) + jnp.log(1.0 + jnp.exp(-jnp.abs(z)))
    return z / jnp.sum(z, axis=1, keepdims=True)


# ------------------------------------------------------------------- main ----

if __name__ == "__main__":
    B, gene_dim, cell_type_dim = 4, 200, 8   # small shapes; P = 256, head_dim = 2
    key = jax.random.PRNGKey(0)
    kp_key, kx_key = jax.random.split(key)
    params = init_params(kp_key, gene_dim, cell_type_dim)
    kparams = prepare_params(params, gene_dim)
    bulk = jax.random.uniform(kx_key, (B, gene_dim), jnp.float32)

    out = generator_bulk_to_sc(bulk, kparams, gene_dim, cell_type_dim)
    out = jax.block_until_ready(out)

    ref = reference(bulk, params, gene_dim)
    assert out.shape == (B, cell_type_dim)
    assert bool(jnp.all(jnp.isfinite(out)))
    assert bool(jnp.allclose(jnp.sum(out, axis=1), 1.0, atol=1e-4))
    assert bool(jnp.allclose(out, ref, rtol=1e-2, atol=1e-4))
    print("KERNEL_OK")
</pallas_src>

<mosaic_0001>
module attributes {stable_mosaic.version = 11 : i64} {
  func.func @fused_kernel(%arg0: i32, %arg1: memref<4x200xf32, #tpu.memory_space<vmem>>, %arg2: memref<200x4xf32, #tpu.memory_space<vmem>>, %arg3: memref<256x200xf32, #tpu.memory_space<vmem>>, %arg4: memref<256x1xf32, #tpu.memory_space<vmem>>, %arg5: memref<200x512xf32, #tpu.memory_space<vmem>>, %arg6: memref<1x512xf32, #tpu.memory_space<vmem>>, %arg7: memref<512x256xf32, #tpu.memory_space<vmem>>, %arg8: memref<512x1xf32, #tpu.memory_space<vmem>>, %arg9: memref<8x512xf32, #tpu.memory_space<vmem>>, %arg10: memref<8x1xf32, #tpu.memory_space<vmem>>, %arg11: memref<8x4xf32, #tpu.memory_space<vmem>>, %arg12: memref<256x4xf32, #tpu.memory_space<vmem>>) attributes {dimension_semantics = [#tpu.dimension_semantics<arbitrary>], iteration_bounds = array<i64: 1>, scalar_prefetch = 0 : i64, scratch_operands = 1 : i64, tpu.core_type = #tpu.core_type<tc>, window_params = [{pipeline_mode = #tpu.pipeline_mode<synchronous>, transform_indices = @transform_0, window_bounds = array<i64: 4, 200>}, {pipeline_mode = #tpu.pipeline_mode<synchronous>, transform_indices = @transform_1, window_bounds = array<i64: 200, 4>}, {pipeline_mode = #tpu.pipeline_mode<synchronous>, transform_indices = @transform_2, window_bounds = array<i64: 256, 200>}, {pipeline_mode = #tpu.pipeline_mode<synchronous>, transform_indices = @transform_3, window_bounds = array<i64: 256, 1>}, {pipeline_mode = #tpu.pipeline_mode<synchronous>, transform_indices = @transform_4, window_bounds = array<i64: 200, 512>}, {pipeline_mode = #tpu.pipeline_mode<synchronous>, transform_indices = @transform_5, window_bounds = array<i64: 1, 512>}, {pipeline_mode = #tpu.pipeline_mode<synchronous>, transform_indices = @transform_6, window_bounds = array<i64: 512, 256>}, {pipeline_mode = #tpu.pipeline_mode<synchronous>, transform_indices = @transform_7, window_bounds = array<i64: 512, 1>}, {pipeline_mode = #tpu.pipeline_mode<synchronous>, transform_indices = @transform_8, window_bounds = array<i64: 8, 512>}, {pipeline_mode = #tpu.pipeline_mode<synchronous>, transform_indices = @transform_9, window_bounds = array<i64: 8, 1>}, {pipeline_mode = #tpu.pipeline_mode<synchronous>, transform_indices = @transform_10, window_bounds = array<i64: 8, 4>}]} {
    %c0 = arith.constant 0 : index
    %c0_0 = arith.constant 0 : index
    %0 = vector.load %arg3[%c0, %c0_0] : memref<256x200xf32, #tpu.memory_space<vmem>>, vector<256x200xf32>
    %c0_1 = arith.constant 0 : index
    %c0_2 = arith.constant 0 : index
    %1 = vector.load %arg2[%c0_1, %c0_2] : memref<200x4xf32, #tpu.memory_space<vmem>>, vector<200x4xf32>
    %cst = arith.constant dense<0.000000e+00> : vector<256x4xf32>
    %2 = tpu.matmul %0, %1, %cst {dimension_numbers = #tpu.dot_dimension_numbers<[1], [0], [0], [1], [0, 0, 1, 1], [], []>} : vector<256x200xf32>, vector<200x4xf32>, vector<256x4xf32> -> vector<256x4xf32>
    %c0_3 = arith.constant 0 : index
    %c0_4 = arith.constant 0 : index
    %3 = vector.load %arg4[%c0_3, %c0_4] : memref<256x1xf32, #tpu.memory_space<vmem>>, vector<256x1xf32>
    %4 = vector.broadcast %3 : vector<256x1xf32> to vector<256x4xf32>
    %5 = arith.addf %2, %4 : vector<256x4xf32>
    %c0_5 = arith.constant 0 : index
    %c0_6 = arith.constant 0 : index
    %6 = vector.load %arg1[%c0_5, %c0_6] : memref<4x200xf32, #tpu.memory_space<vmem>>, vector<4x200xf32>
    %c0_7 = arith.constant 0 : index
    %c0_8 = arith.constant 0 : index
    %7 = vector.load %arg5[%c0_7, %c0_8] : memref<200x512xf32, #tpu.memory_space<vmem>>, vector<200x512xf32>
    %cst_9 = arith.constant dense<0.000000e+00> : vector<4x512xf32>
    %8 = tpu.matmul %6, %7, %cst_9 {dimension_numbers = #tpu.dot_dimension_numbers<[1], [0], [0], [1], [0, 0, 1, 1], [], []>} : vector<4x200xf32>, vector<200x512xf32>, vector<4x512xf32> -> vector<4x512xf32>
    %c0_10 = arith.constant 0 : index
    %c0_11 = arith.constant 0 : index
    %9 = vector.load %arg6[%c0_10, %c0_11] : memref<1x512xf32, #tpu.memory_space<vmem>>, vector<1x512xf32>
    %10 = vector.broadcast %9 : vector<1x512xf32> to vector<4x512xf32>
    %11 = arith.addf %8, %10 : vector<4x512xf32>
    %12 = vector.extract_strided_slice %5 {offsets = [0, 0], sizes = [128, 1], strides = [1, 1]} : vector<256x4xf32> to vector<128x1xf32>
    %13 = vector.extract_strided_slice %11 {offsets = [0, 0], sizes = [1, 128], strides = [1, 1]} : vector<4x512xf32> to vector<1x128xf32>
    %14 = vector.broadcast %12 : vector<128x1xf32> to vector<128x128xf32>
    %15 = vector.broadcast %13 : vector<1x128xf32> to vector<128x128xf32>
    %16 = arith.mulf %14, %15 : vector<128x128xf32>
    %17 = vector.extract_strided_slice %5 {offsets = [128, 0], sizes = [128, 1], strides = [1, 1]} : vector<256x4xf32> to vector<128x1xf32>
    %18 = vector.extract_strided_slice %11 {offsets = [0, 128], sizes = [1, 128], strides = [1, 1]} : vector<4x512xf32> to vector<1x128xf32>
    %19 = vector.broadcast %17 : vector<128x1xf32> to vector<128x128xf32>
    %20 = vector.broadcast %18 : vector<1x128xf32> to vector<128x128xf32>
    %21 = arith.mulf %19, %20 : vector<128x128xf32>
    %22 = arith.addf %16, %21 : vector<128x128xf32>
    %cst_12 = arith.constant dense<0xFF800000> : vector<128xf32>
    %23 = vector.multi_reduction <maximumf>, %22, %cst_12 [1] : vector<128x128xf32> to vector<128xf32>
    %24 = vector.shape_cast %23 : vector<128xf32> to vector<128x1xf32>
    %25 = vector.broadcast %24 : vector<128x1xf32> to vector<128x128xf32>
    %26 = arith.subf %22, %25 : vector<128x128xf32>
    %27 = math.exp %26 : vector<128x128xf32>
    %cst_13 = arith.constant dense<0.000000e+00> : vector<128xf32>
    %28 = vector.multi_reduction <add>, %27, %cst_13 [1] : vector<128x128xf32> to vector<128xf32>
    %29 = vector.shape_cast %28 : vector<128xf32> to vector<128x1xf32>
    %30 = tpu.reciprocal %29 {approx = true} : vector<128x1xf32> -> vector<128x1xf32>
    %31 = vector.broadcast %30 : vector<128x1xf32> to vector<128x128xf32>
    %32 = arith.mulf %27, %31 : vector<128x128xf32>
    %33 = vector.extract_strided_slice %11 {offsets = [0, 256], sizes = [1, 128], strides = [1, 1]} : vector<4x512xf32> to vector<1x128xf32>
    %34 = vector.broadcast %33 : vector<1x128xf32> to vector<128x128xf32>
    %35 = arith.mulf %32, %34 : vector<128x128xf32>
    %cst_14 = arith.constant dense<0.000000e+00> : vector<128xf32>
    %36 = vector.multi_reduction <add>, %35, %cst_14 [1] : vector<128x128xf32> to vector<128xf32>
    %37 = vector.shape_cast %36 : vector<128xf32> to vector<128x1xf32>
    %c0_15 = arith.constant 0 : index
    %c0_16 = arith.constant 0 : index
    %38 = vector.load %arg12[%c0_15, %c0_16] : memref<256x4xf32, #tpu.memory_space<vmem>>, vector<128x1xf32>
    tpu.vector_store %arg12[%c0_15, %c0_16], %37 {strides = array<i32>} : memref<256x4xf32, #tpu.memory_space<vmem>>, vector<128x1xf32>,
    %39 = vector.extract_strided_slice %11 {offsets = [0, 384], sizes = [1, 128], strides = [1, 1]} : vector<4x512xf32> to vector<1x128xf32>
    %40 = vector.broadcast %39 : vector<1x128xf32> to vector<128x128xf32>
    %41 = arith.mulf %32, %40 : vector<128x128xf32>
    %cst_17 = arith.constant dense<0.000000e+00> : vector<128xf32>
    %42 = vector.multi_reduction <add>, %41, %cst_17 [1] : vector<128x128xf32> to vector<128xf32>
    %43 = vector.shape_cast %42 : vector<128xf32> to vector<128x1xf32>
    %c128 = arith.constant 128 : index
    %c0_18 = arith.constant 0 : index
    %44 = vector.load %arg12[%c128, %c0_18] : memref<256x4xf32, #tpu.memory_space<vmem>>, vector<128x1xf32>
    tpu.vector_store %arg12[%c128, %c0_18], %43 {strides = array<i32>} : memref<256x4xf32, #tpu.memory_space<vmem>>, vector<128x1xf32>,
    %45 = vector.extract_strided_slice %5 {offsets = [0, 1], sizes = [128, 1], strides = [1, 1]} : vector<256x4xf32> to vector<128x1xf32>
    %46 = vector.extract_strided_slice %11 {offsets = [1, 0], sizes = [1, 128], strides = [1, 1]} : vector<4x512xf32> to vector<1x128xf32>
    %47 = vector.broadcast %45 : vector<128x1xf32> to vector<128x128xf32>
    %48 = vector.broadcast %46 : vector<1x128xf32> to vector<128x128xf32>
    %49 = arith.mulf %47, %48 : vector<128x128xf32>
    %50 = vector.extract_strided_slice %5 {offsets = [128, 1], sizes = [128, 1], strides = [1, 1]} : vector<256x4xf32> to vector<128x1xf32>
    %51 = vector.extract_strided_slice %11 {offsets = [1, 128], sizes = [1, 128], strides = [1, 1]} : vector<4x512xf32> to vector<1x128xf32>
    %52 = vector.broadcast %50 : vector<128x1xf32> to vector<128x128xf32>
    %53 = vector.broadcast %51 : vector<1x128xf32> to vector<128x128xf32>
    %54 = arith.mulf %52, %53 : vector<128x128xf32>
    %55 = arith.addf %49, %54 : vector<128x128xf32>
    %cst_19 = arith.constant dense<0xFF800000> : vector<128xf32>
    %56 = vector.multi_reduction <maximumf>, %55, %cst_19 [1] : vector<128x128xf32> to vector<128xf32>
    %57 = vector.shape_cast %56 : vector<128xf32> to vector<128x1xf32>
    %58 = vector.broadcast %57 : vector<128x1xf32> to vector<128x128xf32>
    %59 = arith.subf %55, %58 : vector<128x128xf32>
    %60 = math.exp %59 : vector<128x128xf32>
    %cst_20 = arith.constant dense<0.000000e+00> : vector<128xf32>
    %61 = vector.multi_reduction <add>, %60, %cst_20 [1] : vector<128x128xf32> to vector<128xf32>
    %62 = vector.shape_cast %61 : vector<128xf32> to vector<128x1xf32>
    %63 = tpu.reciprocal %62 {approx = true} : vector<128x1xf32> -> vector<128x1xf32>
    %64 = vector.broadcast %63 : vector<128x1xf32> to vector<128x128xf32>
    %65 = arith.mulf %60, %64 : vector<128x128xf32>
    %66 = vector.extract_strided_slice %11 {offsets = [1, 256], sizes = [1, 128], strides = [1, 1]} : vector<4x512xf32> to vector<1x128xf32>
    %67 = vector.broadcast %66 : vector<1x128xf32> to vector<128x128xf32>
    %68 = arith.mulf %65, %67 : vector<128x128xf32>
    %cst_21 = arith.constant dense<0.000000e+00> : vector<128xf32>
    %69 = vector.multi_reduction <add>, %68, %cst_21 [1] : vector<128x128xf32> to vector<128xf32>
    %70 = vector.shape_cast %69 : vector<128xf32> to vector<128x1xf32>
    %c0_22 = arith.constant 0 : index
    %c1 = arith.constant 1 : index
    %71 = vector.load %arg12[%c0_22, %c1] : memref<256x4xf32, #tpu.memory_space<vmem>>, vector<128x1xf32>
    tpu.vector_store %arg12[%c0_22, %c1], %70 {strides = array<i32>} : memref<256x4xf32, #tpu.memory_space<vmem>>, vector<128x1xf32>,
    %72 = vector.extract_strided_slice %11 {offsets = [1, 384], sizes = [1, 128], strides = [1, 1]} : vector<4x512xf32> to vector<1x128xf32>
    %73 = vector.broadcast %72 : vector<1x128xf32> to vector<128x128xf32>
    %74 = arith.mulf %65, %73 : vector<128x128xf32>
    %cst_23 = arith.constant dense<0.000000e+00> : vector<128xf32>
    %75 = vector.multi_reduction <add>, %74, %cst_23 [1] : vector<128x128xf32> to vector<128xf32>
    %76 = vector.shape_cast %75 : vector<128xf32> to vector<128x1xf32>
    %c128_24 = arith.constant 128 : index
    %c1_25 = arith.constant 1 : index
    %77 = vector.load %arg12[%c128_24, %c1_25] : memref<256x4xf32, #tpu.memory_space<vmem>>, vector<128x1xf32>
    tpu.vector_store %arg12[%c128_24, %c1_25], %76 {strides = array<i32>} : memref<256x4xf32, #tpu.memory_space<vmem>>, vector<128x1xf32>,
    %78 = vector.extract_strided_slice %5 {offsets = [0, 2], sizes = [128, 1], strides = [1, 1]} : vector<256x4xf32> to vector<128x1xf32>
    %79 = vector.extract_strided_slice %11 {offsets = [2, 0], sizes = [1, 128], strides = [1, 1]} : vector<4x512xf32> to vector<1x128xf32>
    %80 = vector.broadcast %78 : vector<128x1xf32> to vector<128x128xf32>
    %81 = vector.broadcast %79 : vector<1x128xf32> to vector<128x128xf32>
    %82 = arith.mulf %80, %81 : vector<128x128xf32>
    %83 = vector.extract_strided_slice %5 {offsets = [128, 2], sizes = [128, 1], strides = [1, 1]} : vector<256x4xf32> to vector<128x1xf32>
    %84 = vector.extract_strided_slice %11 {offsets = [2, 128], sizes = [1, 128], strides = [1, 1]} : vector<4x512xf32> to vector<1x128xf32>
    %85 = vector.broadcast %83 : vector<128x1xf32> to vector<128x128xf32>
    %86 = vector.broadcast %84 : vector<1x128xf32> to vector<128x128xf32>
    %87 = arith.mulf %85, %86 : vector<128x128xf32>
    %88 = arith.addf %82, %87 : vector<128x128xf32>
    %cst_26 = arith.constant dense<0xFF800000> : vector<128xf32>
    %89 = vector.multi_reduction <maximumf>, %88, %cst_26 [1] : vector<128x128xf32> to vector<128xf32>
    %90 = vector.shape_cast %89 : vector<128xf32> to vector<128x1xf32>
    %91 = vector.broadcast %90 : vector<128x1xf32> to vector<128x128xf32>
    %92 = arith.subf %88, %91 : vector<128x128xf32>
    %93 = math.exp %92 : vector<128x128xf32>
    %cst_27 = arith.constant dense<0.000000e+00> : vector<128xf32>
    %94 = vector.multi_reduction <add>, %93, %cst_27 [1] : vector<128x128xf32> to vector<128xf32>
    %95 = vector.shape_cast %94 : vector<128xf32> to vector<128x1xf32>
    %96 = tpu.reciprocal %95 {approx = true} : vector<128x1xf32> -> vector<128x1xf32>
    %97 = vector.broadcast %96 : vector<128x1xf32> to vector<128x128xf32>
    %98 = arith.mulf %93, %97 : vector<128x128xf32>
    %99 = vector.extract_strided_slice %11 {offsets = [2, 256], sizes = [1, 128], strides = [1, 1]} : vector<4x512xf32> to vector<1x128xf32>
    %100 = vector.broadcast %99 : vector<1x128xf32> to vector<128x128xf32>
    %101 = arith.mulf %98, %100 : vector<128x128xf32>
    %cst_28 = arith.constant dense<0.000000e+00> : vector<128xf32>
    %102 = vector.multi_reduction <add>, %101, %cst_28 [1] : vector<128x128xf32> to vector<128xf32>
    %103 = vector.shape_cast %102 : vector<128xf32> to vector<128x1xf32>
    %c0_29 = arith.constant 0 : index
    %c2 = arith.constant 2 : index
    %104 = vector.load %arg12[%c0_29, %c2] : memref<256x4xf32, #tpu.memory_space<vmem>>, vector<128x1xf32>
    tpu.vector_store %arg12[%c0_29, %c2], %103 {strides = array<i32>} : memref<256x4xf32, #tpu.memory_space<vmem>>, vector<128x1xf32>,
    %105 = vector.extract_strided_slice %11 {offsets = [2, 384], sizes = [1, 128], strides = [1, 1]} : vector<4x512xf32> to vector<1x128xf32>
    %106 = vector.broadcast %105 : vector<1x128xf32> to vector<128x128xf32>
    %107 = arith.mulf %98, %106 : vector<128x128xf32>
    %cst_30 = arith.constant dense<0.000000e+00> : vector<128xf32>
    %108 = vector.multi_reduction <add>, %107, %cst_30 [1] : vector<128x128xf32> to vector<128xf32>
    %109 = vector.shape_cast %108 : vector<128xf32> to vector<128x1xf32>
    %c128_31 = arith.constant 128 : index
    %c2_32 = arith.constant 2 : index
    %110 = vector.load %arg12[%c128_31, %c2_32] : memref<256x4xf32, #tpu.memory_space<vmem>>, vector<128x1xf32>
    tpu.vector_store %arg12[%c128_31, %c2_32], %109 {strides = array<i32>} : memref<256x4xf32, #tpu.memory_space<vmem>>, vector<128x1xf32>,
    %111 = vector.extract_strided_slice %5 {offsets = [0, 3], sizes = [128, 1], strides = [1, 1]} : vector<256x4xf32> to vector<128x1xf32>
    %112 = vector.extract_strided_slice %11 {offsets = [3, 0], sizes = [1, 128], strides = [1, 1]} : vector<4x512xf32> to vector<1x128xf32>
    %113 = vector.broadcast %111 : vector<128x1xf32> to vector<128x128xf32>
    %114 = vector.broadcast %112 : vector<1x128xf32> to vector<128x128xf32>
    %115 = arith.mulf %113, %114 : vector<128x128xf32>
    %116 = vector.extract_strided_slice %5 {offsets = [128, 3], sizes = [128, 1], strides = [1, 1]} : vector<256x4xf32> to vector<128x1xf32>
    %117 = vector.extract_strided_slice %11 {offsets = [3, 128], sizes = [1, 128], strides = [1, 1]} : vector<4x512xf32> to vector<1x128xf32>
    %118 = vector.broadcast %116 : vector<128x1xf32> to vector<128x128xf32>
    %119 = vector.broadcast %117 : vector<1x128xf32> to vector<128x128xf32>
    %120 = arith.mulf %118, %119 : vector<128x128xf32>
    %121 = arith.addf %115, %120 : vector<128x128xf32>
    %cst_33 = arith.constant dense<0xFF800000> : vector<128xf32>
    %122 = vector.multi_reduction <maximumf>, %121, %cst_33 [1] : vector<128x128xf32> to vector<128xf32>
    %123 = vector.shape_cast %122 : vector<128xf32> to vector<128x1xf32>
    %124 = vector.broadcast %123 : vector<128x1xf32> to vector<128x128xf32>
    %125 = arith.subf %121, %124 : vector<128x128xf32>
    %126 = math.exp %125 : vector<128x128xf32>
    %cst_34 = arith.constant dense<0.000000e+00> : vector<128xf32>
    %127 = vector.multi_reduction <add>, %126, %cst_34 [1] : vector<128x128xf32> to vector<128xf32>
    %128 = vector.shape_cast %127 : vector<128xf32> to vector<128x1xf32>
    %129 = tpu.reciprocal %128 {approx = true} : vector<128x1xf32> -> vector<128x1xf32>
    %130 = vector.broadcast %129 : vector<128x1xf32> to vector<128x128xf32>
    %131 = arith.mulf %126, %130 : vector<128x128xf32>
    %132 = vector.extract_strided_slice %11 {offsets = [3, 256], sizes = [1, 128], strides = [1, 1]} : vector<4x512xf32> to vector<1x128xf32>
    %133 = vector.broadcast %132 : vector<1x128xf32> to vector<128x128xf32>
    %134 = arith.mulf %131, %133 : vector<128x128xf32>
    %cst_35 = arith.constant dense<0.000000e+00> : vector<128xf32>
    %135 = vector.multi_reduction <add>, %134, %cst_35 [1] : vector<128x128xf32> to vector<128xf32>
    %136 = vector.shape_cast %135 : vector<128xf32> to vector<128x1xf32>
    %c0_36 = arith.constant 0 : index
    %c3 = arith.constant 3 : index
    %137 = vector.load %arg12[%c0_36, %c3] : memref<256x4xf32, #tpu.memory_space<vmem>>, vector<128x1xf32>
    tpu.vector_store %arg12[%c0_36, %c3], %136 {strides = array<i32>} : memref<256x4xf32, #tpu.memory_space<vmem>>, vector<128x1xf32>,
    %138 = vector.extract_strided_slice %11 {offsets = [3, 384], sizes = [1, 128], strides = [1, 1]} : vector<4x512xf32> to vector<1x128xf32>
    %139 = vector.broadcast %138 : vector<1x128xf32> to vector<128x128xf32>
    %140 = arith.mulf %131, %139 : vector<128x128xf32>
    %cst_37 = arith.constant dense<0.000000e+00> : vector<128xf32>
    %141 = vector.multi_reduction <add>, %140, %cst_37 [1] : vector<128x128xf32> to vector<128xf32>
    %142 = vector.shape_cast %141 : vector<128xf32> to vector<128x1xf32>
    %c128_38 = arith.constant 128 : index
    %c3_39 = arith.constant 3 : index
    %143 = vector.load %arg12[%c128_38, %c3_39] : memref<256x4xf32, #tpu.memory_space<vmem>>, vector<128x1xf32>
    tpu.vector_store %arg12[%c128_38, %c3_39], %142 {strides = array<i32>} : memref<256x4xf32, #tpu.memory_space<vmem>>, vector<128x1xf32>,
    %c0_40 = arith.constant 0 : index
    %c0_41 = arith.constant 0 : index
    %144 = vector.load %arg7[%c0_40, %c0_41] : memref<512x256xf32, #tpu.memory_space<vmem>>, vector<512x256xf32>
    %c0_42 = arith.constant 0 : index
    %c0_43 = arith.constant 0 : index
    %145 = vector.load %arg12[%c0_42, %c0_43] : memref<256x4xf32, #tpu.memory_space<vmem>>, vector<256x4xf32>
    %cst_44 = arith.constant dense<0.000000e+00> : vector<512x4xf32>
    %146 = tpu.matmul %144, %145, %cst_44 {dimension_numbers = #tpu.dot_dimension_numbers<[1], [0], [0], [1], [0, 0, 1, 1], [], []>} : vector<512x256xf32>, vector<256x4xf32>, vector<512x4xf32> -> vector<512x4xf32>
    %c0_45 = arith.constant 0 : index
    %c0_46 = arith.constant 0 : index
    %147 = vector.load %arg8[%c0_45, %c0_46] : memref<512x1xf32, #tpu.memory_space<vmem>>, vector<512x1xf32>
    %148 = vector.broadcast %147 : vector<512x1xf32> to vector<512x4xf32>
    %149 = arith.addf %146, %148 : vector<512x4xf32>
    %cst_47 = arith.constant 0.000000e+00 : f32
    %150 = vector.broadcast %cst_47 : f32 to vector<512x4xf32>
    %151 = arith.cmpf ogt, %149, %150 : vector<512x4xf32>
    %cst_48 = arith.constant 0.000000e+00 : f32
    %152 = vector.broadcast %cst_48 : f32 to vector<512x4xf32>
    %153 = arith.minimumf %149, %152 : vector<512x4xf32>
    %154 = math.exp %153 : vector<512x4xf32>
    %cst_49 = arith.constant 1.000000e+00 : f32
    %155 = vector.broadcast %cst_49 : f32 to vector<512x4xf32>
    %156 = arith.subf %154, %155 : vector<512x4xf32>
    %157 = arith.select %151, %149, %156 : vector<512x4xi1>, vector<512x4xf32>
    %c0_50 = arith.constant 0 : index
    %c0_51 = arith.constant 0 : index
    %158 = vector.load %arg9[%c0_50, %c0_51] : memref<8x512xf32, #tpu.memory_space<vmem>>, vector<8x512xf32>
    %cst_52 = arith.constant dense<0.000000e+00> : vector<8x4xf32>
    %159 = tpu.matmul %158, %157, %cst_52 {dimension_numbers = #tpu.dot_dimension_numbers<[1], [0], [0], [1], [0, 0, 1, 1], [], []>} : vector<8x512xf32>, vector<512x4xf32>, vector<8x4xf32> -> vector<8x4xf32>
    %c0_53 = arith.constant 0 : index
    %c0_54 = arith.constant 0 : index
    %160 = vector.load %arg10[%c0_53, %c0_54] : memref<8x1xf32, #tpu.memory_space<vmem>>, vector<8x1xf32>
    %161 = vector.broadcast %160 : vector<8x1xf32> to vector<8x4xf32>
    %162 = arith.addf %159, %161 : vector<8x4xf32>
    %cst_55 = arith.constant 0.000000e+00 : f32
    %163 = vector.broadcast %cst_55 : f32 to vector<8x4xf32>
    %164 = arith.maximumf %162, %163 : vector<8x4xf32>
    %165 = math.absf %162 : vector<8x4xf32>
    %cst_56 = arith.constant 0.000000e+00 : f32
    %166 = vector.broadcast %cst_56 : f32 to vector<8x4xf32>
    %167 = arith.subf %166, %165 : vector<8x4xf32>
    %168 = math.exp %167 : vector<8x4xf32>
    %cst_57 = arith.constant 1.000000e+00 : f32
    %169 = vector.broadcast %cst_57 : f32 to vector<8x4xf32>
    %170 = arith.addf %169, %168 : vector<8x4xf32>
    %171 = math.log %170 : vector<8x4xf32>
    %172 = arith.addf %164, %171 : vector<8x4xf32>
    %cst_58 = arith.constant dense<0.000000e+00> : vector<4xf32>
    %173 = vector.multi_reduction <add>, %172, %cst_58 [0] : vector<8x4xf32> to vector<4xf32>
    %174 = vector.shape_cast %173 : vector<4xf32> to vector<1x4xf32>
    %175 = vector.broadcast %174 : vector<1x4xf32> to vector<8x4xf32>
    %176 = arith.divf %172, %175 : vector<8x4xf32>
    %c0_59 = arith.constant 0 : index
    %c0_60 = arith.constant 0 : index
    %177 = vector.load %arg11[%c0_59, %c0_60] : memref<8x4xf32, #tpu.memory_space<vmem>>, vector<8x4xf32>
    tpu.vector_store %arg11[%c0_59, %c0_60], %176 {strides = array<i32>} : memref<8x4xf32, #tpu.memory_space<vmem>>, vector<8x4xf32>,
    return
  }
  func.func @transform_0(%arg0: i32) -> (i32, i32) {
    %c0_i32 = arith.constant 0 : i32
    %c0_i32_0 = arith.constant 0 : i32
    %c0_i32_1 = arith.constant 0 : i32
    return %c0_i32, %c0_i32_0 : i32, i32
  }
  func.func @transform_1(%arg0: i32) -> (i32, i32) {
    %c0_i32 = arith.constant 0 : i32
    %c0_i32_0 = arith.constant 0 : i32
    %c0_i32_1 = arith.constant 0 : i32
    return %c0_i32, %c0_i32_0 : i32, i32
  }
  func.func @transform_2(%arg0: i32) -> (i32, i32) {
    %c0_i32 = arith.constant 0 : i32
    %c0_i32_0 = arith.constant 0 : i32
    %c0_i32_1 = arith.constant 0 : i32
    return %c0_i32, %c0_i32_0 : i32, i32
  }
  func.func @transform_3(%arg0: i32) -> (i32, i32) {
    %c0_i32 = arith.constant 0 : i32
    %c0_i32_0 = arith.constant 0 : i32
    %c0_i32_1 = arith.constant 0 : i32
    return %c0_i32, %c0_i32_0 : i32, i32
  }
  func.func @transform_4(%arg0: i32) -> (i32, i32) {
    %c0_i32 = arith.constant 0 : i32
    %c0_i32_0 = arith.constant 0 : i32
    %c0_i32_1 = arith.constant 0 : i32
    return %c0_i32, %c0_i32_0 : i32, i32
  }
  func.func @transform_5(%arg0: i32) -> (i32, i32) {
    %c0_i32 = arith.constant 0 : i32
    %c0_i32_0 = arith.constant 0 : i32
    %c0_i32_1 = arith.constant 0 : i32
    return %c0_i32, %c0_i32_0 : i32, i32
  }
  func.func @transform_6(%arg0: i32) -> (i32, i32) {
    %c0_i32 = arith.constant 0 : i32
    %c0_i32_0 = arith.constant 0 : i32
    %c0_i32_1 = arith.constant 0 : i32
    return %c0_i32, %c0_i32_0 : i32, i32
  }
  func.func @transform_7(%arg0: i32) -> (i32, i32) {
    %c0_i32 = arith.constant 0 : i32
    %c0_i32_0 = arith.constant 0 : i32
    %c0_i32_1 = arith.constant 0 : i32
    return %c0_i32, %c0_i32_0 : i32, i32
  }
  func.func @transform_8(%arg0: i32) -> (i32, i32) {
    %c0_i32 = arith.constant 0 : i32
    %c0_i32_0 = arith.constant 0 : i32
    %c0_i32_1 = arith.constant 0 : i32
    return %c0_i32, %c0_i32_0 : i32, i32
  }
  func.func @transform_9(%arg0: i32) -> (i32, i32) {
    %c0_i32 = arith.constant 0 : i32
    %c0_i32_0 = arith.constant 0 : i32
    %c0_i32_1 = arith.constant 0 : i32
    return %c0_i32, %c0_i32_0 : i32, i32
  }
  func.func @transform_10(%arg0: i32) -> (i32, i32) {
    %c0_i32 = arith.constant 0 : i32
    %c0_i32_0 = arith.constant 0 : i32
    %c0_i32_1 = arith.constant 0 : i32
    return %c0_i32, %c0_i32_0 : i32, i32
  }
}

</mosaic_0001>

<llo_original>
// kernel: tpu_custom_call.1
$region0: #{tpu_custom_call.1}
  #allocation0 [shape = 'u32[]', space=smem, size = 0x4, offset = 0x4, fixed_abs, tag = 'smem constant byte address 0x4 - core index']
  #allocation1 [shape = 'u32[72,128]{1,0:T(1,128)}', space=vmem, size = 0x9000, scoped, tag = 'internal scratch']
  #allocation2 [shape = 'f32[256,4]{1,0:T(8,128)}', space=vmem, size = 0x20000, scoped, tag = 'scratch operand']
  %s0 = inlined_call_operand.vmem [shape: f32[4,200], index: 0, kind: input, shape index: {}]
  %s1 = inlined_call_operand.vmem [shape: f32[200,4], index: 1, kind: input, shape index: {}]
  %s2 = inlined_call_operand.vmem [shape: f32[256,200], index: 2, kind: input, shape index: {}]
  %s3 = inlined_call_operand.vmem [shape: f32[256,1], index: 3, kind: input, shape index: {}]
  %s4 = inlined_call_operand.vmem [shape: f32[200,512], index: 4, kind: input, shape index: {}]
  %s5 = inlined_call_operand.vmem [shape: f32[1,512], index: 5, kind: input, shape index: {}]
  %s6 = inlined_call_operand.vmem [shape: f32[512,256], index: 6, kind: input, shape index: {}]
  %s7 = inlined_call_operand.vmem [shape: f32[512,1], index: 7, kind: input, shape index: {}]
  %s8 = inlined_call_operand.vmem [shape: f32[8,512], index: 8, kind: input, shape index: {}]
  %s9 = inlined_call_operand.vmem [shape: f32[8,1], index: 9, kind: input, shape index: {}]
  %s10 = inlined_call_operand.vmem [shape: f32[8,4], index: 10, kind: output, shape index: {}]
  %s11 = sld [smem:[#allocation0]]
  $region50: #{tpu_custom_call.1} parent=0
    _
  %s13 = ssub.s32 1, %s11
  %s14 = scalar_select 0, %s13, %s11
  // Predicated region
  $region2: #{tpu_custom_call.1} parent=0 // pred_check
    _
  $region3: #{tpu_custom_call.1} parent=0 // pred_check_branch
    %16 = sbr.rel (0) target = $region5
  $region4: #{tpu_custom_call.1} parent=0 // pred_region
    _
  $region5: #{tpu_custom_call.1} parent=0 // pred_fallthru
    _
  // Predicated region
  $region6: #{tpu_custom_call.1} parent=0 // pred_check
    _
  $region7: #{tpu_custom_call.1} parent=0 // pred_check_branch
    %18 = sbr.rel (0) target = $region9
  $region8: #{tpu_custom_call.1} parent=0 // pred_region
    _
  $region9: #{tpu_custom_call.1} parent=0 // pred_fallthru
    _
  // Predicated region
  $region10: #{tpu_custom_call.1} parent=0 // pred_check
    _
  $region11: #{tpu_custom_call.1} parent=0 // pred_check_branch
    %20 = sbr.rel (0) target = $region13
  $region12: #{tpu_custom_call.1} parent=0 // pred_region
    _
  $region13: #{tpu_custom_call.1} parent=0 // pred_fallthru
    _
  // Predicated region
  $region14: #{tpu_custom_call.1} parent=0 // pred_check
    _
  $region15: #{tpu_custom_call.1} parent=0 // pred_check_branch
    %22 = sbr.rel (0) target = $region17
  $region16: #{tpu_custom_call.1} parent=0 // pred_region
    _
  $region17: #{tpu_custom_call.1} parent=0 // pred_fallthru
    _
  // Predicated region
  $region18: #{tpu_custom_call.1} parent=0 // pred_check
    _
  $region19: #{tpu_custom_call.1} parent=0 // pred_check_branch
    %24 = sbr.rel (0) target = $region21
  $region20: #{tpu_custom_call.1} parent=0 // pred_region
    _
  $region21: #{tpu_custom_call.1} parent=0 // pred_fallthru
    _
  // Predicated region
  $region22: #{tpu_custom_call.1} parent=0 // pred_check
    _
  $region23: #{tpu_custom_call.1} parent=0 // pred_check_branch
    %26 = sbr.rel (0) target = $region25
  $region24: #{tpu_custom_call.1} parent=0 // pred_region
    _
  $region25: #{tpu_custom_call.1} parent=0 // pred_fallthru
    _
  // Predicated region
  $region26: #{tpu_custom_call.1} parent=0 // pred_check
    _
  $region27: #{tpu_custom_call.1} parent=0 // pred_check_branch
    %28 = sbr.rel (0) target = $region29
  $region28: #{tpu_custom_call.1} parent=0 // pred_region
    _
  $region29: #{tpu_custom_call.1} parent=0 // pred_fallthru
    _
  // Predicated region
  $region30: #{tpu_custom_call.1} parent=0 // pred_check
    _
  $region31: #{tpu_custom_call.1} parent=0 // pred_check_branch
    %30 = sbr.rel (0) target = $region33
  $region32: #{tpu_custom_call.1} parent=0 // pred_region
    _
  $region33: #{tpu_custom_call.1} parent=0 // pred_fallthru
    _
  // Predicated region
  $region34: #{tpu_custom_call.1} parent=0 // pred_check
    _
  $region35: #{tpu_custom_call.1} parent=0 // pred_check_branch
    %32 = sbr.rel (0) target = $region37
  $region36: #{tpu_custom_call.1} parent=0 // pred_region
    _
  $region37: #{tpu_custom_call.1} parent=0 // pred_fallthru
    _
  // Predicated region
  $region38: #{tpu_custom_call.1} parent=0 // pred_check
    _
  $region39: #{tpu_custom_call.1} parent=0 // pred_check_branch
    %34 = sbr.rel (0) target = $region41
  $region40: #{tpu_custom_call.1} parent=0 // pred_region
    _
  $region41: #{tpu_custom_call.1} parent=0 // pred_fallthru
    _
  %v35 = vld [vmem:[%s2] sm:$0xff]
  %v36 = vld [vmem:[%s2 + $0x8] sm:$0xff]
  %v37 = vld [vmem:[%s2 + $0x10] sm:$0xff]
  %v38 = vld [vmem:[%s2 + $0x18] sm:$0xff]
  %v39 = vld [vmem:[%s2 + $0x20] sm:$0xff]
  %v40 = vld [vmem:[%s2 + $0x28] sm:$0xff]
  %v41 = vld [vmem:[%s2 + $0x30] sm:$0xff]
  %v42 = vld [vmem:[%s2 + $0x38] sm:$0xff]
  %v43 = vld [vmem:[%s2 + $0x40] sm:$0xff]
  %v44 = vld [vmem:[%s2 + $0x48] sm:$0xff]
  %v45 = vld [vmem:[%s2 + $0x50] sm:$0xff]
  %v46 = vld [vmem:[%s2 + $0x58] sm:$0xff]
  %v47 = vld [vmem:[%s2 + $0x60] sm:$0xff]
  %v48 = vld [vmem:[%s2 + $0x68] sm:$0xff]
  %v49 = vld [vmem:[%s2 + $0x70] sm:$0xff]
  %v50 = vld [vmem:[%s2 + $0x78] sm:$0xff]
  %v51 = vld [vmem:[%s2 + $0x80] sm:$0xff]
  %v52 = vld [vmem:[%s2 + $0x88] sm:$0xff]
  %v53 = vld [vmem:[%s2 + $0x90] sm:$0xff]
  %v54 = vld [vmem:[%s2 + $0x98] sm:$0xff]
  %v55 = vld [vmem:[%s2 + $0xa0] sm:$0xff]
  %v56 = vld [vmem:[%s2 + $0xa8] sm:$0xff]
  %v57 = vld [vmem:[%s2 + $0xb0] sm:$0xff]
  %v58 = vld [vmem:[%s2 + $0xb8] sm:$0xff]
  %v59 = vld [vmem:[%s2 + $0xc0] sm:$0xff]
  %v60 = vld [vmem:[%s2 + $0xc8] sm:$0xff]
  %v61 = vld [vmem:[%s2 + $0xd0] sm:$0xff]
  %v62 = vld [vmem:[%s2 + $0xd8] sm:$0xff]
  %v63 = vld [vmem:[%s2 + $0xe0] sm:$0xff]
  %v64 = vld [vmem:[%s2 + $0xe8] sm:$0xff]
  %v65 = vld [vmem:[%s2 + $0xf0] sm:$0xff]
  %v66 = vld [vmem:[%s2 + $0xf8] sm:$0xff]
  %v67 = vld [vmem:[%s2 + $0x100] sm:$0xff]
  %v68 = vld [vmem:[%s2 + $0x108] sm:$0xff]
  %v69 = vld [vmem:[%s2 + $0x110] sm:$0xff]
  %v70 = vld [vmem:[%s2 + $0x118] sm:$0xff]
  %v71 = vld [vmem:[%s2 + $0x120] sm:$0xff]
  %v72 = vld [vmem:[%s2 + $0x128] sm:$0xff]
  %v73 = vld [vmem:[%s2 + $0x130] sm:$0xff]
  %v74 = vld [vmem:[%s2 + $0x138] sm:$0xff]
  %v75 = vld [vmem:[%s2 + $0x140] sm:$0xff]
  %v76 = vld [vmem:[%s2 + $0x148] sm:$0xff]
  %v77 = vld [vmem:[%s2 + $0x150] sm:$0xff]
  %v78 = vld [vmem:[%s2 + $0x158] sm:$0xff]
  %v79 = vld [vmem:[%s2 + $0x160] sm:$0xff]
  %v80 = vld [vmem:[%s2 + $0x168] sm:$0xff]
  %v81 = vld [vmem:[%s2 + $0x170] sm:$0xff]
  %v82 = vld [vmem:[%s2 + $0x178] sm:$0xff]
  %v83 = vld [vmem:[%s2 + $0x180] sm:$0xff]
  %v84 = vld [vmem:[%s2 + $0x188] sm:$0xff]
  %v85 = vld [vmem:[%s2 + $0x190] sm:$0xff]
  %v86 = vld [vmem:[%s2 + $0x198] sm:$0xff]
  %v87 = vld [vmem:[%s2 + $0x1a0] sm:$0xff]
  %v88 = vld [vmem:[%s2 + $0x1a8] sm:$0xff]
  %v89 = vld [vmem:[%s2 + $0x1b0] sm:$0xff]
  %v90 = vld [vmem:[%s2 + $0x1b8] sm:$0xff]
  %v91 = vld [vmem:[%s2 + $0x1c0] sm:$0xff]
  %v92 = vld [vmem:[%s2 + $0x1c8] sm:$0xff]
  %v93 = vld [vmem:[%s2 + $0x1d0] sm:$0xff]
  %v94 = vld [vmem:[%s2 + $0x1d8] sm:$0xff]
  %v95 = vld [vmem:[%s2 + $0x1e0] sm:$0xff]
  %v96 = vld [vmem:[%s2 + $0x1e8] sm:$0xff]
  %v97 = vld [vmem:[%s2 + $0x1f0] sm:$0xff]
  %v98 = vld [vmem:[%s2 + $0x1f8] sm:$0xff]
  %v99 = vld [vmem:[%s1] sm:$0xff]
  %v100 = vld [vmem:[%s1 + $0x8] sm:$0xff]
  %v101 = vld [vmem:[%s1 + $0x10] sm:$0xff]
  %v102 = vld [vmem:[%s1 + $0x18] sm:$0xff]
  %v103 = vld [vmem:[%s1 + $0x20] sm:$0xff]
  %v104 = vld [vmem:[%s1 + $0x28] sm:$0xff]
  %v105 = vld [vmem:[%s1 + $0x30] sm:$0xff]
  %v106 = vld [vmem:[%s1 + $0x38] sm:$0xff]
  %v107 = vld [vmem:[%s1 + $0x40] sm:$0xff]
  %v108 = vld [vmem:[%s1 + $0x48] sm:$0xff]
  %v109 = vld [vmem:[%s1 + $0x50] sm:$0xff]
  %v110 = vld [vmem:[%s1 + $0x58] sm:$0xff]
  %v111 = vld [vmem:[%s1 + $0x60] sm:$0xff]
  %v112 = vld [vmem:[%s1 + $0x68] sm:$0xff]
  %v113 = vld [vmem:[%s1 + $0x70] sm:$0xff]
  %v114 = vld [vmem:[%s1 + $0x78] sm:$0xff]
  %v115 = vld [vmem:[%s1 + $0x80] sm:$0xff]
  %v116 = vld [vmem:[%s1 + $0x88] sm:$0xff]
  %v117 = vld [vmem:[%s1 + $0x90] sm:$0xff]
  %v118 = vld [vmem:[%s1 + $0x98] sm:$0xff]
  %v119 = vld [vmem:[%s1 + $0xa0] sm:$0xff]
  %v120 = vld [vmem:[%s1 + $0xa8] sm:$0xff]
  %v121 = vld [vmem:[%s1 + $0xb0] sm:$0xff]
  %v122 = vld [vmem:[%s1 + $0xb8] sm:$0xff]
  %v123 = vld [vmem:[%s1 + $0xc0] sm:$0xff]
  %v124 = vld [vmem:[%s3] sm:$0xff]
  %v125 = vld [vmem:[%s3 + $0x8] sm:$0xff]
  %v126 = vld [vmem:[%s3 + $0x10] sm:$0xff]
  %v127 = vld [vmem:[%s3 + $0x18] sm:$0xff]
  %v128 = vld [vmem:[%s3 + $0x20] sm:$0xff]
  %v129 = vld [vmem:[%s3 + $0x28] sm:$0xff]
  %v130 = vld [vmem:[%s3 + $0x30] sm:$0xff]
  %v131 = vld [vmem:[%s3 + $0x38] sm:$0xff]
  %v132 = vld [vmem:[%s3 + $0x40] sm:$0xff]
  %v133 = vld [vmem:[%s3 + $0x48] sm:$0xff]
  %v134 = vld [vmem:[%s3 + $0x50] sm:$0xff]
  %v135 = vld [vmem:[%s3 + $0x58] sm:$0xff]
  %v136 = vld [vmem:[%s3 + $0x60] sm:$0xff]
  %v137 = vld [vmem:[%s3 + $0x68] sm:$0xff]
  %v138 = vld [vmem:[%s3 + $0x70] sm:$0xff]
  %v139 = vld [vmem:[%s3 + $0x78] sm:$0xff]
  %v140 = vld [vmem:[%s3 + $0x80] sm:$0xff]
  %v141 = vld [vmem:[%s3 + $0x88] sm:$0xff]
  %v142 = vld [vmem:[%s3 + $0x90] sm:$0xff]
  %v143 = vld [vmem:[%s3 + $0x98] sm:$0xff]
  %v144 = vld [vmem:[%s3 + $0xa0] sm:$0xff]
  %v145 = vld [vmem:[%s3 + $0xa8] sm:$0xff]
  %v146 = vld [vmem:[%s3 + $0xb0] sm:$0xff]
  %v147 = vld [vmem:[%s3 + $0xb8] sm:$0xff]
  %v148 = vld [vmem:[%s3 + $0xc0] sm:$0xff]
  %v149 = vld [vmem:[%s3 + $0xc8] sm:$0xff]
  %v150 = vld [vmem:[%s3 + $0xd0] sm:$0xff]
  %v151 = vld [vmem:[%s3 + $0xd8] sm:$0xff]
  %v152 = vld [vmem:[%s3 + $0xe0] sm:$0xff]
  %v153 = vld [vmem:[%s3 + $0xe8] sm:$0xff]
  %v154 = vld [vmem:[%s3 + $0xf0] sm:$0xff]
  %v155 = vld [vmem:[%s3 + $0xf8] sm:$0xff]
  %157 = vset.pattern.permute.xlu0 0
  %158 = vperm.xlu0 %157, %v124
  %v159 = vpop.permute.xlu0 %158
  %162 = vset.pattern.permute.xlu0 0
  %163 = vperm.xlu0 %162, %v125
  %v164 = vpop.permute.xlu0 %163
  %167 = vset.pattern.permute.xlu0 0
  %168 = vperm.xlu0 %167, %v126
  %v169 = vpop.permute.xlu0 %168
  %172 = vset.pattern.permute.xlu0 0
  %173 = vperm.xlu0 %172, %v127
  %v174 = vpop.permute.xlu0 %173
  %177 = vset.pattern.permute.xlu0 0
  %178 = vperm.xlu0 %177, %v128
  %v179 = vpop.permute.xlu0 %178
  %182 = vset.pattern.permute.xlu0 0
  %183 = vperm.xlu0 %182, %v129
  %v184 = vpop.permute.xlu0 %183
  %187 = vset.pattern.permute.xlu0 0
  %188 = vperm.xlu0 %187, %v130
  %v189 = vpop.permute.xlu0 %188
  %192 = vset.pattern.permute.xlu0 0
  %193 = vperm.xlu0 %192, %v131
  %v194 = vpop.permute.xlu0 %193
  %197 = vset.pattern.permute.xlu0 0
  %198 = vperm.xlu0 %197, %v132
  %v199 = vpop.permute.xlu0 %198
  %202 = vset.pattern.permute.xlu0 0
  %203 = vperm.xlu0 %202, %v133
  %v204 = vpop.permute.xlu0 %203
  %207 = vset.pattern.permute.xlu0 0
  %208 = vperm.xlu0 %207, %v134
  %v209 = vpop.permute.xlu0 %208
  %212 = vset.pattern.permute.xlu0 0
  %213 = vperm.xlu0 %212, %v135
  %v214 = vpop.permute.xlu0 %213
  %217 = vset.pattern.permute.xlu0 0
  %218 = vperm.xlu0 %217, %v136
  %v219 = vpop.permute.xlu0 %218
  %222 = vset.pattern.permute.xlu0 0
  %223 = vperm.xlu0 %222, %v137
  %v224 = vpop.permute.xlu0 %223
  %227 = vset.pattern.permute.xlu0 0
  %228 = vperm.xlu0 %227, %v138
  %v229 = vpop.permute.xlu0 %228
  %232 = vset.pattern.permute.xlu0 0
  %233 = vperm.xlu0 %232, %v139
  %v234 = vpop.permute.xlu0 %233
  %237 = vset.pattern.permute.xlu0 0
  %238 = vperm.xlu0 %237, %v140
  %v239 = vpop.permute.xlu0 %238
  %242 = vset.pattern.permute.xlu0 0
  %243 = vperm.xlu0 %242, %v141
  %v244 = vpop.permute.xlu0 %243
  %247 = vset.pattern.permute.xlu0 0
  %248 = vperm.xlu0 %247, %v142
  %v249 = vpop.permute.xlu0 %248
  %252 = vset.pattern.permute.xlu0 0
  %253 = vperm.xlu0 %252, %v143
  %v254 = vpop.permute.xlu0 %253
  %257 = vset.pattern.permute.xlu0 0
  %258 = vperm.xlu0 %257, %v144
  %v259 = vpop.permute.xlu0 %258
  %262 = vset.pattern.permute.xlu0 0
  %263 = vperm.xlu0 %262, %v145
  %v264 = vpop.permute.xlu0 %263
  %267 = vset.pattern.permute.xlu0 0
  %268 = vperm.xlu0 %267, %v146
  %v269 = vpop.permute.xlu0 %268
  %272 = vset.pattern.permute.xlu0 0
  %273 = vperm.xlu0 %272, %v147
  %v274 = vpop.permute.xlu0 %273
  %277 = vset.pattern.permute.xlu0 0
  %278 = vperm.xlu0 %277, %v148
  %v279 = vpop.permute.xlu0 %278
  %282 = vset.pattern.permute.xlu0 0
  %283 = vperm.xlu0 %282, %v149
  %v284 = vpop.permute.xlu0 %283
  %287 = vset.pattern.permute.xlu0 0
  %288 = vperm.xlu0 %287, %v150
  %v289 = vpop.permute.xlu0 %288
  %292 = vset.pattern.permute.xlu0 0
  %293 = vperm.xlu0 %292, %v151
  %v294 = vpop.permute.xlu0 %293
  %297 = vset.pattern.permute.xlu0 0
  %298 = vperm.xlu0 %297, %v152
  %v299 = vpop.permute.xlu0 %298
  %302 = vset.pattern.permute.xlu0 0
  %303 = vperm.xlu0 %302, %v153
  %v304 = vpop.permute.xlu0 %303
  %307 = vset.pattern.permute.xlu0 0
  %308 = vperm.xlu0 %307, %v154
  %v309 = vpop.permute.xlu0 %308
  %312 = vset.pattern.permute.xlu0 0
  %313 = vperm.xlu0 %312, %v155
  %v314 = vpop.permute.xlu0 %313
  %vm316 = vcmask 588800
  %v318 = vsel %vm316, %v36, 0
  %v321 = vsel %vm316, %v38, 0
  %v324 = vsel %vm316, %v40, 0
  %v327 = vsel %vm316, %v42, 0
  %v330 = vsel %vm316, %v44, 0
  %v333 = vsel %vm316, %v46, 0
  %v336 = vsel %vm316, %v48, 0
  %v339 = vsel %vm316, %v50, 0
  %v342 = vsel %vm316, %v52, 0
  %v345 = vsel %vm316, %v54, 0
  %v348 = vsel %vm316, %v56, 0
  %v351 = vsel %vm316, %v58, 0
  %v354 = vsel %vm316, %v60, 0
  %v357 = vsel %vm316, %v62, 0
  %v360 = vsel %vm316, %v64, 0
  %v363 = vsel %vm316, %v66, 0
  %v366 = vsel %vm316, %v68, 0
  %v369 = vsel %vm316, %v70, 0
  %v372 = vsel %vm316, %v72, 0
  %v375 = vsel %vm316, %v74, 0
  %v378 = vsel %vm316, %v76, 0
  %v381 = vsel %vm316, %v78, 0
  %v384 = vsel %vm316, %v80, 0
  %v387 = vsel %vm316, %v82, 0
  %v390 = vsel %vm316, %v84, 0
  %v393 = vsel %vm316, %v86, 0
  %v396 = vsel %vm316, %v88, 0
  %v399 = vsel %vm316, %v90, 0
  %v402 = vsel %vm316, %v92, 0
  %v405 = vsel %vm316, %v94, 0
  %v408 = vsel %vm316, %v96, 0
  %v411 = vsel %vm316, %v98, 0
  %413 = vmatpush.msra.mxu0 %v114
  %414 = vmatpush.msra.mxu0 %v113
  %415 = vmatpush.msra.mxu0 %v112
  %416 = vmatpush.msra.mxu0 %v111
  %417 = vmatpush.msra.mxu0 %v110
  %418 = vmatpush.msra.mxu0 %v109
  %419 = vmatpush.msra.mxu0 %v108
  %420 = vmatpush.msra.mxu0 %v107
  %421 = vmatpush.msra.mxu0 %v106
  %422 = vmatpush.msra.mxu0 %v105
  %423 = vmatpush.msra.mxu0 %v104
  %424 = vmatpush.msra.mxu0 %v103
  %425 = vmatpush.msra.mxu0 %v102
  %426 = vmatpush.msra.mxu0 %v101
  %427 = vmatpush.msra.mxu0 %v100
  %428 = vmatpush.msra.mxu0 %v99
  %429 = vmatmul.f32.gmra.mxu0 %v35
  %v430 = vpop.f32.mrf.mxu0
  %v431 = vadd.f32 %v159, %v430
  %432 = vmatmul.f32.gmra.mxu0 %v37
  %v433 = vpop.f32.mrf.mxu0
  %v434 = vadd.f32 %v164, %v433
  %435 = vmatmul.f32.gmra.mxu0 %v39
  %v436 = vpop.f32.mrf.mxu0
  %v437 = vadd.f32 %v169, %v436
  %438 = vmatmul.f32.gmra.mxu0 %v41
  %v439 = vpop.f32.mrf.mxu0
  %v440 = vadd.f32 %v174, %v439
  %441 = vmatmul.f32.gmra.mxu0 %v43
  %v442 = vpop.f32.mrf.mxu0
  %v443 = vadd.f32 %v179, %v442
  %444 = vmatmul.f32.gmra.mxu0 %v45
  %v445 = vpop.f32.mrf.mxu0
  %v446 = vadd.f32 %v184, %v445
  %447 = vmatmul.f32.gmra.mxu0 %v47
  %v448 = vpop.f32.mrf.mxu0
  %v449 = vadd.f32 %v189, %v448
  %450 = vmatmul.f32.gmra.mxu0 %v49
  %v451 = vpop.f32.mrf.mxu0
  %v452 = vadd.f32 %v194, %v451
  %453 = vmatmul.f32.gmra.mxu0 %v51
  %v454 = vpop.f32.mrf.mxu0
  %v455 = vadd.f32 %v199, %v454
  %456 = vmatmul.f32.gmra.mxu0 %v53
  %v457 = vpop.f32.mrf.mxu0
  %v458 = vadd.f32 %v204, %v457
  %459 = vmatmul.f32.gmra.mxu0 %v55
  %v460 = vpop.f32.mrf.mxu0
  %v461 = vadd.f32 %v209, %v460
  %462 = vmatmul.f32.gmra.mxu0 %v57
  %v463 = vpop.f32.mrf.mxu0
  %v464 = vadd.f32 %v214, %v463
  %465 = vmatmul.f32.gmra.mxu0 %v59
  %v466 = vpop.f32.mrf.mxu0
  %v467 = vadd.f32 %v219, %v466
  %468 = vmatmul.f32.gmra.mxu0 %v61
  %v469 = vpop.f32.mrf.mxu0
  %v470 = vadd.f32 %v224, %v469
  %471 = vmatmul.f32.gmra.mxu0 %v63
  %v472 = vpop.f32.mrf.mxu0
  %v473 = vadd.f32 %v229, %v472
  %474 = vmatmul.f32.gmra.mxu0 %v65
  %v475 = vpop.f32.mrf.mxu0
  %v476 = vadd.f32 %v234, %v475
  %477 = vmatmul.f32.gmra.mxu0 %v67
  %v478 = vpop.f32.mrf.mxu0
  %v479 = vadd.f32 %v239, %v478
  %480 = vmatmul.f32.gmra.mxu0 %v69
  %v481 = vpop.f32.mrf.mxu0
  %v482 = vadd.f32 %v244, %v481
  %483 = vmatmul.f32.gmra.mxu0 %v71
  %v484 = vpop.f32.mrf.mxu0
  %v485 = vadd.f32 %v249, %v484
  %486 = vmatmul.f32.gmra.mxu0 %v73
  %v487 = vpop.f32.mrf.mxu0
  %v488 = vadd.f32 %v254, %v487
  %489 = vmatmul.f32.gmra.mxu0 %v75
  %v490 = vpop.f32.mrf.mxu0
  %v491 = vadd.f32 %v259, %v490
  %492 = vmatmul.f32.gmra.mxu0 %v77
  %v493 = vpop.f32.mrf.mxu0
  %v494 = vadd.f32 %v264, %v493
  %495 = vmatmul.f32.gmra.mxu0 %v79
  %v496 = vpop.f32.mrf.mxu0
  %v497 = vadd.f32 %v269, %v496
  %498 = vmatmul.f32.gmra.mxu0 %v81
  %v499 = vpop.f32.mrf.mxu0
  %v500 = vadd.f32 %v274, %v499
  %501 = vmatmul.f32.gmra.mxu0 %v83
  %v502 = vpop.f32.mrf.mxu0
  %v503 = vadd.f32 %v279, %v502
  %504 = vmatmul.f32.gmra.mxu0 %v85
  %v505 = vpop.f32.mrf.mxu0
  %v506 = vadd.f32 %v284, %v505
  %507 = vmatmul.f32.gmra.mxu0 %v87
  %v508 = vpop.f32.mrf.mxu0
  %v509 = vadd.f32 %v289, %v508
  %510 = vmatmul.f32.gmra.mxu0 %v89
  %v511 = vpop.f32.mrf.mxu0
  %v512 = vadd.f32 %v294, %v511
  %513 = vmatmul.f32.gmra.mxu0 %v91
  %v514 = vpop.f32.mrf.mxu0
  %v515 = vadd.f32 %v299, %v514
  %516 = vmatmul.f32.gmra.mxu0 %v93
  %v517 = vpop.f32.mrf.mxu0
  %v518 = vadd.f32 %v304, %v517
  %519 = vmatmul.f32.gmra.mxu0 %v95
  %v520 = vpop.f32.mrf.mxu0
  %v521 = vadd.f32 %v309, %v520
  %522 = vmatmul.f32.gmra.mxu0 %v97
  %v523 = vpop.f32.mrf.mxu0
  %v524 = vadd.f32 %v314, %v523
  %525 = vdwg.mxu0
  %526 = vmatpush.msra.mxu0 0.0
  %527 = vmatpush.msra.mxu0 0.0
  %528 = vmatpush.msra.mxu0 0.0
  %529 = vmatpush.msra.mxu0 0.0
  %530 = vmatpush.msra.mxu0 0.0
  %531 = vmatpush.msra.mxu0 0.0
  %532 = vmatpush.msra.mxu0 0.0
  %533 = vmatpush.msra.mxu0 %v123
  %534 = vmatpush.msra.mxu0 %v122
  %535 = vmatpush.msra.mxu0 %v121
  %536 = vmatpush.msra.mxu0 %v120
  %537 = vmatpush.msra.mxu0 %v119
  %538 = vmatpush.msra.mxu0 %v118
  %539 = vmatpush.msra.mxu0 %v117
  %540 = vmatpush.msra.mxu0 %v116
  %541 = vmatpush.msra.mxu0 %v115
  %542 = vmatmul.f32.gmra.mxu0 %v318
  %v543 = vpop.f32.mrf.mxu0
  %v544 = vadd.f32 %v431, %v543
  %545 = vmatmul.f32.gmra.mxu0 %v321
  %v546 = vpop.f32.mrf.mxu0
  %v547 = vadd.f32 %v434, %v546
  %548 = vmatmul.f32.gmra.mxu0 %v324
  %v549 = vpop.f32.mrf.mxu0
  %v550 = vadd.f32 %v437, %v549
  %551 = vmatmul.f32.gmra.mxu0 %v327
  %v552 = vpop.f32.mrf.mxu0
  %v553 = vadd.f32 %v440, %v552
  %554 = vmatmul.f32.gmra.mxu0 %v330
  %v555 = vpop.f32.mrf.mxu0
  %v556 = vadd.f32 %v443, %v555
  %557 = vmatmul.f32.gmra.mxu0 %v333
  %v558 = vpop.f32.mrf.mxu0
  %v559 = vadd.f32 %v446, %v558
  %560 = vmatmul.f32.gmra.mxu0 %v336
  %v561 = vpop.f32.mrf.mxu0
  %v562 = vadd.f32 %v449, %v561
  %563 = vmatmul.f32.gmra.mxu0 %v339
  %v564 = vpop.f32.mrf.mxu0
  %v565 = vadd.f32 %v452, %v564
  %566 = vmatmul.f32.gmra.mxu0 %v342
  %v567 = vpop.f32.mrf.mxu0
  %v568 = vadd.f32 %v455, %v567
  %569 = vmatmul.f32.gmra.mxu0 %v345
  %v570 = vpop.f32.mrf.mxu0
  %v571 = vadd.f32 %v458, %v570
  %572 = vmatmul.f32.gmra.mxu0 %v348
  %v573 = vpop.f32.mrf.mxu0
  %v574 = vadd.f32 %v461, %v573
  %575 = vmatmul.f32.gmra.mxu0 %v351
  %v576 = vpop.f32.mrf.mxu0
  %v577 = vadd.f32 %v464, %v576
  %578 = vmatmul.f32.gmra.mxu0 %v354
  %v579 = vpop.f32.mrf.mxu0
  %v580 = vadd.f32 %v467, %v579
  %581 = vmatmul.f32.gmra.mxu0 %v357
  %v582 = vpop.f32.mrf.mxu0
  %v583 = vadd.f32 %v470, %v582
  %584 = vmatmul.f32.gmra.mxu0 %v360
  %v585 = vpop.f32.mrf.mxu0
  %v586 = vadd.f32 %v473, %v585
  %587 = vmatmul.f32.gmra.mxu0 %v363
  %v588 = vpop.f32.mrf.mxu0
  %v589 = vadd.f32 %v476, %v588
  %590 = vmatmul.f32.gmra.mxu0 %v366
  %v591 = vpop.f32.mrf.mxu0
  %v592 = vadd.f32 %v479, %v591
  %593 = vmatmul.f32.gmra.mxu0 %v369
  %v594 = vpop.f32.mrf.mxu0
  %v595 = vadd.f32 %v482, %v594
  %596 = vmatmul.f32.gmra.mxu0 %v372
  %v597 = vpop.f32.mrf.mxu0
  %v598 = vadd.f32 %v485, %v597
  %599 = vmatmul.f32.gmra.mxu0 %v375
  %v600 = vpop.f32.mrf.mxu0
  %v601 = vadd.f32 %v488, %v600
  %602 = vmatmul.f32.gmra.mxu0 %v378
  %v603 = vpop.f32.mrf.mxu0
  %v604 = vadd.f32 %v491, %v603
  %605 = vmatmul.f32.gmra.mxu0 %v381
  %v606 = vpop.f32.mrf.mxu0
  %v607 = vadd.f32 %v494, %v606
  %608 = vmatmul.f32.gmra.mxu0 %v384
  %v609 = vpop.f32.mrf.mxu0
  %v610 = vadd.f32 %v497, %v609
  %611 = vmatmul.f32.gmra.mxu0 %v387
  %v612 = vpop.f32.mrf.mxu0
  %v613 = vadd.f32 %v500, %v612
  %614 = vmatmul.f32.gmra.mxu0 %v390
  %v615 = vpop.f32.mrf.mxu0
  %v616 = vadd.f32 %v503, %v615
  %617 = vmatmul.f32.gmra.mxu0 %v393
  %v618 = vpop.f32.mrf.mxu0
  %v619 = vadd.f32 %v506, %v618
  %620 = vmatmul.f32.gmra.mxu0 %v396
  %v621 = vpop.f32.mrf.mxu0
  %v622 = vadd.f32 %v509, %v621
  %623 = vmatmul.f32.gmra.mxu0 %v399
  %v624 = vpop.f32.mrf.mxu0
  %v625 = vadd.f32 %v512, %v624
  %626 = vmatmul.f32.gmra.mxu0 %v402
  %v627 = vpop.f32.mrf.mxu0
  %v628 = vadd.f32 %v515, %v627
  %629 = vmatmul.f32.gmra.mxu0 %v405
  %v630 = vpop.f32.mrf.mxu0
  %v631 = vadd.f32 %v518, %v630
  %632 = vmatmul.f32.gmra.mxu0 %v408
  %v633 = vpop.f32.mrf.mxu0
  %v634 = vadd.f32 %v521, %v633
  %635 = vmatmul.f32.gmra.mxu0 %v411
  %v636 = vpop.f32.mrf.mxu0
  %v637 = vadd.f32 %v524, %v636
  %638 = vdwg.mxu0
  %v639 = vld [vmem:[%s0] sm:$0xff]
  %v640 = vld [vmem:[%s4] sm:$0xff]
  %v641 = vld [vmem:[%s4 + $0x8] sm:$0xff]
  %v642 = vld [vmem:[%s4 + $0x10] sm:$0xff]
  %v643 = vld [vmem:[%s4 + $0x18] sm:$0xff]
  %v644 = vld [vmem:[%s4 + $0x20] sm:$0xff]
  %v645 = vld [vmem:[%s4 + $0x28] sm:$0xff]
  %v646 = vld [vmem:[%s4 + $0x30] sm:$0xff]
  %v647 = vld [vmem:[%s4 + $0x38] sm:$0xff]
  %v648 = vld [vmem:[%s4 + $0x40] sm:$0xff]
  %v649 = vld [vmem:[%s4 + $0x48] sm:$0xff]
  %v650 = vld [vmem:[%s4 + $0x50] sm:$0xff]
  %v651 = vld [vmem:[%s4 + $0x58] sm:$0xff]
  %v652 = vld [vmem:[%s4 + $0x60] sm:$0xff]
  %v653 = vld [vmem:[%s4 + $0x68] sm:$0xff]
  %v654 = vld [vmem:[%s4 + $0x70] sm:$0xff]
  %v655 = vld [vmem:[%s4 + $0x78] sm:$0xff]
  %v656 = vld [vmem:[%s4 + $0x80] sm:$0xff]
  %v657 = vld [vmem:[%s4 + $0x88] sm:$0xff]
  %v658 = vld [vmem:[%s4 + $0x90] sm:$0xff]
  %v659 = vld [vmem:[%s4 + $0x98] sm:$0xff]
  %v660 = vld [vmem:[%s4 + $0xa0] sm:$0xff]
  %v661 = vld [vmem:[%s4 + $0xa8] sm:$0xff]
  %v662 = vld [vmem:[%s4 + $0xb0] sm:$0xff]
  %v663 = vld [vmem:[%s4 + $0xb8] sm:$0xff]
  %v664 = vld [vmem:[%s4 + $0xc0] sm:$0xff]
  %v665 = vld [vmem:[%s4 + $0xc8] sm:$0xff]
  %v666 = vld [vmem:[%s4 + $0xd0] sm:$0xff]
  %v667 = vld [vmem:[%s4 + $0xd8] sm:$0xff]
  %v668 = vld [vmem:[%s4 + $0xe0] sm:$0xff]
  %v669 = vld [vmem:[%s4 + $0xe8] sm:$0xff]
  %v670 = vld [vmem:[%s4 + $0xf0] sm:$0xff]
  %v671 = vld [vmem:[%s4 + $0xf8] sm:$0xff]
  %v672 = vld [vmem:[%s4 + $0x100] sm:$0xff]
  %v673 = vld [vmem:[%s4 + $0x108] sm:$0xff]
  %v674 = vld [vmem:[%s4 + $0x110] sm:$0xff]
  %v675 = vld [vmem:[%s4 + $0x118] sm:$0xff]
  %v676 = vld [vmem:[%s4 + $0x120] sm:$0xff]
  %v677 = vld [vmem:[%s4 + $0x128] sm:$0xff]
  %v678 = vld [vmem:[%s4 + $0x130] sm:$0xff]
  %v679 = vld [vmem:[%s4 + $0x138] sm:$0xff]
  %v680 = vld [vmem:[%s4 + $0x140] sm:$0xff]
  %v681 = vld [vmem:[%s4 + $0x148] sm:$0xff]
  %v682 = vld [vmem:[%s4 + $0x150] sm:$0xff]
  %v683 = vld [vmem:[%s4 + $0x158] sm:$0xff]
  %v684 = vld [vmem:[%s4 + $0x160] sm:$0xff]
  %v685 = vld [vmem:[%s4 + $0x168] sm:$0xff]
  %v686 = vld [vmem:[%s4 + $0x170] sm:$0xff]
  %v687 = vld [vmem:[%s4 + $0x178] sm:$0xff]
  %v688 = vld [vmem:[%s4 + $0x180] sm:$0xff]
  %v689 = vld [vmem:[%s4 + $0x188] sm:$0xff]
  %v690 = vld [vmem:[%s4 + $0x190] sm:$0xff]
  %v691 = vld [vmem:[%s4 + $0x198] sm:$0xff]
  %v692 = vld [vmem:[%s4 + $0x1a0] sm:$0xff]
  %v693 = vld [vmem:[%s4 + $0x1a8] sm:$0xff]
  %v694 = vld [vmem:[%s4 + $0x1b0] sm:$0xff]
  %v695 = vld [vmem:[%s4 + $0x1b8] sm:$0xff]
  %v696 = vld [vmem:[%s4 + $0x1c0] sm:$0xff]
  %v697 = vld [vmem:[%s4 + $0x1c8] sm:$0xff]
  %v698 = vld [vmem:[%s4 + $0x1d0] sm:$0xff]
  %v699 = vld [vmem:[%s4 + $0x1d8] sm:$0xff]
  %v700 = vld [vmem:[%s4 + $0x1e0] sm:$0xff]
  %v701 = vld [vmem:[%s4 + $0x1e8] sm:$0xff]
  %v702 = vld [vmem:[%s4 + $0x1f0] sm:$0xff]
  %v703 = vld [vmem:[%s4 + $0x1f8] sm:$0xff]
  %v704 = vld [vmem:[%s4 + $0x200] sm:$0xff]
  %v705 = vld [vmem:[%s4 + $0x208] sm:$0xff]
  %v706 = vld [vmem:[%s4 + $0x210] sm:$0xff]
  %v707 = vld [vmem:[%s4 + $0x218] sm:$0xff]
  %v708 = vld [vmem:[%s4 + $0x220] sm:$0xff]
  %v709 = vld [vmem:[%s4 + $0x228] sm:$0xff]
  %v710 = vld [vmem:[%s4 + $0x230] sm:$0xff]
  %v711 = vld [vmem:[%s4 + $0x238] sm:$0xff]
  %v712 = vld [vmem:[%s4 + $0x240] sm:$0xff]
  %v713 = vld [vmem:[%s4 + $0x248] sm:$0xff]
  %v714 = vld [vmem:[%s4 + $0x250] sm:$0xff]
  %v715 = vld [vmem:[%s4 + $0x258] sm:$0xff]
  %v716 = vld [vmem:[%s4 + $0x260] sm:$0xff]
  %v717 = vld [vmem:[%s4 + $0x268] sm:$0xff]
  %v718 = vld [vmem:[%s4 + $0x270] sm:$0xff]
  %v719 = vld [vmem:[%s4 + $0x278] sm:$0xff]
  %v720 = vld [vmem:[%s4 + $0x280] sm:$0xff]
  %v721 = vld [vmem:[%s4 + $0x288] sm:$0xff]
  %v722 = vld [vmem:[%s4 + $0x290] sm:$0xff]
  %v723 = vld [vmem:[%s4 + $0x298] sm:$0xff]
  %v724 = vld [vmem:[%s4 + $0x2a0] sm:$0xff]
  %v725 = vld [vmem:[%s4 + $0x2a8] sm:$0xff]
  %v726 = vld [vmem:[%s4 + $0x2b0] sm:$0xff]
  %v727 = vld [vmem:[%s4 + $0x2b8] sm:$0xff]
  %v728 = vld [vmem:[%s4 + $0x2c0] sm:$0xff]
  %v729 = vld [vmem:[%s4 + $0x2c8] sm:$0xff]
  %v730 = vld [vmem:[%s4 + $0x2d0] sm:$0xff]
  %v731 = vld [vmem:[%s4 + $0x2d8] sm:$0xff]
  %v732 = vld [vmem:[%s4 + $0x2e0] sm:$0xff]
  %v733 = vld [vmem:[%s4 + $0x2e8] sm:$0xff]
  %v734 = vld [vmem:[%s4 + $0x2f0] sm:$0xff]
  %v735 = vld [vmem:[%s4 + $0x2f8] sm:$0xff]
  %v736 = vld [vmem:[%s4 + $0x300] sm:$0xff]
  %v737 = vld [vmem:[%s4 + $0x308] sm:$0xff]
  %v738 = vld [vmem:[%s4 + $0x310] sm:$0xff]
  %v739 = vld [vmem:[%s4 + $0x318] sm:$0xff]
  %v740 = vld [vmem:[%s5] sm:$0xf]
  %v742 = vperm.slane %v740, 0
  %v743 = vperm.slane %v740, 1
  %v744 = vperm.slane %v740, 2
  %v745 = vperm.slane %v740, 3
  %751 = vst [vmem:[#allocation1] ss:$2 sm:$0xff] %v639
  %v752 = vld.sshfl [vmem:[#allocation1] sm:$0xff pattern:$0x75316420]
  %v753 = vld.sshfl [vmem:[#allocation1 + $0x8] sm:$0xff pattern:$0x75316420]
  %v755 = vsel %vm316, %v753, 0
  %757 = vmatpush.msra.mxu0 %v700
  %758 = vmatpush.msra.mxu0 %v696
  %759 = vmatpush.msra.mxu0 %v692
  %760 = vmatpush.msra.mxu0 %v688
  %761 = vmatpush.msra.mxu0 %v684
  %762 = vmatpush.msra.mxu0 %v680
  %763 = vmatpush.msra.mxu0 %v676
  %764 = vmatpush.msra.mxu0 %v672
  %765 = vmatpush.msra.mxu0 %v668
  %766 = vmatpush.msra.mxu0 %v664
  %767 = vmatpush.msra.mxu0 %v660
  %768 = vmatpush.msra.mxu0 %v656
  %769 = vmatpush.msra.mxu0 %v652
  %770 = vmatpush.msra.mxu0 %v648
  %771 = vmatpush.msra.mxu0 %v644
  %772 = vmatpush.msra.mxu0 %v640
  %773 = vmatmul.f32.gmra.mxu0 %v752
  %v774 = vpop.f32.mrf.mxu0
  %v775 = vadd.f32 %v742, %v774
  %776 = vdwg.mxu0
  %777 = vmatpush.msra.mxu0 0.0
  %778 = vmatpush.msra.mxu0 0.0
  %779 = vmatpush.msra.mxu0 0.0
  %780 = vmatpush.msra.mxu0 0.0
  %781 = vmatpush.msra.mxu0 0.0
  %782 = vmatpush.msra.mxu0 0.0
  %783 = vmatpush.msra.mxu0 0.0
  %784 = vmatpush.msra.mxu0 %v736
  %785 = vmatpush.msra.mxu0 %v732
  %786 = vmatpush.msra.mxu0 %v728
  %787 = vmatpush.msra.mxu0 %v724
  %788 = vmatpush.msra.mxu0 %v720
  %789 = vmatpush.msra.mxu0 %v716
  %790 = vmatpush.msra.mxu0 %v712
  %791 = vmatpush.msra.mxu0 %v708
  %792 = vmatpush.msra.mxu0 %v704
  %793 = vmatmul.f32.gmra.mxu0 %v755
  %v794 = vpop.f32.mrf.mxu0
  %v795 = vadd.f32 %v775, %v794
  %796 = vdwg.mxu0
  %797 = vmatpush.msra.mxu0 %v701
  %798 = vmatpush.msra.mxu0 %v697
  %799 = vmatpush.msra.mxu0 %v693
  %800 = vmatpush.msra.mxu0 %v689
  %801 = vmatpush.msra.mxu0 %v685
  %802 = vmatpush.msra.mxu0 %v681
  %803 = vmatpush.msra.mxu0 %v677
  %804 = vmatpush.msra.mxu0 %v673
  %805 = vmatpush.msra.mxu0 %v669
  %806 = vmatpush.msra.mxu0 %v665
  %807 = vmatpush.msra.mxu0 %v661
  %808 = vmatpush.msra.mxu0 %v657
  %809 = vmatpush.msra.mxu0 %v653
  %810 = vmatpush.msra.mxu0 %v649
  %811 = vmatpush.msra.mxu0 %v645
  %812 = vmatpush.msra.mxu0 %v641
  %813 = vmatmul.f32.gmra.mxu0 %v752
  %v814 = vpop.f32.mrf.mxu0
  %v815 = vadd.f32 %v743, %v814
  %816 = vdwg.mxu0
  %817 = vmatpush.msra.mxu0 0.0
  %818 = vmatpush.msra.mxu0 0.0
  %819 = vmatpush.msra.mxu0 0.0
  %820 = vmatpush.msra.mxu0 0.0
  %821 = vmatpush.msra.mxu0 0.0
  %822 = vmatpush.msra.mxu0 0.0
  %823 = vmatpush.msra.mxu0 0.0
  %824 = vmatpush.msra.mxu0 %v737
  %825 = vmatpush.msra.mxu0 %v733
  %826 = vmatpush.msra.mxu0 %v729
  %827 = vmatpush.msra.mxu0 %v725
  %828 = vmatpush.msra.mxu0 %v721
  %829 = vmatpush.msra.mxu0 %v717
  %830 = vmatpush.msra.mxu0 %v713
  %831 = vmatpush.msra.mxu0 %v709
  %832 = vmatpush.msra.mxu0 %v705
  %833 = vmatmul.f32.gmra.mxu0 %v755
  %v834 = vpop.f32.mrf.mxu0
  %v835 = vadd.f32 %v815, %v834
  %836 = vdwg.mxu0
  %837 = vmatpush.msra.mxu0 %v702
  %838 = vmatpush.msra.mxu0 %v698
  %839 = vmatpush.msra.mxu0 %v694
  %840 = vmatpush.msra.mxu0 %v690
  %841 = vmatpush.msra.mxu0 %v686
  %842 = vmatpush.msra.mxu0 %v682
  %843 = vmatpush.msra.mxu0 %v678
  %844 = vmatpush.msra.mxu0 %v674
  %845 = vmatpush.msra.mxu0 %v670
  %846 = vmatpush.msra.mxu0 %v666
  %847 = vmatpush.msra.mxu0 %v662
  %848 = vmatpush.msra.mxu0 %v658
  %849 = vmatpush.msra.mxu0 %v654
  %850 = vmatpush.msra.mxu0 %v650
  %851 = vmatpush.msra.mxu0 %v646
  %852 = vmatpush.msra.mxu0 %v642
  %853 = vmatmul.f32.gmra.mxu0 %v752
  %v854 = vpop.f32.mrf.mxu0
  %v855 = vadd.f32 %v744, %v854
  %856 = vdwg.mxu0
  %857 = vmatpush.msra.mxu0 0.0
  %858 = vmatpush.msra.mxu0 0.0
  %859 = vmatpush.msra.mxu0 0.0
  %860 = vmatpush.msra.mxu0 0.0
  %861 = vmatpush.msra.mxu0 0.0
  %862 = vmatpush.msra.mxu0 0.0
  %863 = vmatpush.msra.mxu0 0.0
  %864 = vmatpush.msra.mxu0 %v738
  %865 = vmatpush.msra.mxu0 %v734
  %866 = vmatpush.msra.mxu0 %v730
  %867 = vmatpush.msra.mxu0 %v726
  %868 = vmatpush.msra.mxu0 %v722
  %869 = vmatpush.msra.mxu0 %v718
  %870 = vmatpush.msra.mxu0 %v714
  %871 = vmatpush.msra.mxu0 %v710
  %872 = vmatpush.msra.mxu0 %v706
  %873 = vmatmul.f32.gmra.mxu0 %v755
  %v874 = vpop.f32.mrf.mxu0
  %v875 = vadd.f32 %v855, %v874
  %876 = vdwg.mxu0
  %877 = vmatpush.msra.mxu0 %v703
  %878 = vmatpush.msra.mxu0 %v699
  %879 = vmatpush.msra.mxu0 %v695
  %880 = vmatpush.msra.mxu0 %v691
  %881 = vmatpush.msra.mxu0 %v687
  %882 = vmatpush.msra.mxu0 %v683
  %883 = vmatpush.msra.mxu0 %v679
  %884 = vmatpush.msra.mxu0 %v675
  %885 = vmatpush.msra.mxu0 %v671
  %886 = vmatpush.msra.mxu0 %v667
  %887 = vmatpush.msra.mxu0 %v663
  %888 = vmatpush.msra.mxu0 %v659
  %889 = vmatpush.msra.mxu0 %v655
  %890 = vmatpush.msra.mxu0 %v651
  %891 = vmatpush.msra.mxu0 %v647
  %892 = vmatpush.msra.mxu0 %v643
  %893 = vmatmul.f32.gmra.mxu0 %v752
  %v894 = vpop.f32.mrf.mxu0
  %v895 = vadd.f32 %v745, %v894
  %896 = vdwg.mxu0
  %897 = vmatpush.msra.mxu0 0.0
  %898 = vmatpush.msra.mxu0 0.0
  %899 = vmatpush.msra.mxu0 0.0
  %900 = vmatpush.msra.mxu0 0.0
  %901 = vmatpush.msra.mxu0 0.0
  %902 = vmatpush.msra.mxu0 0.0
  %903 = vmatpush.msra.mxu0 0.0
  %904 = vmatpush.msra.mxu0 %v739
  %905 = vmatpush.msra.mxu0 %v735
  %906 = vmatpush.msra.mxu0 %v731
  %907 = vmatpush.msra.mxu0 %v727
  %908 = vmatpush.msra.mxu0 %v723
  %909 = vmatpush.msra.mxu0 %v719
  %910 = vmatpush.msra.mxu0 %v715
  %911 = vmatpush.msra.mxu0 %v711
  %912 = vmatpush.msra.mxu0 %v707
  %913 = vmatmul.f32.gmra.mxu0 %v755
  %v914 = vpop.f32.mrf.mxu0
  %v915 = vadd.f32 %v895, %v914
  %916 = vdwg.mxu0
  %918 = vset.pattern.permute.xlu0 0
  %919 = vperm.xlu0 %918, %v544
  %v920 = vpop.permute.xlu0 %919
  %923 = vset.pattern.permute.xlu0 0
  %924 = vperm.xlu0 %923, %v547
  %v925 = vpop.permute.xlu0 %924
  %928 = vset.pattern.permute.xlu0 0
  %929 = vperm.xlu0 %928, %v550
  %v930 = vpop.permute.xlu0 %929
  %933 = vset.pattern.permute.xlu0 0
  %934 = vperm.xlu0 %933, %v553
  %v935 = vpop.permute.xlu0 %934
  %938 = vset.pattern.permute.xlu0 0
  %939 = vperm.xlu0 %938, %v556
  %v940 = vpop.permute.xlu0 %939
  %943 = vset.pattern.permute.xlu0 0
  %944 = vperm.xlu0 %943, %v559
  %v945 = vpop.permute.xlu0 %944
  %948 = vset.pattern.permute.xlu0 0
  %949 = vperm.xlu0 %948, %v562
  %v950 = vpop.permute.xlu0 %949
  %953 = vset.pattern.permute.xlu0 0
  %954 = vperm.xlu0 %953, %v565
  %v955 = vpop.permute.xlu0 %954
  %958 = vset.pattern.permute.xlu0 0
  %959 = vperm.xlu0 %958, %v568
  %v960 = vpop.permute.xlu0 %959
  %963 = vset.pattern.permute.xlu0 0
  %964 = vperm.xlu0 %963, %v571
  %v965 = vpop.permute.xlu0 %964
  %968 = vset.pattern.permute.xlu0 0
  %969 = vperm.xlu0 %968, %v574
  %v970 = vpop.permute.xlu0 %969
  %973 = vset.pattern.permute.xlu0 0
  %974 = vperm.xlu0 %973, %v577
  %v975 = vpop.permute.xlu0 %974
  %978 = vset.pattern.permute.xlu0 0
  %979 = vperm.xlu0 %978, %v580
  %v980 = vpop.permute.xlu0 %979
  %983 = vset.pattern.permute.xlu0 0
  %984 = vperm.xlu0 %983, %v583
  %v985 = vpop.permute.xlu0 %984
  %988 = vset.pattern.permute.xlu0 0
  %989 = vperm.xlu0 %988, %v586
  %v990 = vpop.permute.xlu0 %989
  %993 = vset.pattern.permute.xlu0 0
  %994 = vperm.xlu0 %993, %v589
  %v995 = vpop.permute.xlu0 %994
  %v997 = vperm.slane %v795, 0
  %v998 = vmul.f32 %v920, %v997
  %v999 = vmul.f32 %v925, %v997
  %v1000 = vmul.f32 %v930, %v997
  %v1001 = vmul.f32 %v935, %v997
  %v1002 = vmul.f32 %v940, %v997
  %v1003 = vmul.f32 %v945, %v997
  %v1004 = vmul.f32 %v950, %v997
  %v1005 = vmul.f32 %v955, %v997
  %v1006 = vmul.f32 %v960, %v997
  %v1007 = vmul.f32 %v965, %v997
  %v1008 = vmul.f32 %v970, %v997
  %v1009 = vmul.f32 %v975, %v997
  %v1010 = vmul.f32 %v980, %v997
  %v1011 = vmul.f32 %v985, %v997
  %v1012 = vmul.f32 %v990, %v997
  %v1013 = vmul.f32 %v995, %v997
  %1015 = vset.pattern.permute.xlu0 0
  %1016 = vperm.xlu0 %1015, %v592
  %v1017 = vpop.permute.xlu0 %1016
  %1020 = vset.pattern.permute.xlu0 0
  %1021 = vperm.xlu0 %1020, %v595
  %v1022 = vpop.permute.xlu0 %1021
  %1025 = vset.pattern.permute.xlu0 0
  %1026 = vperm.xlu0 %1025, %v598
  %v1027 = vpop.permute.xlu0 %1026
  %1030 = vset.pattern.permute.xlu0 0
  %1031 = vperm.xlu0 %1030, %v601
  %v1032 = vpop.permute.xlu0 %1031
  %1035 = vset.pattern.permute.xlu0 0
  %1036 = vperm.xlu0 %1035, %v604
  %v1037 = vpop.permute.xlu0 %1036
  %1040 = vset.pattern.permute.xlu0 0
  %1041 = vperm.xlu0 %1040, %v607
  %v1042 = vpop.permute.xlu0 %1041
  %1045 = vset.pattern.permute.xlu0 0
  %1046 = vperm.xlu0 %1045, %v610
  %v1047 = vpop.permute.xlu0 %1046
  %1050 = vset.pattern.permute.xlu0 0
  %1051 = vperm.xlu0 %1050, %v613
  %v1052 = vpop.permute.xlu0 %1051
  %1055 = vset.pattern.permute.xlu0 0
  %1056 = vperm.xlu0 %1055, %v616
  %v1057 = vpop.permute.xlu0 %1056
  %1060 = vset.pattern.permute.xlu0 0
  %1061 = vperm.xlu0 %1060, %v619
  %v1062 = vpop.permute.xlu0 %1061
  %1065 = vset.pattern.permute.xlu0 0
  %1066 = vperm.xlu0 %1065, %v622
  %v1067 = vpop.permute.xlu0 %1066
  %1070 = vset.pattern.permute.xlu0 0
  %1071 = vperm.xlu0 %1070, %v625
  %v1072 = vpop.permute.xlu0 %1071
  %1075 = vset.pattern.permute.xlu0 0
  %1076 = vperm.xlu0 %1075, %v628
  %v1077 = vpop.permute.xlu0 %1076
  %1080 = vset.pattern.permute.xlu0 0
  %1081 = vperm.xlu0 %1080, %v631
  %v1082 = vpop.permute.xlu0 %1081
  %1085 = vset.pattern.permute.xlu0 0
  %1086 = vperm.xlu0 %1085, %v634
  %v1087 = vpop.permute.xlu0 %1086
  %1090 = vset.pattern.permute.xlu0 0
  %1091 = vperm.xlu0 %1090, %v637
  %v1092 = vpop.permute.xlu0 %1091
  %v1094 = vperm.slane %v835, 0
  %v1095 = vmul.f32 %v1017, %v1094
  %v1096 = vmul.f32 %v1022, %v1094
  %v1097 = vmul.f32 %v1027, %v1094
  %v1098 = vmul.f32 %v1032, %v1094
  %v1099 = vmul.f32 %v1037, %v1094
  %v1100 = vmul.f32 %v1042, %v1094
  %v1101 = vmul.f32 %v1047, %v1094
  %v1102 = vmul.f32 %v1052, %v1094
  %v1103 = vmul.f32 %v1057, %v1094
  %v1104 = vmul.f32 %v1062, %v1094
  %v1105 = vmul.f32 %v1067, %v1094
  %v1106 = vmul.f32 %v1072, %v1094
  %v1107 = vmul.f32 %v1077, %v1094
  %v1108 = vmul.f32 %v1082, %v1094
  %v1109 = vmul.f32 %v1087, %v1094
  %v1110 = vmul.f32 %v1092, %v1094
  %v1111 = vadd.f32 %v998, %v1095
  %v1112 = vadd.f32 %v999, %v1096
  %v1113 = vadd.f32 %v1000, %v1097
  %v1114 = vadd.f32 %v1001, %v1098
  %v1115 = vadd.f32 %v1002, %v1099
  %v1116 = vadd.f32 %v1003, %v1100
  %v1117 = vadd.f32 %v1004, %v1101
  %v1118 = vadd.f32 %v1005, %v1102
  %v1119 = vadd.f32 %v1006, %v1103
  %v1120 = vadd.f32 %v1007, %v1104
  %v1121 = vadd.f32 %v1008, %v1105
  %v1122 = vadd.f32 %v1009, %v1106
  %v1123 = vadd.f32 %v1010, %v1107
  %v1124 = vadd.f32 %v1011, %v1108
  %v1125 = vadd.f32 %v1012, %v1109
  %v1126 = vadd.f32 %v1013, %v1110
  %1127 = vmax.xlane.f32.xlu0 %v1111
  %v1128 = vpop.xlane.xlu0 %1127
  %1129 = vmax.xlane.f32.xlu0 %v1112
  %v1130 = vpop.xlane.xlu0 %1129
  %1131 = vmax.xlane.f32.xlu0 %v1113
  %v1132 = vpop.xlane.xlu0 %1131
  %1133 = vmax.xlane.f32.xlu0 %v1114
  %v1134 = vpop.xlane.xlu0 %1133
  %1135 = vmax.xlane.f32.xlu0 %v1115
  %v1136 = vpop.xlane.xlu0 %1135
  %1137 = vmax.xlane.f32.xlu0 %v1116
  %v1138 = vpop.xlane.xlu0 %1137
  %1139 = vmax.xlane.f32.xlu0 %v1117
  %v1140 = vpop.xlane.xlu0 %1139
  %1141 = vmax.xlane.f32.xlu0 %v1118
  %v1142 = vpop.xlane.xlu0 %1141
  %1143 = vmax.xlane.f32.xlu0 %v1119
  %v1144 = vpop.xlane.xlu0 %1143
  %1145 = vmax.xlane.f32.xlu0 %v1120
  %v1146 = vpop.xlane.xlu0 %1145
  %1147 = vmax.xlane.f32.xlu0 %v1121
  %v1148 = vpop.xlane.xlu0 %1147
  %1149 = vmax.xlane.f32.xlu0 %v1122
  %v1150 = vpop.xlane.xlu0 %1149
  %1151 = vmax.xlane.f32.xlu0 %v1123
  %v1152 = vpop.xlane.xlu0 %1151
  %1153 = vmax.xlane.f32.xlu0 %v1124
  %v1154 = vpop.xlane.xlu0 %1153
  %1155 = vmax.xlane.f32.xlu0 %v1125
  %v1156 = vpop.xlane.xlu0 %1155
  %1157 = vmax.xlane.f32.xlu0 %v1126
  %v1158 = vpop.xlane.xlu0 %1157
  %v1159 = vsub.f32 %v1111, %v1128
  %v1160 = vsub.f32 %v1112, %v1130
  %v1161 = vsub.f32 %v1113, %v1132
  %v1162 = vsub.f32 %v1114, %v1134
  %v1163 = vsub.f32 %v1115, %v1136
  %v1164 = vsub.f32 %v1116, %v1138
  %v1165 = vsub.f32 %v1117, %v1140
  %v1166 = vsub.f32 %v1118, %v1142
  %v1167 = vsub.f32 %v1119, %v1144
  %v1168 = vsub.f32 %v1120, %v1146
  %v1169 = vsub.f32 %v1121, %v1148
  %v1170 = vsub.f32 %v1122, %v1150
  %v1171 = vsub.f32 %v1123, %v1152
  %v1172 = vsub.f32 %v1124, %v1154
  %v1173 = vsub.f32 %v1125, %v1156
  %v1174 = vsub.f32 %v1126, %v1158
  %v1175 = vmul.f32 %v1159, 1.442695
  %v1176 = vpow.pop %v1175
  %v1177 = vmul.f32 %v1160, 1.442695
  %v1178 = vpow.pop %v1177
  %v1179 = vmul.f32 %v1161, 1.442695
  %v1180 = vpow.pop %v1179
  %v1181 = vmul.f32 %v1162, 1.442695
  %v1182 = vpow.pop %v1181
  %v1183 = vmul.f32 %v1163, 1.442695
  %v1184 = vpow.pop %v1183
  %v1185 = vmul.f32 %v1164, 1.442695
  %v1186 = vpow.pop %v1185
  %v1187 = vmul.f32 %v1165, 1.442695
  %v1188 = vpow.pop %v1187
  %v1189 = vmul.f32 %v1166, 1.442695
  %v1190 = vpow.pop %v1189
  %v1191 = vmul.f32 %v1167, 1.442695
  %v1192 = vpow.pop %v1191
  %v1193 = vmul.f32 %v1168, 1.442695
  %v1194 = vpow.pop %v1193
  %v1195 = vmul.f32 %v1169, 1.442695
  %v1196 = vpow.pop %v1195
  %v1197 = vmul.f32 %v1170, 1.442695
  %v1198 = vpow.pop %v1197
  %v1199 = vmul.f32 %v1171, 1.442695
  %v1200 = vpow.pop %v1199
  %v1201 = vmul.f32 %v1172, 1.442695
  %v1202 = vpow.pop %v1201
  %v1203 = vmul.f32 %v1173, 1.442695
  %v1204 = vpow.pop %v1203
  %v1205 = vmul.f32 %v1174, 1.442695
  %v1206 = vpow.pop %v1205
  %1207 = vadd.xlane.f32.xlu0 %v1176
  %v1208 = vpop.xlane.xlu0 %1207
  %1209 = vadd.xlane.f32.xlu0 %v1178
  %v1210 = vpop.xlane.xlu0 %1209
  %1211 = vadd.xlane.f32.xlu0 %v1180
  %v1212 = vpop.xlane.xlu0 %1211
  %1213 = vadd.xlane.f32.xlu0 %v1182
  %v1214 = vpop.xlane.xlu0 %1213
  %1215 = vadd.xlane.f32.xlu0 %v1184
  %v1216 = vpop.xlane.xlu0 %1215
  %1217 = vadd.xlane.f32.xlu0 %v1186
  %v1218 = vpop.xlane.xlu0 %1217
  %1219 = vadd.xlane.f32.xlu0 %v1188
  %v1220 = vpop.xlane.xlu0 %1219
  %1221 = vadd.xlane.f32.xlu0 %v1190
  %v1222 = vpop.xlane.xlu0 %1221
  %1223 = vadd.xlane.f32.xlu0 %v1192
  %v1224 = vpop.xlane.xlu0 %1223
  %1225 = vadd.xlane.f32.xlu0 %v1194
  %v1226 = vpop.xlane.xlu0 %1225
  %1227 = vadd.xlane.f32.xlu0 %v1196
  %v1228 = vpop.xlane.xlu0 %1227
  %1229 = vadd.xlane.f32.xlu0 %v1198
  %v1230 = vpop.xlane.xlu0 %1229
  %1231 = vadd.xlane.f32.xlu0 %v1200
  %v1232 = vpop.xlane.xlu0 %1231
  %1233 = vadd.xlane.f32.xlu0 %v1202
  %v1234 = vpop.xlane.xlu0 %1233
  %1235 = vadd.xlane.f32.xlu0 %v1204
  %v1236 = vpop.xlane.xlu0 %1235
  %1237 = vadd.xlane.f32.xlu0 %v1206
  %v1238 = vpop.xlane.xlu0 %1237
  %v1239 = vrcp.pop %v1208
  %v1240 = vrcp.pop %v1210
  %v1241 = vrcp.pop %v1212
  %v1242 = vrcp.pop %v1214
  %v1243 = vrcp.pop %v1216
  %v1244 = vrcp.pop %v1218
  %v1245 = vrcp.pop %v1220
  %v1246 = vrcp.pop %v1222
  %v1247 = vrcp.pop %v1224
  %v1248 = vrcp.pop %v1226
  %v1249 = vrcp.pop %v1228
  %v1250 = vrcp.pop %v1230
  %v1251 = vrcp.pop %v1232
  %v1252 = vrcp.pop %v1234
  %v1253 = vrcp.pop %v1236
  %v1254 = vrcp.pop %v1238
  %v1255 = vmul.f32 %v1176, %v1239
  %v1256 = vmul.f32 %v1178, %v1240
  %v1257 = vmul.f32 %v1180, %v1241
  %v1258 = vmul.f32 %v1182, %v1242
  %v1259 = vmul.f32 %v1184, %v1243
  %v1260 = vmul.f32 %v1186, %v1244
  %v1261 = vmul.f32 %v1188, %v1245
  %v1262 = vmul.f32 %v1190, %v1246
  %v1263 = vmul.f32 %v1192, %v1247
  %v1264 = vmul.f32 %v1194, %v1248
  %v1265 = vmul.f32 %v1196, %v1249
  %v1266 = vmul.f32 %v1198, %v1250
  %v1267 = vmul.f32 %v1200, %v1251
  %v1268 = vmul.f32 %v1202, %v1252
  %v1269 = vmul.f32 %v1204, %v1253
  %v1270 = vmul.f32 %v1206, %v1254
  %v1271 = vperm.slane %v875, 0
  %v1272 = vmul.f32 %v1255, %v1271
  %v1273 = vmul.f32 %v1256, %v1271
  %v1274 = vmul.f32 %v1257, %v1271
  %v1275 = vmul.f32 %v1258, %v1271
  %v1276 = vmul.f32 %v1259, %v1271
  %v1277 = vmul.f32 %v1260, %v1271
  %v1278 = vmul.f32 %v1261, %v1271
  %v1279 = vmul.f32 %v1262, %v1271
  %v1280 = vmul.f32 %v1263, %v1271
  %v1281 = vmul.f32 %v1264, %v1271
  %v1282 = vmul.f32 %v1265, %v1271
  %v1283 = vmul.f32 %v1266, %v1271
  %v1284 = vmul.f32 %v1267, %v1271
  %v1285 = vmul.f32 %v1268, %v1271
  %v1286 = vmul.f32 %v1269, %v1271
  %v1287 = vmul.f32 %v1270, %v1271
  %1288 = vadd.xlane.f32.xlu0 %v1272
  %v1289 = vpop.xlane.xlu0 %1288
  %1290 = vadd.xlane.f32.xlu0 %v1273
  %v1291 = vpop.xlane.xlu0 %1290
  %1292 = vadd.xlane.f32.xlu0 %v1274
  %v1293 = vpop.xlane.xlu0 %1292
  %1294 = vadd.xlane.f32.xlu0 %v1275
  %v1295 = vpop.xlane.xlu0 %1294
  %1296 = vadd.xlane.f32.xlu0 %v1276
  %v1297 = vpop.xlane.xlu0 %1296
  %1298 = vadd.xlane.f32.xlu0 %v1277
  %v1299 = vpop.xlane.xlu0 %1298
  %1300 = vadd.xlane.f32.xlu0 %v1278
  %v1301 = vpop.xlane.xlu0 %1300
  %1302 = vadd.xlane.f32.xlu0 %v1279
  %v1303 = vpop.xlane.xlu0 %1302
  %1304 = vadd.xlane.f32.xlu0 %v1280
  %v1305 = vpop.xlane.xlu0 %1304
  %1306 = vadd.xlane.f32.xlu0 %v1281
  %v1307 = vpop.xlane.xlu0 %1306
  %1308 = vadd.xlane.f32.xlu0 %v1282
  %v1309 = vpop.xlane.xlu0 %1308
  %1310 = vadd.xlane.f32.xlu0 %v1283
  %v1311 = vpop.xlane.xlu0 %1310
  %1312 = vadd.xlane.f32.xlu0 %v1284
  %v1313 = vpop.xlane.xlu0 %1312
  %1314 = vadd.xlane.f32.xlu0 %v1285
  %v1315 = vpop.xlane.xlu0 %1314
  %1316 = vadd.xlane.f32.xlu0 %v1286
  %v1317 = vpop.xlane.xlu0 %1316
  %1318 = vadd.xlane.f32.xlu0 %v1287
  %v1319 = vpop.xlane.xlu0 %1318
  %vm1320 = vcmask 7168
  %1321 = vst.msk [vmem:[#allocation2] sm:$0xff] %vm1320, %v1289
  %1322 = vst.msk [vmem:[#allocation2 + $0x8] sm:$0xff] %vm1320, %v1291
  %1323 = vst.msk [vmem:[#allocation2 + $0x10] sm:$0xff] %vm1320, %v1293
  %1324 = vst.msk [vmem:[#allocation2 + $0x18] sm:$0xff] %vm1320, %v1295
  %1325 = vst.msk [vmem:[#allocation2 + $0x20] sm:$0xff] %vm1320, %v1297
  %1326 = vst.msk [vmem:[#allocation2 + $0x28] sm:$0xff] %vm1320, %v1299
  %1327 = vst.msk [vmem:[#allocation2 + $0x30] sm:$0xff] %vm1320, %v1301
  %1328 = vst.msk [vmem:[#allocation2 + $0x38] sm:$0xff] %vm1320, %v1303
  %1329 = vst.msk [vmem:[#allocation2 + $0x40] sm:$0xff] %vm1320, %v1305
  %1330 = vst.msk [vmem:[#allocation2 + $0x48] sm:$0xff] %vm1320, %v1307
  %1331 = vst.msk [vmem:[#allocation2 + $0x50] sm:$0xff] %vm1320, %v1309
  %1332 = vst.msk [vmem:[#allocation2 + $0x58] sm:$0xff] %vm1320, %v1311
  %1333 = vst.msk [vmem:[#allocation2 + $0x60] sm:$0xff] %vm1320, %v1313
  %1334 = vst.msk [vmem:[#allocation2 + $0x68] sm:$0xff] %vm1320, %v1315
  %1335 = vst.msk [vmem:[#allocation2 + $0x70] sm:$0xff] %vm1320, %v1317
  %1336 = vst.msk [vmem:[#allocation2 + $0x78] sm:$0xff] %vm1320, %v1319
  %v1337 = vperm.slane %v915, 0
  %v1338 = vmul.f32 %v1255, %v1337
  %v1339 = vmul.f32 %v1256, %v1337
  %v1340 = vmul.f32 %v1257, %v1337
  %v1341 = vmul.f32 %v1258, %v1337
  %v1342 = vmul.f32 %v1259, %v1337
  %v1343 = vmul.f32 %v1260, %v1337
  %v1344 = vmul.f32 %v1261, %v1337
  %v1345 = vmul.f32 %v1262, %v1337
  %v1346 = vmul.f32 %v1263, %v1337
  %v1347 = vmul.f32 %v1264, %v1337
  %v1348 = vmul.f32 %v1265, %v1337
  %v1349 = vmul.f32 %v1266, %v1337
  %v1350 = vmul.f32 %v1267, %v1337
  %v1351 = vmul.f32 %v1268, %v1337
  %v1352 = vmul.f32 %v1269, %v1337
  %v1353 = vmul.f32 %v1270, %v1337
  %1354 = vadd.xlane.f32.xlu0 %v1338
  %v1355 = vpop.xlane.xlu0 %1354
  %1356 = vadd.xlane.f32.xlu0 %v1339
  %v1357 = vpop.xlane.xlu0 %1356
  %1358 = vadd.xlane.f32.xlu0 %v1340
  %v1359 = vpop.xlane.xlu0 %1358
  %1360 = vadd.xlane.f32.xlu0 %v1341
  %v1361 = vpop.xlane.xlu0 %1360
  %1362 = vadd.xlane.f32.xlu0 %v1342
  %v1363 = vpop.xlane.xlu0 %1362
  %1364 = vadd.xlane.f32.xlu0 %v1343
  %v1365 = vpop.xlane.xlu0 %1364
  %1366 = vadd.xlane.f32.xlu0 %v1344
  %v1367 = vpop.xlane.xlu0 %1366
  %1368 = vadd.xlane.f32.xlu0 %v1345
  %v1369 = vpop.xlane.xlu0 %1368
  %1370 = vadd.xlane.f32.xlu0 %v1346
  %v1371 = vpop.xlane.xlu0 %1370
  %1372 = vadd.xlane.f32.xlu0 %v1347
  %v1373 = vpop.xlane.xlu0 %1372
  %1374 = vadd.xlane.f32.xlu0 %v1348
  %v1375 = vpop.xlane.xlu0 %1374
  %1376 = vadd.xlane.f32.xlu0 %v1349
  %v1377 = vpop.xlane.xlu0 %1376
  %1378 = vadd.xlane.f32.xlu0 %v1350
  %v1379 = vpop.xlane.xlu0 %1378
  %1380 = vadd.xlane.f32.xlu0 %v1351
  %v1381 = vpop.xlane.xlu0 %1380
  %1382 = vadd.xlane.f32.xlu0 %v1352
  %v1383 = vpop.xlane.xlu0 %1382
  %1384 = vadd.xlane.f32.xlu0 %v1353
  %v1385 = vpop.xlane.xlu0 %1384
  %1386 = vst.msk [vmem:[#allocation2 + $0x80] sm:$0xff] %vm1320, %v1355
  %1387 = vst.msk [vmem:[#allocation2 + $0x88] sm:$0xff] %vm1320, %v1357
  %1388 = vst.msk [vmem:[#allocation2 + $0x90] sm:$0xff] %vm1320, %v1359
  %1389 = vst.msk [vmem:[#allocation2 + $0x98] sm:$0xff] %vm1320, %v1361
  %1390 = vst.msk [vmem:[#allocation2 + $0xa0] sm:$0xff] %vm1320, %v1363
  %1391 = vst.msk [vmem:[#allocation2 + $0xa8] sm:$0xff] %vm1320, %v1365
  %1392 = vst.msk [vmem:[#allocation2 + $0xb0] sm:$0xff] %vm1320, %v1367
  %1393 = vst.msk [vmem:[#allocation2 + $0xb8] sm:$0xff] %vm1320, %v1369
  %1394 = vst.msk [vmem:[#allocation2 + $0xc0] sm:$0xff] %vm1320, %v1371
  %1395 = vst.msk [vmem:[#allocation2 + $0xc8] sm:$0xff] %vm1320, %v1373
  %1396 = vst.msk [vmem:[#allocation2 + $0xd0] sm:$0xff] %vm1320, %v1375
  %1397 = vst.msk [vmem:[#allocation2 + $0xd8] sm:$0xff] %vm1320, %v1377
  %1398 = vst.msk [vmem:[#allocation2 + $0xe0] sm:$0xff] %vm1320, %v1379
  %1399 = vst.msk [vmem:[#allocation2 + $0xe8] sm:$0xff] %vm1320, %v1381
  %1400 = vst.msk [vmem:[#allocation2 + $0xf0] sm:$0xff] %vm1320, %v1383
  %1401 = vst.msk [vmem:[#allocation2 + $0xf8] sm:$0xff] %vm1320, %v1385
  %1402 = vset.pattern.permute.xlu0 1
  %1403 = vperm.xlu0 %1402, %v544
  %v1404 = vpop.permute.xlu0 %1403
  %1406 = vset.pattern.permute.xlu0 1
  %1407 = vperm.xlu0 %1406, %v547
  %v1408 = vpop.permute.xlu0 %1407
  %1410 = vset.pattern.permute.xlu0 1
  %1411 = vperm.xlu0 %1410, %v550
  %v1412 = vpop.permute.xlu0 %1411
  %1414 = vset.pattern.permute.xlu0 1
  %1415 = vperm.xlu0 %1414, %v553
  %v1416 = vpop.permute.xlu0 %1415
  %1418 = vset.pattern.permute.xlu0 1
  %1419 = vperm.xlu0 %1418, %v556
  %v1420 = vpop.permute.xlu0 %1419
  %1422 = vset.pattern.permute.xlu0 1
  %1423 = vperm.xlu0 %1422, %v559
  %v1424 = vpop.permute.xlu0 %1423
  %1426 = vset.pattern.permute.xlu0 1
  %1427 = vperm.xlu0 %1426, %v562
  %v1428 = vpop.permute.xlu0 %1427
  %1430 = vset.pattern.permute.xlu0 1
  %1431 = vperm.xlu0 %1430, %v565
  %v1432 = vpop.permute.xlu0 %1431
  %1434 = vset.pattern.permute.xlu0 1
  %1435 = vperm.xlu0 %1434, %v568
  %v1436 = vpop.permute.xlu0 %1435
  %1438 = vset.pattern.permute.xlu0 1
  %1439 = vperm.xlu0 %1438, %v571
  %v1440 = vpop.permute.xlu0 %1439
  %1442 = vset.pattern.permute.xlu0 1
  %1443 = vperm.xlu0 %1442, %v574
  %v1444 = vpop.permute.xlu0 %1443
  %1446 = vset.pattern.permute.xlu0 1
  %1447 = vperm.xlu0 %1446, %v577
  %v1448 = vpop.permute.xlu0 %1447
  %1450 = vset.pattern.permute.xlu0 1
  %1451 = vperm.xlu0 %1450, %v580
  %v1452 = vpop.permute.xlu0 %1451
  %1454 = vset.pattern.permute.xlu0 1
  %1455 = vperm.xlu0 %1454, %v583
  %v1456 = vpop.permute.xlu0 %1455
  %1458 = vset.pattern.permute.xlu0 1
  %1459 = vperm.xlu0 %1458, %v586
  %v1460 = vpop.permute.xlu0 %1459
  %1462 = vset.pattern.permute.xlu0 1
  %1463 = vperm.xlu0 %1462, %v589
  %v1464 = vpop.permute.xlu0 %1463
  %v1466 = vperm.slane %v795, 1
  %v1467 = vmul.f32 %v1404, %v1466
  %v1468 = vmul.f32 %v1408, %v1466
  %v1469 = vmul.f32 %v1412, %v1466
  %v1470 = vmul.f32 %v1416, %v1466
  %v1471 = vmul.f32 %v1420, %v1466
  %v1472 = vmul.f32 %v1424, %v1466
  %v1473 = vmul.f32 %v1428, %v1466
  %v1474 = vmul.f32 %v1432, %v1466
  %v1475 = vmul.f32 %v1436, %v1466
  %v1476 = vmul.f32 %v1440, %v1466
  %v1477 = vmul.f32 %v1444, %v1466
  %v1478 = vmul.f32 %v1448, %v1466
  %v1479 = vmul.f32 %v1452, %v1466
  %v1480 = vmul.f32 %v1456, %v1466
  %v1481 = vmul.f32 %v1460, %v1466
  %v1482 = vmul.f32 %v1464, %v1466
  %1483 = vset.pattern.permute.xlu0 1
  %1484 = vperm.xlu0 %1483, %v592
  %v1485 = vpop.permute.xlu0 %1484
  %1487 = vset.pattern.permute.xlu0 1
  %1488 = vperm.xlu0 %1487, %v595
  %v1489 = vpop.permute.xlu0 %1488
  %1491 = vset.pattern.permute.xlu0 1
  %1492 = vperm.xlu0 %1491, %v598
  %v1493 = vpop.permute.xlu0 %1492
  %1495 = vset.pattern.permute.xlu0 1
  %1496 = vperm.xlu0 %1495, %v601
  %v1497 = vpop.permute.xlu0 %1496
  %1499 = vset.pattern.permute.xlu0 1
  %1500 = vperm.xlu0 %1499, %v604
  %v1501 = vpop.permute.xlu0 %1500
  %1503 = vset.pattern.permute.xlu0 1
  %1504 = vperm.xlu0 %1503, %v607
  %v1505 = vpop.permute.xlu0 %1504
  %1507 = vset.pattern.permute.xlu0 1
  %1508 = vperm.xlu0 %1507, %v610
  %v1509 = vpop.permute.xlu0 %1508
  %1511 = vset.pattern.permute.xlu0 1
  %1512 = vperm.xlu0 %1511, %v613
  %v1513 = vpop.permute.xlu0 %1512
  %1515 = vset.pattern.permute.xlu0 1
  %1516 = vperm.xlu0 %1515, %v616
  %v1517 = vpop.permute.xlu0 %1516
  %1519 = vset.pattern.permute.xlu0 1
  %1520 = vperm.xlu0 %1519, %v619
  %v1521 = vpop.permute.xlu0 %1520
  %1523 = vset.pattern.permute.xlu0 1
  %1524 = vperm.xlu0 %1523, %v622
  %v1525 = vpop.permute.xlu0 %1524
  %1527 = vset.pattern.permute.xlu0 1
  %1528 = vperm.xlu0 %1527, %v625
  %v1529 = vpop.permute.xlu0 %1528
  %1531 = vset.pattern.permute.xlu0 1
  %1532 = vperm.xlu0 %1531, %v628
  %v1533 = vpop.permute.xlu0 %1532
  %1535 = vset.pattern.permute.xlu0 1
  %1536 = vperm.xlu0 %1535, %v631
  %v1537 = vpop.permute.xlu0 %1536
  %1539 = vset.pattern.permute.xlu0 1
  %1540 = vperm.xlu0 %1539, %v634
  %v1541 = vpop.permute.xlu0 %1540
  %1543 = vset.pattern.permute.xlu0 1
  %1544 = vperm.xlu0 %1543, %v637
  %v1545 = vpop.permute.xlu0 %1544
  %v1547 = vperm.slane %v835, 1
  %v1548 = vmul.f32 %v1485, %v1547
  %v1549 = vmul.f32 %v1489, %v1547
  %v1550 = vmul.f32 %v1493, %v1547
  %v1551 = vmul.f32 %v1497, %v1547
  %v1552 = vmul.f32 %v1501, %v1547
  %v1553 = vmul.f32 %v1505, %v1547
  %v1554 = vmul.f32 %v1509, %v1547
  %v1555 = vmul.f32 %v1513, %v1547
  %v1556 = vmul.f32 %v1517, %v1547
  %v1557 = vmul.f32 %v1521, %v1547
  %v1558 = vmul.f32 %v1525, %v1547
  %v1559 = vmul.f32 %v1529, %v1547
  %v1560 = vmul.f32 %v1533, %v1547
  %v1561 = vmul.f32 %v1537, %v1547
  %v1562 = vmul.f32 %v1541, %v1547
  %v1563 = vmul.f32 %v1545, %v1547
  %v1564 = vadd.f32 %v1467, %v1548
  %v1565 = vadd.f32 %v1468, %v1549
  %v1566 = vadd.f32 %v1469, %v1550
  %v1567 = vadd.f32 %v1470, %v1551
  %v1568 = vadd.f32 %v1471, %v1552
  %v1569 = vadd.f32 %v1472, %v1553
  %v1570 = vadd.f32 %v1473, %v1554
  %v1571 = vadd.f32 %v1474, %v1555
  %v1572 = vadd.f32 %v1475, %v1556
  %v1573 = vadd.f32 %v1476, %v1557
  %v1574 = vadd.f32 %v1477, %v1558
  %v1575 = vadd.f32 %v1478, %v1559
  %v1576 = vadd.f32 %v1479, %v1560
  %v1577 = vadd.f32 %v1480, %v1561
  %v1578 = vadd.f32 %v1481, %v1562
  %v1579 = vadd.f32 %v1482, %v1563
  %1580 = vmax.xlane.f32.xlu0 %v1564
  %v1581 = vpop.xlane.xlu0 %1580
  %1582 = vmax.xlane.f32.xlu0 %v1565
  %v1583 = vpop.xlane.xlu0 %1582
  %1584 = vmax.xlane.f32.xlu0 %v1566
  %v1585 = vpop.xlane.xlu0 %1584
  %1586 = vmax.xlane.f32.xlu0 %v1567
  %v1587 = vpop.xlane.xlu0 %1586
  %1588 = vmax.xlane.f32.xlu0 %v1568
  %v1589 = vpop.xlane.xlu0 %1588
  %1590 = vmax.xlane.f32.xlu0 %v1569
  %v1591 = vpop.xlane.xlu0 %1590
  %1592 = vmax.xlane.f32.xlu0 %v1570
  %v1593 = vpop.xlane.xlu0 %1592
  %1594 = vmax.xlane.f32.xlu0 %v1571
  %v1595 = vpop.xlane.xlu0 %1594
  %1596 = vmax.xlane.f32.xlu0 %v1572
  %v1597 = vpop.xlane.xlu0 %1596
  %1598 = vmax.xlane.f32.xlu0 %v1573
  %v1599 = vpop.xlane.xlu0 %1598
  %1600 = vmax.xlane.f32.xlu0 %v1574
  %v1601 = vpop.xlane.xlu0 %1600
  %1602 = vmax.xlane.f32.xlu0 %v1575
  %v1603 = vpop.xlane.xlu0 %1602
  %1604 = vmax.xlane.f32.xlu0 %v1576
  %v1605 = vpop.xlane.xlu0 %1604
  %1606 = vmax.xlane.f32.xlu0 %v1577
  %v1607 = vpop.xlane.xlu0 %1606
  %1608 = vmax.xlane.f32.xlu0 %v1578
  %v1609 = vpop.xlane.xlu0 %1608
  %1610 = vmax.xlane.f32.xlu0 %v1579
  %v1611 = vpop.xlane.xlu0 %1610
  %v1612 = vsub.f32 %v1564, %v1581
  %v1613 = vsub.f32 %v1565, %v1583
  %v1614 = vsub.f32 %v1566, %v1585
  %v1615 = vsub.f32 %v1567, %v1587
  %v1616 = vsub.f32 %v1568, %v1589
  %v1617 = vsub.f32 %v1569, %v1591
  %v1618 = vsub.f32 %v1570, %v1593
  %v1619 = vsub.f32 %v1571, %v1595
  %v1620 = vsub.f32 %v1572, %v1597
  %v1621 = vsub.f32 %v1573, %v1599
  %v1622 = vsub.f32 %v1574, %v1601
  %v1623 = vsub.f32 %v1575, %v1603
  %v1624 = vsub.f32 %v1576, %v1605
  %v1625 = vsub.f32 %v1577, %v1607
  %v1626 = vsub.f32 %v1578, %v1609
  %v1627 = vsub.f32 %v1579, %v1611
  %v1628 = vmul.f32 %v1612, 1.442695
  %v1629 = vpow.pop %v1628
  %v1630 = vmul.f32 %v1613, 1.442695
  %v1631 = vpow.pop %v1630
  %v1632 = vmul.f32 %v1614, 1.442695
  %v1633 = vpow.pop %v1632
  %v1634 = vmul.f32 %v1615, 1.442695
  %v1635 = vpow.pop %v1634
  %v1636 = vmul.f32 %v1616, 1.442695
  %v1637 = vpow.pop %v1636
  %v1638 = vmul.f32 %v1617, 1.442695
  %v1639 = vpow.pop %v1638
  %v1640 = vmul.f32 %v1618, 1.442695
  %v1641 = vpow.pop %v1640
  %v1642 = vmul.f32 %v1619, 1.442695
  %v1643 = vpow.pop %v1642
  %v1644 = vmul.f32 %v1620, 1.442695
  %v1645 = vpow.pop %v1644
  %v1646 = vmul.f32 %v1621, 1.442695
  %v1647 = vpow.pop %v1646
  %v1648 = vmul.f32 %v1622, 1.442695
  %v1649 = vpow.pop %v1648
  %v1650 = vmul.f32 %v1623, 1.442695
  %v1651 = vpow.pop %v1650
  %v1652 = vmul.f32 %v1624, 1.442695
  %v1653 = vpow.pop %v1652
  %v1654 = vmul.f32 %v1625, 1.442695
  %v1655 = vpow.pop %v1654
  %v1656 = vmul.f32 %v1626, 1.442695
  %v1657 = vpow.pop %v1656
  %v1658 = vmul.f32 %v1627, 1.442695
  %v1659 = vpow.pop %v1658
  %1660 = vadd.xlane.f32.xlu0 %v1629
  %v1661 = vpop.xlane.xlu0 %1660
  %1662 = vadd.xlane.f32.xlu0 %v1631
  %v1663 = vpop.xlane.xlu0 %1662
  %1664 = vadd.xlane.f32.xlu0 %v1633
  %v1665 = vpop.xlane.xlu0 %1664
  %1666 = vadd.xlane.f32.xlu0 %v1635
  %v1667 = vpop.xlane.xlu0 %1666
  %1668 = vadd.xlane.f32.xlu0 %v1637
  %v1669 = vpop.xlane.xlu0 %1668
  %1670 = vadd.xlane.f32.xlu0 %v1639
  %v1671 = vpop.xlane.xlu0 %1670
  %1672 = vadd.xlane.f32.xlu0 %v1641
  %v1673 = vpop.xlane.xlu0 %1672
  %1674 = vadd.xlane.f32.xlu0 %v1643
  %v1675 = vpop.xlane.xlu0 %1674
  %1676 = vadd.xlane.f32.xlu0 %v1645
  %v1677 = vpop.xlane.xlu0 %1676
  %1678 = vadd.xlane.f32.xlu0 %v1647
  %v1679 = vpop.xlane.xlu0 %1678
  %1680 = vadd.xlane.f32.xlu0 %v1649
  %v1681 = vpop.xlane.xlu0 %1680
  %1682 = vadd.xlane.f32.xlu0 %v1651
  %v1683 = vpop.xlane.xlu0 %1682
  %1684 = vadd.xlane.f32.xlu0 %v1653
  %v1685 = vpop.xlane.xlu0 %1684
  %1686 = vadd.xlane.f32.xlu0 %v1655
  %v1687 = vpop.xlane.xlu0 %1686
  %1688 = vadd.xlane.f32.xlu0 %v1657
  %v1689 = vpop.xlane.xlu0 %1688
  %1690 = vadd.xlane.f32.xlu0 %v1659
  %v1691 = vpop.xlane.xlu0 %1690
  %v1692 = vrcp.pop %v1661
  %v1693 = vrcp.pop %v1663
  %v1694 = vrcp.pop %v1665
  %v1695 = vrcp.pop %v1667
  %v1696 = vrcp.pop %v1669
  %v1697 = vrcp.pop %v1671
  %v1698 = vrcp.pop %v1673
  %v1699 = vrcp.pop %v1675
  %v1700 = vrcp.pop %v1677
  %v1701 = vrcp.pop %v1679
  %v1702 = vrcp.pop %v1681
  %v1703 = vrcp.pop %v1683
  %v1704 = vrcp.pop %v1685
  %v1705 = vrcp.pop %v1687
  %v1706 = vrcp.pop %v1689
  %v1707 = vrcp.pop %v1691
  %v1708 = vmul.f32 %v1629, %v1692
  %v1709 = vmul.f32 %v1631, %v1693
  %v1710 = vmul.f32 %v1633, %v1694
  %v1711 = vmul.f32 %v1635, %v1695
  %v1712 = vmul.f32 %v1637, %v1696
  %v1713 = vmul.f32 %v1639, %v1697
  %v1714 = vmul.f32 %v1641, %v1698
  %v1715 = vmul.f32 %v1643, %v1699
  %v1716 = vmul.f32 %v1645, %v1700
  %v1717 = vmul.f32 %v1647, %v1701
  %v1718 = vmul.f32 %v1649, %v1702
  %v1719 = vmul.f32 %v1651, %v1703
  %v1720 = vmul.f32 %v1653, %v1704
  %v1721 = vmul.f32 %v1655, %v1705
  %v1722 = vmul.f32 %v1657, %v1706
  %v1723 = vmul.f32 %v1659, %v1707
  %v1724 = vperm.slane %v875, 1
  %v1725 = vmul.f32 %v1708, %v1724
  %v1726 = vmul.f32 %v1709, %v1724
  %v1727 = vmul.f32 %v1710, %v1724
  %v1728 = vmul.f32 %v1711, %v1724
  %v1729 = vmul.f32 %v1712, %v1724
  %v1730 = vmul.f32 %v1713, %v1724
  %v1731 = vmul.f32 %v1714, %v1724
  %v1732 = vmul.f32 %v1715, %v1724
  %v1733 = vmul.f32 %v1716, %v1724
  %v1734 = vmul.f32 %v1717, %v1724
  %v1735 = vmul.f32 %v1718, %v1724
  %v1736 = vmul.f32 %v1719, %v1724
  %v1737 = vmul.f32 %v1720, %v1724
  %v1738 = vmul.f32 %v1721, %v1724
  %v1739 = vmul.f32 %v1722, %v1724
  %v1740 = vmul.f32 %v1723, %v1724
  %1741 = vadd.xlane.f32.xlu0 %v1725
  %v1742 = vpop.xlane.xlu0 %1741
  %1743 = vadd.xlane.f32.xlu0 %v1726
  %v1744 = vpop.xlane.xlu0 %1743
  %1745 = vadd.xlane.f32.xlu0 %v1727
  %v1746 = vpop.xlane.xlu0 %1745
  %1747 = vadd.xlane.f32.xlu0 %v1728
  %v1748 = vpop.xlane.xlu0 %1747
  %1749 = vadd.xlane.f32.xlu0 %v1729
  %v1750 = vpop.xlane.xlu0 %1749
  %1751 = vadd.xlane.f32.xlu0 %v1730
  %v1752 = vpop.xlane.xlu0 %1751
  %1753 = vadd.xlane.f32.xlu0 %v1731
  %v1754 = vpop.xlane.xlu0 %1753
  %1755 = vadd.xlane.f32.xlu0 %v1732
  %v1756 = vpop.xlane.xlu0 %1755
  %1757 = vadd.xlane.f32.xlu0 %v1733
  %v1758 = vpop.xlane.xlu0 %1757
  %1759 = vadd.xlane.f32.xlu0 %v1734
  %v1760 = vpop.xlane.xlu0 %1759
  %1761 = vadd.xlane.f32.xlu0 %v1735
  %v1762 = vpop.xlane.xlu0 %1761
  %1763 = vadd.xlane.f32.xlu0 %v1736
  %v1764 = vpop.xlane.xlu0 %1763
  %1765 = vadd.xlane.f32.xlu0 %v1737
  %v1766 = vpop.xlane.xlu0 %1765
  %1767 = vadd.xlane.f32.xlu0 %v1738
  %v1768 = vpop.xlane.xlu0 %1767
  %1769 = vadd.xlane.f32.xlu0 %v1739
  %v1770 = vpop.xlane.xlu0 %1769
  %1771 = vadd.xlane.f32.xlu0 %v1740
  %v1772 = vpop.xlane.xlu0 %1771
  %vm1773 = vcmask 15368
  %1774 = vst.msk [vmem:[#allocation2] sm:$0xff] %vm1773, %v1742
  %1775 = vst.msk [vmem:[#allocation2 + $0x8] sm:$0xff] %vm1773, %v1744
  %1776 = vst.msk [vmem:[#allocation2 + $0x10] sm:$0xff] %vm1773, %v1746
  %1777 = vst.msk [vmem:[#allocation2 + $0x18] sm:$0xff] %vm1773, %v1748
  %1778 = vst.msk [vmem:[#allocation2 + $0x20] sm:$0xff] %vm1773, %v1750
  %1779 = vst.msk [vmem:[#allocation2 + $0x28] sm:$0xff] %vm1773, %v1752
  %1780 = vst.msk [vmem:[#allocation2 + $0x30] sm:$0xff] %vm1773, %v1754
  %1781 = vst.msk [vmem:[#allocation2 + $0x38] sm:$0xff] %vm1773, %v1756
  %1782 = vst.msk [vmem:[#allocation2 + $0x40] sm:$0xff] %vm1773, %v1758
  %1783 = vst.msk [vmem:[#allocation2 + $0x48] sm:$0xff] %vm1773, %v1760
  %1784 = vst.msk [vmem:[#allocation2 + $0x50] sm:$0xff] %vm1773, %v1762
  %1785 = vst.msk [vmem:[#allocation2 + $0x58] sm:$0xff] %vm1773, %v1764
  %1786 = vst.msk [vmem:[#allocation2 + $0x60] sm:$0xff] %vm1773, %v1766
  %1787 = vst.msk [vmem:[#allocation2 + $0x68] sm:$0xff] %vm1773, %v1768
  %1788 = vst.msk [vmem:[#allocation2 + $0x70] sm:$0xff] %vm1773, %v1770
  %1789 = vst.msk [vmem:[#allocation2 + $0x78] sm:$0xff] %vm1773, %v1772
  %v1790 = vperm.slane %v915, 1
  %v1791 = vmul.f32 %v1708, %v1790
  %v1792 = vmul.f32 %v1709, %v1790
  %v1793 = vmul.f32 %v1710, %v1790
  %v1794 = vmul.f32 %v1711, %v1790
  %v1795 = vmul.f32 %v1712, %v1790
  %v1796 = vmul.f32 %v1713, %v1790
  %v1797 = vmul.f32 %v1714, %v1790
  %v1798 = vmul.f32 %v1715, %v1790
  %v1799 = vmul.f32 %v1716, %v1790
  %v1800 = vmul.f32 %v1717, %v1790
  %v1801 = vmul.f32 %v1718, %v1790
  %v1802 = vmul.f32 %v1719, %v1790
  %v1803 = vmul.f32 %v1720, %v1790
  %v1804 = vmul.f32 %v1721, %v1790
  %v1805 = vmul.f32 %v1722, %v1790
  %v1806 = vmul.f32 %v1723, %v1790
  %1807 = vadd.xlane.f32.xlu0 %v1791
  %v1808 = vpop.xlane.xlu0 %1807
  %1809 = vadd.xlane.f32.xlu0 %v1792
  %v1810 = vpop.xlane.xlu0 %1809
  %1811 = vadd.xlane.f32.xlu0 %v1793
  %v1812 = vpop.xlane.xlu0 %1811
  %1813 = vadd.xlane.f32.xlu0 %v1794
  %v1814 = vpop.xlane.xlu0 %1813
  %1815 = vadd.xlane.f32.xlu0 %v1795
  %v1816 = vpop.xlane.xlu0 %1815
  %1817 = vadd.xlane.f32.xlu0 %v1796
  %v1818 = vpop.xlane.xlu0 %1817
  %1819 = vadd.xlane.f32.xlu0 %v1797
  %v1820 = vpop.xlane.xlu0 %1819
  %1821 = vadd.xlane.f32.xlu0 %v1798
  %v1822 = vpop.xlane.xlu0 %1821
  %1823 = vadd.xlane.f32.xlu0 %v1799
  %v1824 = vpop.xlane.xlu0 %1823
  %1825 = vadd.xlane.f32.xlu0 %v1800
  %v1826 = vpop.xlane.xlu0 %1825
  %1827 = vadd.xlane.f32.xlu0 %v1801
  %v1828 = vpop.xlane.xlu0 %1827
  %1829 = vadd.xlane.f32.xlu0 %v1802
  %v1830 = vpop.xlane.xlu0 %1829
  %1831 = vadd.xlane.f32.xlu0 %v1803
  %v1832 = vpop.xlane.xlu0 %1831
  %1833 = vadd.xlane.f32.xlu0 %v1804
  %v1834 = vpop.xlane.xlu0 %1833
  %1835 = vadd.xlane.f32.xlu0 %v1805
  %v1836 = vpop.xlane.xlu0 %1835
  %1837 = vadd.xlane.f32.xlu0 %v1806
  %v1838 = vpop.xlane.xlu0 %1837
  %1839 = vst.msk [vmem:[#allocation2 + $0x80] sm:$0xff] %vm1773, %v1808
  %1840 = vst.msk [vmem:[#allocation2 + $0x88] sm:$0xff] %vm1773, %v1810
  %1841 = vst.msk [vmem:[#allocation2 + $0x90] sm:$0xff] %vm1773, %v1812
  %1842 = vst.msk [vmem:[#allocation2 + $0x98] sm:$0xff] %vm1773, %v1814
  %1843 = vst.msk [vmem:[#allocation2 + $0xa0] sm:$0xff] %vm1773, %v1816
  %1844 = vst.msk [vmem:[#allocation2 + $0xa8] sm:$0xff] %vm1773, %v1818
  %1845 = vst.msk [vmem:[#allocation2 + $0xb0] sm:$0xff] %vm1773, %v1820
  %1846 = vst.msk [vmem:[#allocation2 + $0xb8] sm:$0xff] %vm1773, %v1822
  %1847 = vst.msk [vmem:[#allocation2 + $0xc0] sm:$0xff] %vm1773, %v1824
  %1848 = vst.msk [vmem:[#allocation2 + $0xc8] sm:$0xff] %vm1773, %v1826
  %1849 = vst.msk [vmem:[#allocation2 + $0xd0] sm:$0xff] %vm1773, %v1828
  %1850 = vst.msk [vmem:[#allocation2 + $0xd8] sm:$0xff] %vm1773, %v1830
  %1851 = vst.msk [vmem:[#allocation2 + $0xe0] sm:$0xff] %vm1773, %v1832
  %1852 = vst.msk [vmem:[#allocation2 + $0xe8] sm:$0xff] %vm1773, %v1834
  %1853 = vst.msk [vmem:[#allocation2 + $0xf0] sm:$0xff] %vm1773, %v1836
  %1854 = vst.msk [vmem:[#allocation2 + $0xf8] sm:$0xff] %vm1773, %v1838
  %1855 = vset.pattern.permute.xlu0 2
  %1856 = vperm.xlu0 %1855, %v544
  %v1857 = vpop.permute.xlu0 %1856
  %1859 = vset.pattern.permute.xlu0 2
  %1860 = vperm.xlu0 %1859, %v547
  %v1861 = vpop.permute.xlu0 %1860
  %1863 = vset.pattern.permute.xlu0 2
  %1864 = vperm.xlu0 %1863, %v550
  %v1865 = vpop.permute.xlu0 %1864
  %1867 = vset.pattern.permute.xlu0 2
  %1868 = vperm.xlu0 %1867, %v553
  %v1869 = vpop.permute.xlu0 %1868
  %1871 = vset.pattern.permute.xlu0 2
  %1872 = vperm.xlu0 %1871, %v556
  %v1873 = vpop.permute.xlu0 %1872
  %1875 = vset.pattern.permute.xlu0 2
  %1876 = vperm.xlu0 %1875, %v559
  %v1877 = vpop.permute.xlu0 %1876
  %1879 = vset.pattern.permute.xlu0 2
  %1880 = vperm.xlu0 %1879, %v562
  %v1881 = vpop.permute.xlu0 %1880
  %1883 = vset.pattern.permute.xlu0 2
  %1884 = vperm.xlu0 %1883, %v565
  %v1885 = vpop.permute.xlu0 %1884
  %1887 = vset.pattern.permute.xlu0 2
  %1888 = vperm.xlu0 %1887, %v568
  %v1889 = vpop.permute.xlu0 %1888
  %1891 = vset.pattern.permute.xlu0 2
  %1892 = vperm.xlu0 %1891, %v571
  %v1893 = vpop.permute.xlu0 %1892
  %1895 = vset.pattern.permute.xlu0 2
  %1896 = vperm.xlu0 %1895, %v574
  %v1897 = vpop.permute.xlu0 %1896
  %1899 = vset.pattern.permute.xlu0 2
  %1900 = vperm.xlu0 %1899, %v577
  %v1901 = vpop.permute.xlu0 %1900
  %1903 = vset.pattern.permute.xlu0 2
  %1904 = vperm.xlu0 %1903, %v580
  %v1905 = vpop.permute.xlu0 %1904
  %1907 = vset.pattern.permute.xlu0 2
  %1908 = vperm.xlu0 %1907, %v583
  %v1909 = vpop.permute.xlu0 %1908
  %1911 = vset.pattern.permute.xlu0 2
  %1912 = vperm.xlu0 %1911, %v586
  %v1913 = vpop.permute.xlu0 %1912
  %1915 = vset.pattern.permute.xlu0 2
  %1916 = vperm.xlu0 %1915, %v589
  %v1917 = vpop.permute.xlu0 %1916
  %v1919 = vperm.slane %v795, 2
  %v1920 = vmul.f32 %v1857, %v1919
  %v1921 = vmul.f32 %v1861, %v1919
  %v1922 = vmul.f32 %v1865, %v1919
  %v1923 = vmul.f32 %v1869, %v1919
  %v1924 = vmul.f32 %v1873, %v1919
  %v1925 = vmul.f32 %v1877, %v1919
  %v1926 = vmul.f32 %v1881, %v1919
  %v1927 = vmul.f32 %v1885, %v1919
  %v1928 = vmul.f32 %v1889, %v1919
  %v1929 = vmul.f32 %v1893, %v1919
  %v1930 = vmul.f32 %v1897, %v1919
  %v1931 = vmul.f32 %v1901, %v1919
  %v1932 = vmul.f32 %v1905, %v1919
  %v1933 = vmul.f32 %v1909, %v1919
  %v1934 = vmul.f32 %v1913, %v1919
  %v1935 = vmul.f32 %v1917, %v1919
  %1936 = vset.pattern.permute.xlu0 2
  %1937 = vperm.xlu0 %1936, %v592
  %v1938 = vpop.permute.xlu0 %1937
  %1940 = vset.pattern.permute.xlu0 2
  %1941 = vperm.xlu0 %1940, %v595
  %v1942 = vpop.permute.xlu0 %1941
  %1944 = vset.pattern.permute.xlu0 2
  %1945 = vperm.xlu0 %1944, %v598
  %v1946 = vpop.permute.xlu0 %1945
  %1948 = vset.pattern.permute.xlu0 2
  %1949 = vperm.xlu0 %1948, %v601
  %v1950 = vpop.permute.xlu0 %1949
  %1952 = vset.pattern.permute.xlu0 2
  %1953 = vperm.xlu0 %1952, %v604
  %v1954 = vpop.permute.xlu0 %1953
  %1956 = vset.pattern.permute.xlu0 2
  %1957 = vperm.xlu0 %1956, %v607
  %v1958 = vpop.permute.xlu0 %1957
  %1960 = vset.pattern.permute.xlu0 2
  %1961 = vperm.xlu0 %1960, %v610
  %v1962 = vpop.permute.xlu0 %1961
  %1964 = vset.pattern.permute.xlu0 2
  %1965 = vperm.xlu0 %1964, %v613
  %v1966 = vpop.permute.xlu0 %1965
  %1968 = vset.pattern.permute.xlu0 2
  %1969 = vperm.xlu0 %1968, %v616
  %v1970 = vpop.permute.xlu0 %1969
  %1972 = vset.pattern.permute.xlu0 2
  %1973 = vperm.xlu0 %1972, %v619
  %v1974 = vpop.permute.xlu0 %1973
  %1976 = vset.pattern.permute.xlu0 2
  %1977 = vperm.xlu0 %1976, %v622
  %v1978 = vpop.permute.xlu0 %1977
  %1980 = vset.pattern.permute.xlu0 2
  %1981 = vperm.xlu0 %1980, %v625
  %v1982 = vpop.permute.xlu0 %1981
  %1984 = vset.pattern.permute.xlu0 2
  %1985 = vperm.xlu0 %1984, %v628
  %v1986 = vpop.permute.xlu0 %1985
  %1988 = vset.pattern.permute.xlu0 2
  %1989 = vperm.xlu0 %1988, %v631
  %v1990 = vpop.permute.xlu0 %1989
  %1992 = vset.pattern.permute.xlu0 2
  %1993 = vperm.xlu0 %1992, %v634
  %v1994 = vpop.permute.xlu0 %1993
  %1996 = vset.pattern.permute.xlu0 2
  %1997 = vperm.xlu0 %1996, %v637
  %v1998 = vpop.permute.xlu0 %1997
  %v2000 = vperm.slane %v835, 2
  %v2001 = vmul.f32 %v1938, %v2000
  %v2002 = vmul.f32 %v1942, %v2000
  %v2003 = vmul.f32 %v1946, %v2000
  %v2004 = vmul.f32 %v1950, %v2000
  %v2005 = vmul.f32 %v1954, %v2000
  %v2006 = vmul.f32 %v1958, %v2000
  %v2007 = vmul.f32 %v1962, %v2000
  %v2008 = vmul.f32 %v1966, %v2000
  %v2009 = vmul.f32 %v1970, %v2000
  %v2010 = vmul.f32 %v1974, %v2000
  %v2011 = vmul.f32 %v1978, %v2000
  %v2012 = vmul.f32 %v1982, %v2000
  %v2013 = vmul.f32 %v1986, %v2000
  %v2014 = vmul.f32 %v1990, %v2000
  %v2015 = vmul.f32 %v1994, %v2000
  %v2016 = vmul.f32 %v1998, %v2000
  %v2017 = vadd.f32 %v1920, %v2001
  %v2018 = vadd.f32 %v1921, %v2002
  %v2019 = vadd.f32 %v1922, %v2003
  %v2020 = vadd.f32 %v1923, %v2004
  %v2021 = vadd.f32 %v1924, %v2005
  %v2022 = vadd.f32 %v1925, %v2006
  %v2023 = vadd.f32 %v1926, %v2007
  %v2024 = vadd.f32 %v1927, %v2008
  %v2025 = vadd.f32 %v1928, %v2009
  %v2026 = vadd.f32 %v1929, %v2010
  %v2027 = vadd.f32 %v1930, %v2011
  %v2028 = vadd.f32 %v1931, %v2012
  %v2029 = vadd.f32 %v1932, %v2013
  %v2030 = vadd.f32 %v1933, %v2014
  %v2031 = vadd.f32 %v1934, %v2015
  %v2032 = vadd.f32 %v1935, %v2016
  %2033 = vmax.xlane.f32.xlu0 %v2017
  %v2034 = vpop.xlane.xlu0 %2033
  %2035 = vmax.xlane.f32.xlu0 %v2018
  %v2036 = vpop.xlane.xlu0 %2035
  %2037 = vmax.xlane.f32.xlu0 %v2019
  %v2038 = vpop.xlane.xlu0 %2037
  %2039 = vmax.xlane.f32.xlu0 %v2020
  %v2040 = vpop.xlane.xlu0 %2039
  %2041 = vmax.xlane.f32.xlu0 %v2021
  %v2042 = vpop.xlane.xlu0 %2041
  %2043 = vmax.xlane.f32.xlu0 %v2022
  %v2044 = vpop.xlane.xlu0 %2043
  %2045 = vmax.xlane.f32.xlu0 %v2023
  %v2046 = vpop.xlane.xlu0 %2045
  %2047 = vmax.xlane.f32.xlu0 %v2024
  %v2048 = vpop.xlane.xlu0 %2047
  %2049 = vmax.xlane.f32.xlu0 %v2025
  %v2050 = vpop.xlane.xlu0 %2049
  %2051 = vmax.xlane.f32.xlu0 %v2026
  %v2052 = vpop.xlane.xlu0 %2051
  %2053 = vmax.xlane.f32.xlu0 %v2027
  %v2054 = vpop.xlane.xlu0 %2053
  %2055 = vmax.xlane.f32.xlu0 %v2028
  %v2056 = vpop.xlane.xlu0 %2055
  %2057 = vmax.xlane.f32.xlu0 %v2029
  %v2058 = vpop.xlane.xlu0 %2057
  %2059 = vmax.xlane.f32.xlu0 %v2030
  %v2060 = vpop.xlane.xlu0 %2059
  %2061 = vmax.xlane.f32.xlu0 %v2031
  %v2062 = vpop.xlane.xlu0 %2061
  %2063 = vmax.xlane.f32.xlu0 %v2032
  %v2064 = vpop.xlane.xlu0 %2063
  %v2065 = vsub.f32 %v2017, %v2034
  %v2066 = vsub.f32 %v2018, %v2036
  %v2067 = vsub.f32 %v2019, %v2038
  %v2068 = vsub.f32 %v2020, %v2040
  %v2069 = vsub.f32 %v2021, %v2042
  %v2070 = vsub.f32 %v2022, %v2044
  %v2071 = vsub.f32 %v2023, %v2046
  %v2072 = vsub.f32 %v2024, %v2048
  %v2073 = vsub.f32 %v2025, %v2050
  %v2074 = vsub.f32 %v2026, %v2052
  %v2075 = vsub.f32 %v2027, %v2054
  %v2076 = vsub.f32 %v2028, %v2056
  %v2077 = vsub.f32 %v2029, %v2058
  %v2078 = vsub.f32 %v2030, %v2060
  %v2079 = vsub.f32 %v2031, %v2062
  %v2080 = vsub.f32 %v2032, %v2064
  %v2081 = vmul.f32 %v2065, 1.442695
  %v2082 = vpow.pop %v2081
  %v2083 = vmul.f32 %v2066, 1.442695
  %v2084 = vpow.pop %v2083
  %v2085 = vmul.f32 %v2067, 1.442695
  %v2086 = vpow.pop %v2085
  %v2087 = vmul.f32 %v2068, 1.442695
  %v2088 = vpow.pop %v2087
  %v2089 = vmul.f32 %v2069, 1.442695
  %v2090 = vpow.pop %v2089
  %v2091 = vmul.f32 %v2070, 1.442695
  %v2092 = vpow.pop %v2091
  %v2093 = vmul.f32 %v2071, 1.442695
  %v2094 = vpow.pop %v2093
  %v2095 = vmul.f32 %v2072, 1.442695
  %v2096 = vpow.pop %v2095
  %v2097 = vmul.f32 %v2073, 1.442695
  %v2098 = vpow.pop %v2097
  %v2099 = vmul.f32 %v2074, 1.442695
  %v2100 = vpow.pop %v2099
  %v2101 = vmul.f32 %v2075, 1.442695
  %v2102 = vpow.pop %v2101
  %v2103 = vmul.f32 %v2076, 1.442695
  %v2104 = vpow.pop %v2103
  %v2105 = vmul.f32 %v2077, 1.442695
  %v2106 = vpow.pop %v2105
  %v2107 = vmul.f32 %v2078, 1.442695
  %v2108 = vpow.pop %v2107
  %v2109 = vmul.f32 %v2079, 1.442695
  %v2110 = vpow.pop %v2109
  %v2111 = vmul.f32 %v2080, 1.442695
  %v2112 = vpow.pop %v2111
  %2113 = vadd.xlane.f32.xlu0 %v2082
  %v2114 = vpop.xlane.xlu0 %2113
  %2115 = vadd.xlane.f32.xlu0 %v2084
  %v2116 = vpop.xlane.xlu0 %2115
  %2117 = vadd.xlane.f32.xlu0 %v2086
  %v2118 = vpop.xlane.xlu0 %2117
  %2119 = vadd.xlane.f32.xlu0 %v2088
  %v2120 = vpop.xlane.xlu0 %2119
  %2121 = vadd.xlane.f32.xlu0 %v2090
  %v2122 = vpop.xlane.xlu0 %2121
  %2123 = vadd.xlane.f32.xlu0 %v2092
  %v2124 = vpop.xlane.xlu0 %2123
  %2125 = vadd.xlane.f32.xlu0 %v2094
  %v2126 = vpop.xlane.xlu0 %2125
  %2127 = vadd.xlane.f32.xlu0 %v2096
  %v2128 = vpop.xlane.xlu0 %2127
  %2129 = vadd.xlane.f32.xlu0 %v2098
  %v2130 = vpop.xlane.xlu0 %2129
  %2131 = vadd.xlane.f32.xlu0 %v2100
  %v2132 = vpop.xlane.xlu0 %2131
  %2133 = vadd.xlane.f32.xlu0 %v2102
  %v2134 = vpop.xlane.xlu0 %2133
  %2135 = vadd.xlane.f32.xlu0 %v2104
  %v2136 = vpop.xlane.xlu0 %2135
  %2137 = vadd.xlane.f32.xlu0 %v2106
  %v2138 = vpop.xlane.xlu0 %2137
  %2139 = vadd.xlane.f32.xlu0 %v2108
  %v2140 = vpop.xlane.xlu0 %2139
  %2141 = vadd.xlane.f32.xlu0 %v2110
  %v2142 = vpop.xlane.xlu0 %2141
  %2143 = vadd.xlane.f32.xlu0 %v2112
  %v2144 = vpop.xlane.xlu0 %2143
  %v2145 = vrcp.pop %v2114
  %v2146 = vrcp.pop %v2116
  %v2147 = vrcp.pop %v2118
  %v2148 = vrcp.pop %v2120
  %v2149 = vrcp.pop %v2122
  %v2150 = vrcp.pop %v2124
  %v2151 = vrcp.pop %v2126
  %v2152 = vrcp.pop %v2128
  %v2153 = vrcp.pop %v2130
  %v2154 = vrcp.pop %v2132
  %v2155 = vrcp.pop %v2134
  %v2156 = vrcp.pop %v2136
  %v2157 = vrcp.pop %v2138
  %v2158 = vrcp.pop %v2140
  %v2159 = vrcp.pop %v2142
  %v2160 = vrcp.pop %v2144
  %v2161 = vmul.f32 %v2082, %v2145
  %v2162 = vmul.f32 %v2084, %v2146
  %v2163 = vmul.f32 %v2086, %v2147
  %v2164 = vmul.f32 %v2088, %v2148
  %v2165 = vmul.f32 %v2090, %v2149
  %v2166 = vmul.f32 %v2092, %v2150
  %v2167 = vmul.f32 %v2094, %v2151
  %v2168 = vmul.f32 %v2096, %v2152
  %v2169 = vmul.f32 %v2098, %v2153
  %v2170 = vmul.f32 %v2100, %v2154
  %v2171 = vmul.f32 %v2102, %v2155
  %v2172 = vmul.f32 %v2104, %v2156
  %v2173 = vmul.f32 %v2106, %v2157
  %v2174 = vmul.f32 %v2108, %v2158
  %v2175 = vmul.f32 %v2110, %v2159
  %v2176 = vmul.f32 %v2112, %v2160
  %v2177 = vperm.slane %v875, 2
  %v2178 = vmul.f32 %v2161, %v2177
  %v2179 = vmul.f32 %v2162, %v2177
  %v2180 = vmul.f32 %v2163, %v2177
  %v2181 = vmul.f32 %v2164, %v2177
  %v2182 = vmul.f32 %v2165, %v2177
  %v2183 = vmul.f32 %v2166, %v2177
  %v2184 = vmul.f32 %v2167, %v2177
  %v2185 = vmul.f32 %v2168, %v2177
  %v2186 = vmul.f32 %v2169, %v2177
  %v2187 = vmul.f32 %v2170, %v2177
  %v2188 = vmul.f32 %v2171, %v2177
  %v2189 = vmul.f32 %v2172, %v2177
  %v2190 = vmul.f32 %v2173, %v2177
  %v2191 = vmul.f32 %v2174, %v2177
  %v2192 = vmul.f32 %v2175, %v2177
  %v2193 = vmul.f32 %v2176, %v2177
  %2194 = vadd.xlane.f32.xlu0 %v2178
  %v2195 = vpop.xlane.xlu0 %2194
  %2196 = vadd.xlane.f32.xlu0 %v2179
  %v2197 = vpop.xlane.xlu0 %2196
  %2198 = vadd.xlane.f32.xlu0 %v2180
  %v2199 = vpop.xlane.xlu0 %2198
  %2200 = vadd.xlane.f32.xlu0 %v2181
  %v2201 = vpop.xlane.xlu0 %2200
  %2202 = vadd.xlane.f32.xlu0 %v2182
  %v2203 = vpop.xlane.xlu0 %2202
  %2204 = vadd.xlane.f32.xlu0 %v2183
  %v2205 = vpop.xlane.xlu0 %2204
  %2206 = vadd.xlane.f32.xlu0 %v2184
  %v2207 = vpop.xlane.xlu0 %2206
  %2208 = vadd.xlane.f32.xlu0 %v2185
  %v2209 = vpop.xlane.xlu0 %2208
  %2210 = vadd.xlane.f32.xlu0 %v2186
  %v2211 = vpop.xlane.xlu0 %2210
  %2212 = vadd.xlane.f32.xlu0 %v2187
  %v2213 = vpop.xlane.xlu0 %2212
  %2214 = vadd.xlane.f32.xlu0 %v2188
  %v2215 = vpop.xlane.xlu0 %2214
  %2216 = vadd.xlane.f32.xlu0 %v2189
  %v2217 = vpop.xlane.xlu0 %2216
  %2218 = vadd.xlane.f32.xlu0 %v2190
  %v2219 = vpop.xlane.xlu0 %2218
  %2220 = vadd.xlane.f32.xlu0 %v2191
  %v2221 = vpop.xlane.xlu0 %2220
  %2222 = vadd.xlane.f32.xlu0 %v2192
  %v2223 = vpop.xlane.xlu0 %2222
  %2224 = vadd.xlane.f32.xlu0 %v2193
  %v2225 = vpop.xlane.xlu0 %2224
  %vm2226 = vcmask 23568
  %2227 = vst.msk [vmem:[#allocation2] sm:$0xff] %vm2226, %v2195
  %2228 = vst.msk [vmem:[#allocation2 + $0x8] sm:$0xff] %vm2226, %v2197
  %2229 = vst.msk [vmem:[#allocation2 + $0x10] sm:$0xff] %vm2226, %v2199
  %2230 = vst.msk [vmem:[#allocation2 + $0x18] sm:$0xff] %vm2226, %v2201
  %2231 = vst.msk [vmem:[#allocation2 + $0x20] sm:$0xff] %vm2226, %v2203
  %2232 = vst.msk [vmem:[#allocation2 + $0x28] sm:$0xff] %vm2226, %v2205
  %2233 = vst.msk [vmem:[#allocation2 + $0x30] sm:$0xff] %vm2226, %v2207
  %2234 = vst.msk [vmem:[#allocation2 + $0x38] sm:$0xff] %vm2226, %v2209
  %2235 = vst.msk [vmem:[#allocation2 + $0x40] sm:$0xff] %vm2226, %v2211
  %2236 = vst.msk [vmem:[#allocation2 + $0x48] sm:$0xff] %vm2226, %v2213
  %2237 = vst.msk [vmem:[#allocation2 + $0x50] sm:$0xff] %vm2226, %v2215
  %2238 = vst.msk [vmem:[#allocation2 + $0x58] sm:$0xff] %vm2226, %v2217
  %2239 = vst.msk [vmem:[#allocation2 + $0x60] sm:$0xff] %vm2226, %v2219
  %2240 = vst.msk [vmem:[#allocation2 + $0x68] sm:$0xff] %vm2226, %v2221
  %2241 = vst.msk [vmem:[#allocation2 + $0x70] sm:$0xff] %vm2226, %v2223
  %2242 = vst.msk [vmem:[#allocation2 + $0x78] sm:$0xff] %vm2226, %v2225
  %v2243 = vperm.slane %v915, 2
  %v2244 = vmul.f32 %v2161, %v2243
  %v2245 = vmul.f32 %v2162, %v2243
  %v2246 = vmul.f32 %v2163, %v2243
  %v2247 = vmul.f32 %v2164, %v2243
  %v2248 = vmul.f32 %v2165, %v2243
  %v2249 = vmul.f32 %v2166, %v2243
  %v2250 = vmul.f32 %v2167, %v2243
  %v2251 = vmul.f32 %v2168, %v2243
  %v2252 = vmul.f32 %v2169, %v2243
  %v2253 = vmul.f32 %v2170, %v2243
  %v2254 = vmul.f32 %v2171, %v2243
  %v2255 = vmul.f32 %v2172, %v2243
  %v2256 = vmul.f32 %v2173, %v2243
  %v2257 = vmul.f32 %v2174, %v2243
  %v2258 = vmul.f32 %v2175, %v2243
  %v2259 = vmul.f32 %v2176, %v2243
  %2260 = vadd.xlane.f32.xlu0 %v2244
  %v2261 = vpop.xlane.xlu0 %2260
  %2262 = vadd.xlane.f32.xlu0 %v2245
  %v2263 = vpop.xlane.xlu0 %2262
  %2264 = vadd.xlane.f32.xlu0 %v2246
  %v2265 = vpop.xlane.xlu0 %2264
  %2266 = vadd.xlane.f32.xlu0 %v2247
  %v2267 = vpop.xlane.xlu0 %2266
  %2268 = vadd.xlane.f32.xlu0 %v2248
  %v2269 = vpop.xlane.xlu0 %2268
  %2270 = vadd.xlane.f32.xlu0 %v2249
  %v2271 = vpop.xlane.xlu0 %2270
  %2272 = vadd.xlane.f32.xlu0 %v2250
  %v2273 = vpop.xlane.xlu0 %2272
  %2274 = vadd.xlane.f32.xlu0 %v2251
  %v2275 = vpop.xlane.xlu0 %2274
  %2276 = vadd.xlane.f32.xlu0 %v2252
  %v2277 = vpop.xlane.xlu0 %2276
  %2278 = vadd.xlane.f32.xlu0 %v2253
  %v2279 = vpop.xlane.xlu0 %2278
  %2280 = vadd.xlane.f32.xlu0 %v2254
  %v2281 = vpop.xlane.xlu0 %2280
  %2282 = vadd.xlane.f32.xlu0 %v2255
  %v2283 = vpop.xlane.xlu0 %2282
  %2284 = vadd.xlane.f32.xlu0 %v2256
  %v2285 = vpop.xlane.xlu0 %2284
  %2286 = vadd.xlane.f32.xlu0 %v2257
  %v2287 = vpop.xlane.xlu0 %2286
  %2288 = vadd.xlane.f32.xlu0 %v2258
  %v2289 = vpop.xlane.xlu0 %2288
  %2290 = vadd.xlane.f32.xlu0 %v2259
  %v2291 = vpop.xlane.xlu0 %2290
  %2292 = vst.msk [vmem:[#allocation2 + $0x80] sm:$0xff] %vm2226, %v2261
  %2293 = vst.msk [vmem:[#allocation2 + $0x88] sm:$0xff] %vm2226, %v2263
  %2294 = vst.msk [vmem:[#allocation2 + $0x90] sm:$0xff] %vm2226, %v2265
  %2295 = vst.msk [vmem:[#allocation2 + $0x98] sm:$0xff] %vm2226, %v2267
  %2296 = vst.msk [vmem:[#allocation2 + $0xa0] sm:$0xff] %vm2226, %v2269
  %2297 = vst.msk [vmem:[#allocation2 + $0xa8] sm:$0xff] %vm2226, %v2271
  %2298 = vst.msk [vmem:[#allocation2 + $0xb0] sm:$0xff] %vm2226, %v2273
  %2299 = vst.msk [vmem:[#allocation2 + $0xb8] sm:$0xff] %vm2226, %v2275
  %2300 = vst.msk [vmem:[#allocation2 + $0xc0] sm:$0xff] %vm2226, %v2277
  %2301 = vst.msk [vmem:[#allocation2 + $0xc8] sm:$0xff] %vm2226, %v2279
  %2302 = vst.msk [vmem:[#allocation2 + $0xd0] sm:$0xff] %vm2226, %v2281
  %2303 = vst.msk [vmem:[#allocation2 + $0xd8] sm:$0xff] %vm2226, %v2283
  %2304 = vst.msk [vmem:[#allocation2 + $0xe0] sm:$0xff] %vm2226, %v2285
  %2305 = vst.msk [vmem:[#allocation2 + $0xe8] sm:$0xff] %vm2226, %v2287
  %2306 = vst.msk [vmem:[#allocation2 + $0xf0] sm:$0xff] %vm2226, %v2289
  %2307 = vst.msk [vmem:[#allocation2 + $0xf8] sm:$0xff] %vm2226, %v2291
  %2308 = vset.pattern.permute.xlu0 3
  %2309 = vperm.xlu0 %2308, %v544
  %v2310 = vpop.permute.xlu0 %2309
  %2312 = vset.pattern.permute.xlu0 3
  %2313 = vperm.xlu0 %2312, %v547
  %v2314 = vpop.permute.xlu0 %2313
  %2316 = vset.pattern.permute.xlu0 3
  %2317 = vperm.xlu0 %2316, %v550
  %v2318 = vpop.permute.xlu0 %2317
  %2320 = vset.pattern.permute.xlu0 3
  %2321 = vperm.xlu0 %2320, %v553
  %v2322 = vpop.permute.xlu0 %2321
  %2324 = vset.pattern.permute.xlu0 3
  %2325 = vperm.xlu0 %2324, %v556
  %v2326 = vpop.permute.xlu0 %2325
  %2328 = vset.pattern.permute.xlu0 3
  %2329 = vperm.xlu0 %2328, %v559
  %v2330 = vpop.permute.xlu0 %2329
  %2332 = vset.pattern.permute.xlu0 3
  %2333 = vperm.xlu0 %2332, %v562
  %v2334 = vpop.permute.xlu0 %2333
  %2336 = vset.pattern.permute.xlu0 3
  %2337 = vperm.xlu0 %2336, %v565
  %v2338 = vpop.permute.xlu0 %2337
  %2340 = vset.pattern.permute.xlu0 3
  %2341 = vperm.xlu0 %2340, %v568
  %v2342 = vpop.permute.xlu0 %2341
  %2344 = vset.pattern.permute.xlu0 3
  %2345 = vperm.xlu0 %2344, %v571
  %v2346 = vpop.permute.xlu0 %2345
  %2348 = vset.pattern.permute.xlu0 3
  %2349 = vperm.xlu0 %2348, %v574
  %v2350 = vpop.permute.xlu0 %2349
  %2352 = vset.pattern.permute.xlu0 3
  %2353 = vperm.xlu0 %2352, %v577
  %v2354 = vpop.permute.xlu0 %2353
  %2356 = vset.pattern.permute.xlu0 3
  %2357 = vperm.xlu0 %2356, %v580
  %v2358 = vpop.permute.xlu0 %2357
  %2360 = vset.pattern.permute.xlu0 3
  %2361 = vperm.xlu0 %2360, %v583
  %v2362 = vpop.permute.xlu0 %2361
  %2364 = vset.pattern.permute.xlu0 3
  %2365 = vperm.xlu0 %2364, %v586
  %v2366 = vpop.permute.xlu0 %2365
  %2368 = vset.pattern.permute.xlu0 3
  %2369 = vperm.xlu0 %2368, %v589
  %v2370 = vpop.permute.xlu0 %2369
  %v2372 = vperm.slane %v795, 3
  %v2373 = vmul.f32 %v2310, %v2372
  %v2374 = vmul.f32 %v2314, %v2372
  %v2375 = vmul.f32 %v2318, %v2372
  %v2376 = vmul.f32 %v2322, %v2372
  %v2377 = vmul.f32 %v2326, %v2372
  %v2378 = vmul.f32 %v2330, %v2372
  %v2379 = vmul.f32 %v2334, %v2372
  %v2380 = vmul.f32 %v2338, %v2372
  %v2381 = vmul.f32 %v2342, %v2372
  %v2382 = vmul.f32 %v2346, %v2372
  %v2383 = vmul.f32 %v2350, %v2372
  %v2384 = vmul.f32 %v2354, %v2372
  %v2385 = vmul.f32 %v2358, %v2372
  %v2386 = vmul.f32 %v2362, %v2372
  %v2387 = vmul.f32 %v2366, %v2372
  %v2388 = vmul.f32 %v2370, %v2372
  %2389 = vset.pattern.permute.xlu0 3
  %2390 = vperm.xlu0 %2389, %v592
  %v2391 = vpop.permute.xlu0 %2390
  %2393 = vset.pattern.permute.xlu0 3
  %2394 = vperm.xlu0 %2393, %v595
  %v2395 = vpop.permute.xlu0 %2394
  %2397 = vset.pattern.permute.xlu0 3
  %2398 = vperm.xlu0 %2397, %v598
  %v2399 = vpop.permute.xlu0 %2398
  %2401 = vset.pattern.permute.xlu0 3
  %2402 = vperm.xlu0 %2401, %v601
  %v2403 = vpop.permute.xlu0 %2402
  %2405 = vset.pattern.permute.xlu0 3
  %2406 = vperm.xlu0 %2405, %v604
  %v2407 = vpop.permute.xlu0 %2406
  %2409 = vset.pattern.permute.xlu0 3
  %2410 = vperm.xlu0 %2409, %v607
  %v2411 = vpop.permute.xlu0 %2410
  %2413 = vset.pattern.permute.xlu0 3
  %2414 = vperm.xlu0 %2413, %v610
  %v2415 = vpop.permute.xlu0 %2414
  %2417 = vset.pattern.permute.xlu0 3
  %2418 = vperm.xlu0 %2417, %v613
  %v2419 = vpop.permute.xlu0 %2418
  %2421 = vset.pattern.permute.xlu0 3
  %2422 = vperm.xlu0 %2421, %v616
  %v2423 = vpop.permute.xlu0 %2422
  %2425 = vset.pattern.permute.xlu0 3
  %2426 = vperm.xlu0 %2425, %v619
  %v2427 = vpop.permute.xlu0 %2426
  %2429 = vset.pattern.permute.xlu0 3
  %2430 = vperm.xlu0 %2429, %v622
  %v2431 = vpop.permute.xlu0 %2430
  %2433 = vset.pattern.permute.xlu0 3
  %2434 = vperm.xlu0 %2433, %v625
  %v2435 = vpop.permute.xlu0 %2434
  %2437 = vset.pattern.permute.xlu0 3
  %2438 = vperm.xlu0 %2437, %v628
  %v2439 = vpop.permute.xlu0 %2438
  %2441 = vset.pattern.permute.xlu0 3
  %2442 = vperm.xlu0 %2441, %v631
  %v2443 = vpop.permute.xlu0 %2442
  %2445 = vset.pattern.permute.xlu0 3
  %2446 = vperm.xlu0 %2445, %v634
  %v2447 = vpop.permute.xlu0 %2446
  %2449 = vset.pattern.permute.xlu0 3
  %2450 = vperm.xlu0 %2449, %v637
  %v2451 = vpop.permute.xlu0 %2450
  %v2453 = vperm.slane %v835, 3
  %v2454 = vmul.f32 %v2391, %v2453
  %v2455 = vmul.f32 %v2395, %v2453
  %v2456 = vmul.f32 %v2399, %v2453
  %v2457 = vmul.f32 %v2403, %v2453
  %v2458 = vmul.f32 %v2407, %v2453
  %v2459 = vmul.f32 %v2411, %v2453
  %v2460 = vmul.f32 %v2415, %v2453
  %v2461 = vmul.f32 %v2419, %v2453
  %v2462 = vmul.f32 %v2423, %v2453
  %v2463 = vmul.f32 %v2427, %v2453
  %v2464 = vmul.f32 %v2431, %v2453
  %v2465 = vmul.f32 %v2435, %v2453
  %v2466 = vmul.f32 %v2439, %v2453
  %v2467 = vmul.f32 %v2443, %v2453
  %v2468 = vmul.f32 %v2447, %v2453
  %v2469 = vmul.f32 %v2451, %v2453
  %v2470 = vadd.f32 %v2373, %v2454
  %v2471 = vadd.f32 %v2374, %v2455
  %v2472 = vadd.f32 %v2375, %v2456
  %v2473 = vadd.f32 %v2376, %v2457
  %v2474 = vadd.f32 %v2377, %v2458
  %v2475 = vadd.f32 %v2378, %v2459
  %v2476 = vadd.f32 %v2379, %v2460
  %v2477 = vadd.f32 %v2380, %v2461
  %v2478 = vadd.f32 %v2381, %v2462
  %v2479 = vadd.f32 %v2382, %v2463
  %v2480 = vadd.f32 %v2383, %v2464
  %v2481 = vadd.f32 %v2384, %v2465
  %v2482 = vadd.f32 %v2385, %v2466
  %v2483 = vadd.f32 %v2386, %v2467
  %v2484 = vadd.f32 %v2387, %v2468
  %v2485 = vadd.f32 %v2388, %v2469
  %2486 = vmax.xlane.f32.xlu0 %v2470
  %v2487 = vpop.xlane.xlu0 %2486
  %2488 = vmax.xlane.f32.xlu0 %v2471
  %v2489 = vpop.xlane.xlu0 %2488
  %2490 = vmax.xlane.f32.xlu0 %v2472
  %v2491 = vpop.xlane.xlu0 %2490
  %2492 = vmax.xlane.f32.xlu0 %v2473
  %v2493 = vpop.xlane.xlu0 %2492
  %2494 = vmax.xlane.f32.xlu0 %v2474
  %v2495 = vpop.xlane.xlu0 %2494
  %2496 = vmax.xlane.f32.xlu0 %v2475
  %v2497 = vpop.xlane.xlu0 %2496
  %2498 = vmax.xlane.f32.xlu0 %v2476
  %v2499 = vpop.xlane.xlu0 %2498
  %2500 = vmax.xlane.f32.xlu0 %v2477
  %v2501 = vpop.xlane.xlu0 %2500
  %2502 = vmax.xlane.f32.xlu0 %v2478
  %v2503 = vpop.xlane.xlu0 %2502
  %2504 = vmax.xlane.f32.xlu0 %v2479
  %v2505 = vpop.xlane.xlu0 %2504
  %2506 = vmax.xlane.f32.xlu0 %v2480
  %v2507 = vpop.xlane.xlu0 %2506
  %2508 = vmax.xlane.f32.xlu0 %v2481
  %v2509 = vpop.xlane.xlu0 %2508
  %2510 = vmax.xlane.f32.xlu0 %v2482
  %v2511 = vpop.xlane.xlu0 %2510
  %2512 = vmax.xlane.f32.xlu0 %v2483
  %v2513 = vpop.xlane.xlu0 %2512
  %2514 = vmax.xlane.f32.xlu0 %v2484
  %v2515 = vpop.xlane.xlu0 %2514
  %2516 = vmax.xlane.f32.xlu0 %v2485
  %v2517 = vpop.xlane.xlu0 %2516
  %v2518 = vsub.f32 %v2470, %v2487
  %v2519 = vsub.f32 %v2471, %v2489
  %v2520 = vsub.f32 %v2472, %v2491
  %v2521 = vsub.f32 %v2473, %v2493
  %v2522 = vsub.f32 %v2474, %v2495
  %v2523 = vsub.f32 %v2475, %v2497
  %v2524 = vsub.f32 %v2476, %v2499
  %v2525 = vsub.f32 %v2477, %v2501
  %v2526 = vsub.f32 %v2478, %v2503
  %v2527 = vsub.f32 %v2479, %v2505
  %v2528 = vsub.f32 %v2480, %v2507
  %v2529 = vsub.f32 %v2481, %v2509
  %v2530 = vsub.f32 %v2482, %v2511
  %v2531 = vsub.f32 %v2483, %v2513
  %v2532 = vsub.f32 %v2484, %v2515
  %v2533 = vsub.f32 %v2485, %v2517
  %v2534 = vmul.f32 %v2518, 1.442695
  %v2535 = vpow.pop %v2534
  %v2536 = vmul.f32 %v2519, 1.442695
  %v2537 = vpow.pop %v2536
  %v2538 = vmul.f32 %v2520, 1.442695
  %v2539 = vpow.pop %v2538
  %v2540 = vmul.f32 %v2521, 1.442695
  %v2541 = vpow.pop %v2540
  %v2542 = vmul.f32 %v2522, 1.442695
  %v2543 = vpow.pop %v2542
  %v2544 = vmul.f32 %v2523, 1.442695
  %v2545 = vpow.pop %v2544
  %v2546 = vmul.f32 %v2524, 1.442695
  %v2547 = vpow.pop %v2546
  %v2548 = vmul.f32 %v2525, 1.442695
  %v2549 = vpow.pop %v2548
  %v2550 = vmul.f32 %v2526, 1.442695
  %v2551 = vpow.pop %v2550
  %v2552 = vmul.f32 %v2527, 1.442695
  %v2553 = vpow.pop %v2552
  %v2554 = vmul.f32 %v2528, 1.442695
  %v2555 = vpow.pop %v2554
  %v2556 = vmul.f32 %v2529, 1.442695
  %v2557 = vpow.pop %v2556
  %v2558 = vmul.f32 %v2530, 1.442695
  %v2559 = vpow.pop %v2558
  %v2560 = vmul.f32 %v2531, 1.442695
  %v2561 = vpow.pop %v2560
  %v2562 = vmul.f32 %v2532, 1.442695
  %v2563 = vpow.pop %v2562
  %v2564 = vmul.f32 %v2533, 1.442695
  %v2565 = vpow.pop %v2564
  %2566 = vadd.xlane.f32.xlu0 %v2535
  %v2567 = vpop.xlane.xlu0 %2566
  %2568 = vadd.xlane.f32.xlu0 %v2537
  %v2569 = vpop.xlane.xlu0 %2568
  %2570 = vadd.xlane.f32.xlu0 %v2539
  %v2571 = vpop.xlane.xlu0 %2570
  %2572 = vadd.xlane.f32.xlu0 %v2541
  %v2573 = vpop.xlane.xlu0 %2572
  %2574 = vadd.xlane.f32.xlu0 %v2543
  %v2575 = vpop.xlane.xlu0 %2574
  %2576 = vadd.xlane.f32.xlu0 %v2545
  %v2577 = vpop.xlane.xlu0 %2576
  %2578 = vadd.xlane.f32.xlu0 %v2547
  %v2579 = vpop.xlane.xlu0 %2578
  %2580 = vadd.xlane.f32.xlu0 %v2549
  %v2581 = vpop.xlane.xlu0 %2580
  %2582 = vadd.xlane.f32.xlu0 %v2551
  %v2583 = vpop.xlane.xlu0 %2582
  %2584 = vadd.xlane.f32.xlu0 %v2553
  %v2585 = vpop.xlane.xlu0 %2584
  %2586 = vadd.xlane.f32.xlu0 %v2555
  %v2587 = vpop.xlane.xlu0 %2586
  %2588 = vadd.xlane.f32.xlu0 %v2557
  %v2589 = vpop.xlane.xlu0 %2588
  %2590 = vadd.xlane.f32.xlu0 %v2559
  %v2591 = vpop.xlane.xlu0 %2590
  %2592 = vadd.xlane.f32.xlu0 %v2561
  %v2593 = vpop.xlane.xlu0 %2592
  %2594 = vadd.xlane.f32.xlu0 %v2563
  %v2595 = vpop.xlane.xlu0 %2594
  %2596 = vadd.xlane.f32.xlu0 %v2565
  %v2597 = vpop.xlane.xlu0 %2596
  %v2598 = vrcp.pop %v2567
  %v2599 = vrcp.pop %v2569
  %v2600 = vrcp.pop %v2571
  %v2601 = vrcp.pop %v2573
  %v2602 = vrcp.pop %v2575
  %v2603 = vrcp.pop %v2577
  %v2604 = vrcp.pop %v2579
  %v2605 = vrcp.pop %v2581
  %v2606 = vrcp.pop %v2583
  %v2607 = vrcp.pop %v2585
  %v2608 = vrcp.pop %v2587
  %v2609 = vrcp.pop %v2589
  %v2610 = vrcp.pop %v2591
  %v2611 = vrcp.pop %v2593
  %v2612 = vrcp.pop %v2595
  %v2613 = vrcp.pop %v2597
  %v2614 = vmul.f32 %v2535, %v2598
  %v2615 = vmul.f32 %v2537, %v2599
  %v2616 = vmul.f32 %v2539, %v2600
  %v2617 = vmul.f32 %v2541, %v2601
  %v2618 = vmul.f32 %v2543, %v2602
  %v2619 = vmul.f32 %v2545, %v2603
  %v2620 = vmul.f32 %v2547, %v2604
  %v2621 = vmul.f32 %v2549, %v2605
  %v2622 = vmul.f32 %v2551, %v2606
  %v2623 = vmul.f32 %v2553, %v2607
  %v2624 = vmul.f32 %v2555, %v2608
  %v2625 = vmul.f32 %v2557, %v2609
  %v2626 = vmul.f32 %v2559, %v2610
  %v2627 = vmul.f32 %v2561, %v2611
  %v2628 = vmul.f32 %v2563, %v2612
  %v2629 = vmul.f32 %v2565, %v2613
  %v2630 = vperm.slane %v875, 3
  %v2631 = vmul.f32 %v2614, %v2630
  %v2632 = vmul.f32 %v2615, %v2630
  %v2633 = vmul.f32 %v2616, %v2630
  %v2634 = vmul.f32 %v2617, %v2630
  %v2635 = vmul.f32 %v2618, %v2630
  %v2636 = vmul.f32 %v2619, %v2630
  %v2637 = vmul.f32 %v2620, %v2630
  %v2638 = vmul.f32 %v2621, %v2630
  %v2639 = vmul.f32 %v2622, %v2630
  %v2640 = vmul.f32 %v2623, %v2630
  %v2641 = vmul.f32 %v2624, %v2630
  %v2642 = vmul.f32 %v2625, %v2630
  %v2643 = vmul.f32 %v2626, %v2630
  %v2644 = vmul.f32 %v2627, %v2630
  %v2645 = vmul.f32 %v2628, %v2630
  %v2646 = vmul.f32 %v2629, %v2630
  %2647 = vadd.xlane.f32.xlu0 %v2631
  %v2648 = vpop.xlane.xlu0 %2647
  %2649 = vadd.xlane.f32.xlu0 %v2632
  %v2650 = vpop.xlane.xlu0 %2649
  %2651 = vadd.xlane.f32.xlu0 %v2633
  %v2652 = vpop.xlane.xlu0 %2651
  %2653 = vadd.xlane.f32.xlu0 %v2634
  %v2654 = vpop.xlane.xlu0 %2653
  %2655 = vadd.xlane.f32.xlu0 %v2635
  %v2656 = vpop.xlane.xlu0 %2655
  %2657 = vadd.xlane.f32.xlu0 %v2636
  %v2658 = vpop.xlane.xlu0 %2657
  %2659 = vadd.xlane.f32.xlu0 %v2637
  %v2660 = vpop.xlane.xlu0 %2659
  %2661 = vadd.xlane.f32.xlu0 %v2638
  %v2662 = vpop.xlane.xlu0 %2661
  %2663 = vadd.xlane.f32.xlu0 %v2639
  %v2664 = vpop.xlane.xlu0 %2663
  %2665 = vadd.xlane.f32.xlu0 %v2640
  %v2666 = vpop.xlane.xlu0 %2665
  %2667 = vadd.xlane.f32.xlu0 %v2641
  %v2668 = vpop.xlane.xlu0 %2667
  %2669 = vadd.xlane.f32.xlu0 %v2642
  %v2670 = vpop.xlane.xlu0 %2669
  %2671 = vadd.xlane.f32.xlu0 %v2643
  %v2672 = vpop.xlane.xlu0 %2671
  %2673 = vadd.xlane.f32.xlu0 %v2644
  %v2674 = vpop.xlane.xlu0 %2673
  %2675 = vadd.xlane.f32.xlu0 %v2645
  %v2676 = vpop.xlane.xlu0 %2675
  %2677 = vadd.xlane.f32.xlu0 %v2646
  %v2678 = vpop.xlane.xlu0 %2677
  %vm2679 = vcmask 31768
  %2680 = vst.msk [vmem:[#allocation2] sm:$0xff] %vm2679, %v2648
  %2681 = vst.msk [vmem:[#allocation2 + $0x8] sm:$0xff] %vm2679, %v2650
  %2682 = vst.msk [vmem:[#allocation2 + $0x10] sm:$0xff] %vm2679, %v2652
  %2683 = vst.msk [vmem:[#allocation2 + $0x18] sm:$0xff] %vm2679, %v2654
  %2684 = vst.msk [vmem:[#allocation2 + $0x20] sm:$0xff] %vm2679, %v2656
  %2685 = vst.msk [vmem:[#allocation2 + $0x28] sm:$0xff] %vm2679, %v2658
  %2686 = vst.msk [vmem:[#allocation2 + $0x30] sm:$0xff] %vm2679, %v2660
  %2687 = vst.msk [vmem:[#allocation2 + $0x38] sm:$0xff] %vm2679, %v2662
  %2688 = vst.msk [vmem:[#allocation2 + $0x40] sm:$0xff] %vm2679, %v2664
  %2689 = vst.msk [vmem:[#allocation2 + $0x48] sm:$0xff] %vm2679, %v2666
  %2690 = vst.msk [vmem:[#allocation2 + $0x50] sm:$0xff] %vm2679, %v2668
  %2691 = vst.msk [vmem:[#allocation2 + $0x58] sm:$0xff] %vm2679, %v2670
  %2692 = vst.msk [vmem:[#allocation2 + $0x60] sm:$0xff] %vm2679, %v2672
  %2693 = vst.msk [vmem:[#allocation2 + $0x68] sm:$0xff] %vm2679, %v2674
  %2694 = vst.msk [vmem:[#allocation2 + $0x70] sm:$0xff] %vm2679, %v2676
  %2695 = vst.msk [vmem:[#allocation2 + $0x78] sm:$0xff] %vm2679, %v2678
  %v2696 = vperm.slane %v915, 3
  %v2697 = vmul.f32 %v2614, %v2696
  %v2698 = vmul.f32 %v2615, %v2696
  %v2699 = vmul.f32 %v2616, %v2696
  %v2700 = vmul.f32 %v2617, %v2696
  %v2701 = vmul.f32 %v2618, %v2696
  %v2702 = vmul.f32 %v2619, %v2696
  %v2703 = vmul.f32 %v2620, %v2696
  %v2704 = vmul.f32 %v2621, %v2696
  %v2705 = vmul.f32 %v2622, %v2696
  %v2706 = vmul.f32 %v2623, %v2696
  %v2707 = vmul.f32 %v2624, %v2696
  %v2708 = vmul.f32 %v2625, %v2696
  %v2709 = vmul.f32 %v2626, %v2696
  %v2710 = vmul.f32 %v2627, %v2696
  %v2711 = vmul.f32 %v2628, %v2696
  %v2712 = vmul.f32 %v2629, %v2696
  %2713 = vadd.xlane.f32.xlu0 %v2697
  %v2714 = vpop.xlane.xlu0 %2713
  %2715 = vadd.xlane.f32.xlu0 %v2698
  %v2716 = vpop.xlane.xlu0 %2715
  %2717 = vadd.xlane.f32.xlu0 %v2699
  %v2718 = vpop.xlane.xlu0 %2717
  %2719 = vadd.xlane.f32.xlu0 %v2700
  %v2720 = vpop.xlane.xlu0 %2719
  %2721 = vadd.xlane.f32.xlu0 %v2701
  %v2722 = vpop.xlane.xlu0 %2721
  %2723 = vadd.xlane.f32.xlu0 %v2702
  %v2724 = vpop.xlane.xlu0 %2723
  %2725 = vadd.xlane.f32.xlu0 %v2703
  %v2726 = vpop.xlane.xlu0 %2725
  %2727 = vadd.xlane.f32.xlu0 %v2704
  %v2728 = vpop.xlane.xlu0 %2727
  %2729 = vadd.xlane.f32.xlu0 %v2705
  %v2730 = vpop.xlane.xlu0 %2729
  %2731 = vadd.xlane.f32.xlu0 %v2706
  %v2732 = vpop.xlane.xlu0 %2731
  %2733 = vadd.xlane.f32.xlu0 %v2707
  %v2734 = vpop.xlane.xlu0 %2733
  %2735 = vadd.xlane.f32.xlu0 %v2708
  %v2736 = vpop.xlane.xlu0 %2735
  %2737 = vadd.xlane.f32.xlu0 %v2709
  %v2738 = vpop.xlane.xlu0 %2737
  %2739 = vadd.xlane.f32.xlu0 %v2710
  %v2740 = vpop.xlane.xlu0 %2739
  %2741 = vadd.xlane.f32.xlu0 %v2711
  %v2742 = vpop.xlane.xlu0 %2741
  %2743 = vadd.xlane.f32.xlu0 %v2712
  %v2744 = vpop.xlane.xlu0 %2743
  %2745 = vst.msk [vmem:[#allocation2 + $0x80] sm:$0xff] %vm2679, %v2714
  %2746 = vst.msk [vmem:[#allocation2 + $0x88] sm:$0xff] %vm2679, %v2716
  %2747 = vst.msk [vmem:[#allocation2 + $0x90] sm:$0xff] %vm2679, %v2718
  %2748 = vst.msk [vmem:[#allocation2 + $0x98] sm:$0xff] %vm2679, %v2720
  %2749 = vst.msk [vmem:[#allocation2 + $0xa0] sm:$0xff] %vm2679, %v2722
  %2750 = vst.msk [vmem:[#allocation2 + $0xa8] sm:$0xff] %vm2679, %v2724
  %2751 = vst.msk [vmem:[#allocation2 + $0xb0] sm:$0xff] %vm2679, %v2726
  %2752 = vst.msk [vmem:[#allocation2 + $0xb8] sm:$0xff] %vm2679, %v2728
  %2753 = vst.msk [vmem:[#allocation2 + $0xc0] sm:$0xff] %vm2679, %v2730
  %2754 = vst.msk [vmem:[#allocation2 + $0xc8] sm:$0xff] %vm2679, %v2732
  %2755 = vst.msk [vmem:[#allocation2 + $0xd0] sm:$0xff] %vm2679, %v2734
  %2756 = vst.msk [vmem:[#allocation2 + $0xd8] sm:$0xff] %vm2679, %v2736
  %2757 = vst.msk [vmem:[#allocation2 + $0xe0] sm:$0xff] %vm2679, %v2738
  %2758 = vst.msk [vmem:[#allocation2 + $0xe8] sm:$0xff] %vm2679, %v2740
  %2759 = vst.msk [vmem:[#allocation2 + $0xf0] sm:$0xff] %vm2679, %v2742
  %2760 = vst.msk [vmem:[#allocation2 + $0xf8] sm:$0xff] %vm2679, %v2744
  %v2761 = vld [vmem:[%s6] sm:$0xff]
  %v2762 = vld [vmem:[%s6 + $0x8] sm:$0xff]
  %v2763 = vld [vmem:[%s6 + $0x10] sm:$0xff]
  %v2764 = vld [vmem:[%s6 + $0x18] sm:$0xff]
  %v2765 = vld [vmem:[%s6 + $0x20] sm:$0xff]
  %v2766 = vld [vmem:[%s6 + $0x28] sm:$0xff]
  %v2767 = vld [vmem:[%s6 + $0x30] sm:$0xff]
  %v2768 = vld [vmem:[%s6 + $0x38] sm:$0xff]
  %v2769 = vld [vmem:[%s6 + $0x40] sm:$0xff]
  %v2770 = vld [vmem:[%s6 + $0x48] sm:$0xff]
  %v2771 = vld [vmem:[%s6 + $0x50] sm:$0xff]
  %v2772 = vld [vmem:[%s6 + $0x58] sm:$0xff]
  %v2773 = vld [vmem:[%s6 + $0x60] sm:$0xff]
  %v2774 = vld [vmem:[%s6 + $0x68] sm:$0xff]
  %v2775 = vld [vmem:[%s6 + $0x70] sm:$0xff]
  %v2776 = vld [vmem:[%s6 + $0x78] sm:$0xff]
  %v2777 = vld [vmem:[%s6 + $0x80] sm:$0xff]
  %v2778 = vld [vmem:[%s6 + $0x88] sm:$0xff]
  %v2779 = vld [vmem:[%s6 + $0x90] sm:$0xff]
  %v2780 = vld [vmem:[%s6 + $0x98] sm:$0xff]
  %v2781 = vld [vmem:[%s6 + $0xa0] sm:$0xff]
  %v2782 = vld [vmem:[%s6 + $0xa8] sm:$0xff]
  %v2783 = vld [vmem:[%s6 + $0xb0] sm:$0xff]
  %v2784 = vld [vmem:[%s6 + $0xb8] sm:$0xff]
  %v2785 = vld [vmem:[%s6 + $0xc0] sm:$0xff]
  %v2786 = vld [vmem:[%s6 + $0xc8] sm:$0xff]
  %v2787 = vld [vmem:[%s6 + $0xd0] sm:$0xff]
  %v2788 = vld [vmem:[%s6 + $0xd8] sm:$0xff]
  %v2789 = vld [vmem:[%s6 + $0xe0] sm:$0xff]
  %v2790 = vld [vmem:[%s6 + $0xe8] sm:$0xff]
  %v2791 = vld [vmem:[%s6 + $0xf0] sm:$0xff]
  %v2792 = vld [vmem:[%s6 + $0xf8] sm:$0xff]
  %v2793 = vld [vmem:[%s6 + $0x100] sm:$0xff]
  %v2794 = vld [vmem:[%s6 + $0x108] sm:$0xff]
  %v2795 = vld [vmem:[%s6 + $0x110] sm:$0xff]
  %v2796 = vld [vmem:[%s6 + $0x118] sm:$0xff]
  %v2797 = vld [vmem:[%s6 + $0x120] sm:$0xff]
  %v2798 = vld [vmem:[%s6 + $0x128] sm:$0xff]
  %v2799 = vld [vmem:[%s6 + $0x130] sm:$0xff]
  %v2800 = vld [vmem:[%s6 + $0x138] sm:$0xff]
  %v2801 = vld [vmem:[%s6 + $0x140] sm:$0xff]
  %v2802 = vld [vmem:[%s6 + $0x148] sm:$0xff]
  %v2803 = vld [vmem:[%s6 + $0x150] sm:$0xff]
  %v2804 = vld [vmem:[%s6 + $0x158] sm:$0xff]
  %v2805 = vld [vmem:[%s6 + $0x160] sm:$0xff]
  %v2806 = vld [vmem:[%s6 + $0x168] sm:$0xff]
  %v2807 = vld [vmem:[%s6 + $0x170] sm:$0xff]
  %v2808 = vld [vmem:[%s6 + $0x178] sm:$0xff]
  %v2809 = vld [vmem:[%s6 + $0x180] sm:$0xff]
  %v2810 = vld [vmem:[%s6 + $0x188] sm:$0xff]
  %v2811 = vld [vmem:[%s6 + $0x190] sm:$0xff]
  %v2812 = vld [vmem:[%s6 + $0x198] sm:$0xff]
  %v2813 = vld [vmem:[%s6 + $0x1a0] sm:$0xff]
  %v2814 = vld [vmem:[%s6 + $0x1a8] sm:$0xff]
  %v2815 = vld [vmem:[%s6 + $0x1b0] sm:$0xff]
  %v2816 = vld [vmem:[%s6 + $0x1b8] sm:$0xff]
  %v2817 = vld [vmem:[%s6 + $0x1c0] sm:$0xff]
  %v2818 = vld [vmem:[%s6 + $0x1c8] sm:$0xff]
  %v2819 = vld [vmem:[%s6 + $0x1d0] sm:$0xff]
  %v2820 = vld [vmem:[%s6 + $0x1d8] sm:$0xff]
  %v2821 = vld [vmem:[%s6 + $0x1e0] sm:$0xff]
  %v2822 = vld [vmem:[%s6 + $0x1e8] sm:$0xff]
  %v2823 = vld [vmem:[%s6 + $0x1f0] sm:$0xff]
  %v2824 = vld [vmem:[%s6 + $0x1f8] sm:$0xff]
  %v2825 = vld [vmem:[%s6 + $0x200] sm:$0xff]
  %v2826 = vld [vmem:[%s6 + $0x208] sm:$0xff]
  %v2827 = vld [vmem:[%s6 + $0x210] sm:$0xff]
  %v2828 = vld [vmem:[%s6 + $0x218] sm:$0xff]
  %v2829 = vld [vmem:[%s6 + $0x220] sm:$0xff]
  %v2830 = vld [vmem:[%s6 + $0x228] sm:$0xff]
  %v2831 = vld [vmem:[%s6 + $0x230] sm:$0xff]
  %v2832 = vld [vmem:[%s6 + $0x238] sm:$0xff]
  %v2833 = vld [vmem:[%s6 + $0x240] sm:$0xff]
  %v2834 = vld [vmem:[%s6 + $0x248] sm:$0xff]
  %v2835 = vld [vmem:[%s6 + $0x250] sm:$0xff]
  %v2836 = vld [vmem:[%s6 + $0x258] sm:$0xff]
  %v2837 = vld [vmem:[%s6 + $0x260] sm:$0xff]
  %v2838 = vld [vmem:[%s6 + $0x268] sm:$0xff]
  %v2839 = vld [vmem:[%s6 + $0x270] sm:$0xff]
  %v2840 = vld [vmem:[%s6 + $0x278] sm:$0xff]
  %v2841 = vld [vmem:[%s6 + $0x280] sm:$0xff]
  %v2842 = vld [vmem:[%s6 + $0x288] sm:$0xff]
  %v2843 = vld [vmem:[%s6 + $0x290] sm:$0xff]
  %v2844 = vld [vmem:[%s6 + $0x298] sm:$0xff]
  %v2845 = vld [vmem:[%s6 + $0x2a0] sm:$0xff]
  %v2846 = vld [vmem:[%s6 + $0x2a8] sm:$0xff]
  %v2847 = vld [vmem:[%s6 + $0x2b0] sm:$0xff]
  %v2848 = vld [vmem:[%s6 + $0x2b8] sm:$0xff]
  %v2849 = vld [vmem:[%s6 + $0x2c0] sm:$0xff]
  %v2850 = vld [vmem:[%s6 + $0x2c8] sm:$0xff]
  %v2851 = vld [vmem:[%s6 + $0x2d0] sm:$0xff]
  %v2852 = vld [vmem:[%s6 + $0x2d8] sm:$0xff]
  %v2853 = vld [vmem:[%s6 + $0x2e0] sm:$0xff]
  %v2854 = vld [vmem:[%s6 + $0x2e8] sm:$0xff]
  %v2855 = vld [vmem:[%s6 + $0x2f0] sm:$0xff]
  %v2856 = vld [vmem:[%s6 + $0x2f8] sm:$0xff]
  %v2857 = vld [vmem:[%s6 + $0x300] sm:$0xff]
  %v2858 = vld [vmem:[%s6 + $0x308] sm:$0xff]
  %v2859 = vld [vmem:[%s6 + $0x310] sm:$0xff]
  %v2860 = vld [vmem:[%s6 + $0x318] sm:$0xff]
  %v2861 = vld [vmem:[%s6 + $0x320] sm:$0xff]
  %v2862 = vld [vmem:[%s6 + $0x328] sm:$0xff]
  %v2863 = vld [vmem:[%s6 + $0x330] sm:$0xff]
  %v2864 = vld [vmem:[%s6 + $0x338] sm:$0xff]
  %v2865 = vld [vmem:[%s6 + $0x340] sm:$0xff]
  %v2866 = vld [vmem:[%s6 + $0x348] sm:$0xff]
  %v2867 = vld [vmem:[%s6 + $0x350] sm:$0xff]
  %v2868 = vld [vmem:[%s6 + $0x358] sm:$0xff]
  %v2869 = vld [vmem:[%s6 + $0x360] sm:$0xff]
  %v2870 = vld [vmem:[%s6 + $0x368] sm:$0xff]
  %v2871 = vld [vmem:[%s6 + $0x370] sm:$0xff]
  %v2872 = vld [vmem:[%s6 + $0x378] sm:$0xff]
  %v2873 = vld [vmem:[%s6 + $0x380] sm:$0xff]
  %v2874 = vld [vmem:[%s6 + $0x388] sm:$0xff]
  %v2875 = vld [vmem:[%s6 + $0x390] sm:$0xff]
  %v2876 = vld [vmem:[%s6 + $0x398] sm:$0xff]
  %v2877 = vld [vmem:[%s6 + $0x3a0] sm:$0xff]
  %v2878 = vld [vmem:[%s6 + $0x3a8] sm:$0xff]
  %v2879 = vld [vmem:[%s6 + $0x3b0] sm:$0xff]
  %v2880 = vld [vmem:[%s6 + $0x3b8] sm:$0xff]
  %v2881 = vld [vmem:[%s6 + $0x3c0] sm:$0xff]
  %v2882 = vld [vmem:[%s6 + $0x3c8] sm:$0xff]
  %v2883 = vld [vmem:[%s6 + $0x3d0] sm:$0xff]
  %v2884 = vld [vmem:[%s6 + $0x3d8] sm:$0xff]
  %v2885 = vld [vmem:[%s6 + $0x3e0] sm:$0xff]
  %v2886 = vld [vmem:[%s6 + $0x3e8] sm:$0xff]
  %v2887 = vld [vmem:[%s6 + $0x3f0] sm:$0xff]
  %v2888 = vld [vmem:[%s6 + $0x3f8] sm:$0xff]
  %v2889 = vld [vmem:[#allocation2] sm:$0xff]
  %v2890 = vld [vmem:[#allocation2 + $0x8] sm:$0xff]
  %v2891 = vld [vmem:[#allocation2 + $0x10] sm:$0xff]
  %v2892 = vld [vmem:[#allocation2 + $0x18] sm:$0xff]
  %v2893 = vld [vmem:[#allocation2 + $0x20] sm:$0xff]
  %v2894 = vld [vmem:[#allocation2 + $0x28] sm:$0xff]
  %v2895 = vld [vmem:[#allocation2 + $0x30] sm:$0xff]
  %v2896 = vld [vmem:[#allocation2 + $0x38] sm:$0xff]
  %v2897 = vld [vmem:[#allocation2 + $0x40] sm:$0xff]
  %v2898 = vld [vmem:[#allocation2 + $0x48] sm:$0xff]
  %v2899 = vld [vmem:[#allocation2 + $0x50] sm:$0xff]
  %v2900 = vld [vmem:[#allocation2 + $0x58] sm:$0xff]
  %v2901 = vld [vmem:[#allocation2 + $0x60] sm:$0xff]
  %v2902 = vld [vmem:[#allocation2 + $0x68] sm:$0xff]
  %v2903 = vld [vmem:[#allocation2 + $0x70] sm:$0xff]
  %v2904 = vld [vmem:[#allocation2 + $0x78] sm:$0xff]
  %v2905 = vld [vmem:[#allocation2 + $0x80] sm:$0xff]
  %v2906 = vld [vmem:[#allocation2 + $0x88] sm:$0xff]
  %v2907 = vld [vmem:[#allocation2 + $0x90] sm:$0xff]
  %v2908 = vld [vmem:[#allocation2 + $0x98] sm:$0xff]
  %v2909 = vld [vmem:[#allocation2 + $0xa0] sm:$0xff]
  %v2910 = vld [vmem:[#allocation2 + $0xa8] sm:$0xff]
  %v2911 = vld [vmem:[#allocation2 + $0xb0] sm:$0xff]
  %v2912 = vld [vmem:[#allocation2 + $0xb8] sm:$0xff]
  %v2913 = vld [vmem:[#allocation2 + $0xc0] sm:$0xff]
  %v2914 = vld [vmem:[#allocation2 + $0xc8] sm:$0xff]
  %v2915 = vld [vmem:[#allocation2 + $0xd0] sm:$0xff]
  %v2916 = vld [vmem:[#allocation2 + $0xd8] sm:$0xff]
  %v2917 = vld [vmem:[#allocation2 + $0xe0] sm:$0xff]
  %v2918 = vld [vmem:[#allocation2 + $0xe8] sm:$0xff]
  %v2919 = vld [vmem:[#allocation2 + $0xf0] sm:$0xff]
  %v2920 = vld [vmem:[#allocation2 + $0xf8] sm:$0xff]
  %v2921 = vld [vmem:[%s7] sm:$0xff]
  %v2922 = vld [vmem:[%s7 + $0x8] sm:$0xff]
  %v2923 = vld [vmem:[%s7 + $0x10] sm:$0xff]
  %v2924 = vld [vmem:[%s7 + $0x18] sm:$0xff]
  %v2925 = vld [vmem:[%s7 + $0x20] sm:$0xff]
  %v2926 = vld [vmem:[%s7 + $0x28] sm:$0xff]
  %v2927 = vld [vmem:[%s7 + $0x30] sm:$0xff]
  %v2928 = vld [vmem:[%s7 + $0x38] sm:$0xff]
  %v2929 = vld [vmem:[%s7 + $0x40] sm:$0xff]
  %v2930 = vld [vmem:[%s7 + $0x48] sm:$0xff]
  %v2931 = vld [vmem:[%s7 + $0x50] sm:$0xff]
  %v2932 = vld [vmem:[%s7 + $0x58] sm:$0xff]
  %v2933 = vld [vmem:[%s7 + $0x60] sm:$0xff]
  %v2934 = vld [vmem:[%s7 + $0x68] sm:$0xff]
  %v2935 = vld [vmem:[%s7 + $0x70] sm:$0xff]
  %v2936 = vld [vmem:[%s7 + $0x78] sm:$0xff]
  %v2937 = vld [vmem:[%s7 + $0x80] sm:$0xff]
  %v2938 = vld [vmem:[%s7 + $0x88] sm:$0xff]
  %v2939 = vld [vmem:[%s7 + $0x90] sm:$0xff]
  %v2940 = vld [vmem:[%s7 + $0x98] sm:$0xff]
  %v2941 = vld [vmem:[%s7 + $0xa0] sm:$0xff]
  %v2942 = vld [vmem:[%s7 + $0xa8] sm:$0xff]
  %v2943 = vld [vmem:[%s7 + $0xb0] sm:$0xff]
  %v2944 = vld [vmem:[%s7 + $0xb8] sm:$0xff]
  %v2945 = vld [vmem:[%s7 + $0xc0] sm:$0xff]
  %v2946 = vld [vmem:[%s7 + $0xc8] sm:$0xff]
  %v2947 = vld [vmem:[%s7 + $0xd0] sm:$0xff]
  %v2948 = vld [vmem:[%s7 + $0xd8] sm:$0xff]
  %v2949 = vld [vmem:[%s7 + $0xe0] sm:$0xff]
  %v2950 = vld [vmem:[%s7 + $0xe8] sm:$0xff]
  %v2951 = vld [vmem:[%s7 + $0xf0] sm:$0xff]
  %v2952 = vld [vmem:[%s7 + $0xf8] sm:$0xff]
  %v2953 = vld [vmem:[%s7 + $0x100] sm:$0xff]
  %v2954 = vld [vmem:[%s7 + $0x108] sm:$0xff]
  %v2955 = vld [vmem:[%s7 + $0x110] sm:$0xff]
  %v2956 = vld [vmem:[%s7 + $0x118] sm:$0xff]
  %v2957 = vld [vmem:[%s7 + $0x120] sm:$0xff]
  %v2958 = vld [vmem:[%s7 + $0x128] sm:$0xff]
  %v2959 = vld [vmem:[%s7 + $0x130] sm:$0xff]
  %v2960 = vld [vmem:[%s7 + $0x138] sm:$0xff]
  %v2961 = vld [vmem:[%s7 + $0x140] sm:$0xff]
  %v2962 = vld [vmem:[%s7 + $0x148] sm:$0xff]
  %v2963 = vld [vmem:[%s7 + $0x150] sm:$0xff]
  %v2964 = vld [vmem:[%s7 + $0x158] sm:$0xff]
  %v2965 = vld [vmem:[%s7 + $0x160] sm:$0xff]
  %v2966 = vld [vmem:[%s7 + $0x168] sm:$0xff]
  %v2967 = vld [vmem:[%s7 + $0x170] sm:$0xff]
  %v2968 = vld [vmem:[%s7 + $0x178] sm:$0xff]
  %v2969 = vld [vmem:[%s7 + $0x180] sm:$0xff]
  %v2970 = vld [vmem:[%s7 + $0x188] sm:$0xff]
  %v2971 = vld [vmem:[%s7 + $0x190] sm:$0xff]
  %v2972 = vld [vmem:[%s7 + $0x198] sm:$0xff]
  %v2973 = vld [vmem:[%s7 + $0x1a0] sm:$0xff]
  %v2974 = vld [vmem:[%s7 + $0x1a8] sm:$0xff]
  %v2975 = vld [vmem:[%s7 + $0x1b0] sm:$0xff]
  %v2976 = vld [vmem:[%s7 + $0x1b8] sm:$0xff]
  %v2977 = vld [vmem:[%s7 + $0x1c0] sm:$0xff]
  %v2978 = vld [vmem:[%s7 + $0x1c8] sm:$0xff]
  %v2979 = vld [vmem:[%s7 + $0x1d0] sm:$0xff]
  %v2980 = vld [vmem:[%s7 + $0x1d8] sm:$0xff]
  %v2981 = vld [vmem:[%s7 + $0x1e0] sm:$0xff]
  %v2982 = vld [vmem:[%s7 + $0x1e8] sm:$0xff]
  %v2983 = vld [vmem:[%s7 + $0x1f0] sm:$0xff]
  %v2984 = vld [vmem:[%s7 + $0x1f8] sm:$0xff]
  %2986 = vset.pattern.permute.xlu0 0
  %2987 = vperm.xlu0 %2986, %v2921
  %v2988 = vpop.permute.xlu0 %2987
  %2991 = vset.pattern.permute.xlu0 0
  %2992 = vperm.xlu0 %2991, %v2922
  %v2993 = vpop.permute.xlu0 %2992
  %2996 = vset.pattern.permute.xlu0 0
  %2997 = vperm.xlu0 %2996, %v2923
  %v2998 = vpop.permute.xlu0 %2997
  %3001 = vset.pattern.permute.xlu0 0
  %3002 = vperm.xlu0 %3001, %v2924
  %v3003 = vpop.permute.xlu0 %3002
  %3006 = vset.pattern.permute.xlu0 0
  %3007 = vperm.xlu0 %3006, %v2925
  %v3008 = vpop.permute.xlu0 %3007
  %3011 = vset.pattern.permute.xlu0 0
  %3012 = vperm.xlu0 %3011, %v2926
  %v3013 = vpop.permute.xlu0 %3012
  %3016 = vset.pattern.permute.xlu0 0
  %3017 = vperm.xlu0 %3016, %v2927
  %v3018 = vpop.permute.xlu0 %3017
  %3021 = vset.pattern.permute.xlu0 0
  %3022 = vperm.xlu0 %3021, %v2928
  %v3023 = vpop.permute.xlu0 %3022
  %3026 = vset.pattern.permute.xlu0 0
  %3027 = vperm.xlu0 %3026, %v2929
  %v3028 = vpop.permute.xlu0 %3027
  %3031 = vset.pattern.permute.xlu0 0
  %3032 = vperm.xlu0 %3031, %v2930
  %v3033 = vpop.permute.xlu0 %3032
  %3036 = vset.pattern.permute.xlu0 0
  %3037 = vperm.xlu0 %3036, %v2931
  %v3038 = vpop.permute.xlu0 %3037
  %3041 = vset.pattern.permute.xlu0 0
  %3042 = vperm.xlu0 %3041, %v2932
  %v3043 = vpop.permute.xlu0 %3042
  %3046 = vset.pattern.permute.xlu0 0
  %3047 = vperm.xlu0 %3046, %v2933
  %v3048 = vpop.permute.xlu0 %3047
  %3051 = vset.pattern.permute.xlu0 0
  %3052 = vperm.xlu0 %3051, %v2934
  %v3053 = vpop.permute.xlu0 %3052
  %3056 = vset.pattern.permute.xlu0 0
  %3057 = vperm.xlu0 %3056, %v2935
  %v3058 = vpop.permute.xlu0 %3057
  %3061 = vset.pattern.permute.xlu0 0
  %3062 = vperm.xlu0 %3061, %v2936
  %v3063 = vpop.permute.xlu0 %3062
  %3066 = vset.pattern.permute.xlu0 0
  %3067 = vperm.xlu0 %3066, %v2937
  %v3068 = vpop.permute.xlu0 %3067
  %3071 = vset.pattern.permute.xlu0 0
  %3072 = vperm.xlu0 %3071, %v2938
  %v3073 = vpop.permute.xlu0 %3072
  %3076 = vset.pattern.permute.xlu0 0
  %3077 = vperm.xlu0 %3076, %v2939
  %v3078 = vpop.permute.xlu0 %3077
  %3081 = vset.pattern.permute.xlu0 0
  %3082 = vperm.xlu0 %3081, %v2940
  %v3083 = vpop.permute.xlu0 %3082
  %3086 = vset.pattern.permute.xlu0 0
  %3087 = vperm.xlu0 %3086, %v2941
  %v3088 = vpop.permute.xlu0 %3087
  %3091 = vset.pattern.permute.xlu0 0
  %3092 = vperm.xlu0 %3091, %v2942
  %v3093 = vpop.permute.xlu0 %3092
  %3096 = vset.pattern.permute.xlu0 0
  %3097 = vperm.xlu0 %3096, %v2943
  %v3098 = vpop.permute.xlu0 %3097
  %3101 = vset.pattern.permute.xlu0 0
  %3102 = vperm.xlu0 %3101, %v2944
  %v3103 = vpop.permute.xlu0 %3102
  %3106 = vset.pattern.permute.xlu0 0
  %3107 = vperm.xlu0 %3106, %v2945
  %v3108 = vpop.permute.xlu0 %3107
  %3111 = vset.pattern.permute.xlu0 0
  %3112 = vperm.xlu0 %3111, %v2946
  %v3113 = vpop.permute.xlu0 %3112
  %3116 = vset.pattern.permute.xlu0 0
  %3117 = vperm.xlu0 %3116, %v2947
  %v3118 = vpop.permute.xlu0 %3117
  %3121 = vset.pattern.permute.xlu0 0
  %3122 = vperm.xlu0 %3121, %v2948
  %v3123 = vpop.permute.xlu0 %3122
  %3126 = vset.pattern.permute.xlu0 0
  %3127 = vperm.xlu0 %3126, %v2949
  %v3128 = vpop.permute.xlu0 %3127
  %3131 = vset.pattern.permute.xlu0 0
  %3132 = vperm.xlu0 %3131, %v2950
  %v3133 = vpop.permute.xlu0 %3132
  %3136 = vset.pattern.permute.xlu0 0
  %3137 = vperm.xlu0 %3136, %v2951
  %v3138 = vpop.permute.xlu0 %3137
  %3141 = vset.pattern.permute.xlu0 0
  %3142 = vperm.xlu0 %3141, %v2952
  %v3143 = vpop.permute.xlu0 %3142
  %3146 = vset.pattern.permute.xlu0 0
  %3147 = vperm.xlu0 %3146, %v2953
  %v3148 = vpop.permute.xlu0 %3147
  %3151 = vset.pattern.permute.xlu0 0
  %3152 = vperm.xlu0 %3151, %v2954
  %v3153 = vpop.permute.xlu0 %3152
  %3156 = vset.pattern.permute.xlu0 0
  %3157 = vperm.xlu0 %3156, %v2955
  %v3158 = vpop.permute.xlu0 %3157
  %3161 = vset.pattern.permute.xlu0 0
  %3162 = vperm.xlu0 %3161, %v2956
  %v3163 = vpop.permute.xlu0 %3162
  %3166 = vset.pattern.permute.xlu0 0
  %3167 = vperm.xlu0 %3166, %v2957
  %v3168 = vpop.permute.xlu0 %3167
  %3171 = vset.pattern.permute.xlu0 0
  %3172 = vperm.xlu0 %3171, %v2958
  %v3173 = vpop.permute.xlu0 %3172
  %3176 = vset.pattern.permute.xlu0 0
  %3177 = vperm.xlu0 %3176, %v2959
  %v3178 = vpop.permute.xlu0 %3177
  %3181 = vset.pattern.permute.xlu0 0
  %3182 = vperm.xlu0 %3181, %v2960
  %v3183 = vpop.permute.xlu0 %3182
  %3186 = vset.pattern.permute.xlu0 0
  %3187 = vperm.xlu0 %3186, %v2961
  %v3188 = vpop.permute.xlu0 %3187
  %3191 = vset.pattern.permute.xlu0 0
  %3192 = vperm.xlu0 %3191, %v2962
  %v3193 = vpop.permute.xlu0 %3192
  %3196 = vset.pattern.permute.xlu0 0
  %3197 = vperm.xlu0 %3196, %v2963
  %v3198 = vpop.permute.xlu0 %3197
  %3201 = vset.pattern.permute.xlu0 0
  %3202 = vperm.xlu0 %3201, %v2964
  %v3203 = vpop.permute.xlu0 %3202
  %3206 = vset.pattern.permute.xlu0 0
  %3207 = vperm.xlu0 %3206, %v2965
  %v3208 = vpop.permute.xlu0 %3207
  %3211 = vset.pattern.permute.xlu0 0
  %3212 = vperm.xlu0 %3211, %v2966
  %v3213 = vpop.permute.xlu0 %3212
  %3216 = vset.pattern.permute.xlu0 0
  %3217 = vperm.xlu0 %3216, %v2967
  %v3218 = vpop.permute.xlu0 %3217
  %3221 = vset.pattern.permute.xlu0 0
  %3222 = vperm.xlu0 %3221, %v2968
  %v3223 = vpop.permute.xlu0 %3222
  %3226 = vset.pattern.permute.xlu0 0
  %3227 = vperm.xlu0 %3226, %v2969
  %v3228 = vpop.permute.xlu0 %3227
  %3231 = vset.pattern.permute.xlu0 0
  %3232 = vperm.xlu0 %3231, %v2970
  %v3233 = vpop.permute.xlu0 %3232
  %3236 = vset.pattern.permute.xlu0 0
  %3237 = vperm.xlu0 %3236, %v2971
  %v3238 = vpop.permute.xlu0 %3237
  %3241 = vset.pattern.permute.xlu0 0
  %3242 = vperm.xlu0 %3241, %v2972
  %v3243 = vpop.permute.xlu0 %3242
  %3246 = vset.pattern.permute.xlu0 0
  %3247 = vperm.xlu0 %3246, %v2973
  %v3248 = vpop.permute.xlu0 %3247
  %3251 = vset.pattern.permute.xlu0 0
  %3252 = vperm.xlu0 %3251, %v2974
  %v3253 = vpop.permute.xlu0 %3252
  %3256 = vset.pattern.permute.xlu0 0
  %3257 = vperm.xlu0 %3256, %v2975
  %v3258 = vpop.permute.xlu0 %3257
  %3261 = vset.pattern.permute.xlu0 0
  %3262 = vperm.xlu0 %3261, %v2976
  %v3263 = vpop.permute.xlu0 %3262
  %3266 = vset.pattern.permute.xlu0 0
  %3267 = vperm.xlu0 %3266, %v2977
  %v3268 = vpop.permute.xlu0 %3267
  %3271 = vset.pattern.permute.xlu0 0
  %3272 = vperm.xlu0 %3271, %v2978
  %v3273 = vpop.permute.xlu0 %3272
  %3276 = vset.pattern.permute.xlu0 0
  %3277 = vperm.xlu0 %3276, %v2979
  %v3278 = vpop.permute.xlu0 %3277
  %3281 = vset.pattern.permute.xlu0 0
  %3282 = vperm.xlu0 %3281, %v2980
  %v3283 = vpop.permute.xlu0 %3282
  %3286 = vset.pattern.permute.xlu0 0
  %3287 = vperm.xlu0 %3286, %v2981
  %v3288 = vpop.permute.xlu0 %3287
  %3291 = vset.pattern.permute.xlu0 0
  %3292 = vperm.xlu0 %3291, %v2982
  %v3293 = vpop.permute.xlu0 %3292
  %3296 = vset.pattern.permute.xlu0 0
  %3297 = vperm.xlu0 %3296, %v2983
  %v3298 = vpop.permute.xlu0 %3297
  %3301 = vset.pattern.permute.xlu0 0
  %3302 = vperm.xlu0 %3301, %v2984
  %v3303 = vpop.permute.xlu0 %3302
  %3305 = vmatpush.msra.mxu0 %v2904
  %3306 = vmatpush.msra.mxu0 %v2903
  %3307 = vmatpush.msra.mxu0 %v2902
  %3308 = vmatpush.msra.mxu0 %v2901
  %3309 = vmatpush.msra.mxu0 %v2900
  %3310 = vmatpush.msra.mxu0 %v2899
  %3311 = vmatpush.msra.mxu0 %v2898
  %3312 = vmatpush.msra.mxu0 %v2897
  %3313 = vmatpush.msra.mxu0 %v2896
  %3314 = vmatpush.msra.mxu0 %v2895
  %3315 = vmatpush.msra.mxu0 %v2894
  %3316 = vmatpush.msra.mxu0 %v2893
  %3317 = vmatpush.msra.mxu0 %v2892
  %3318 = vmatpush.msra.mxu0 %v2891
  %3319 = vmatpush.msra.mxu0 %v2890
  %3320 = vmatpush.msra.mxu0 %v2889
  %3321 = vmatmul.f32.gmra.mxu0 %v2761
  %v3322 = vpop.f32.mrf.mxu0
  %v3323 = vadd.f32 %v2988, %v3322
  %3324 = vmatmul.f32.gmra.mxu0 %v2763
  %v3325 = vpop.f32.mrf.mxu0
  %v3326 = vadd.f32 %v2993, %v3325
  %3327 = vmatmul.f32.gmra.mxu0 %v2765
  %v3328 = vpop.f32.mrf.mxu0
  %v3329 = vadd.f32 %v2998, %v3328
  %3330 = vmatmul.f32.gmra.mxu0 %v2767
  %v3331 = vpop.f32.mrf.mxu0
  %v3332 = vadd.f32 %v3003, %v3331
  %3333 = vmatmul.f32.gmra.mxu0 %v2769
  %v3334 = vpop.f32.mrf.mxu0
  %v3335 = vadd.f32 %v3008, %v3334
  %3336 = vmatmul.f32.gmra.mxu0 %v2771
  %v3337 = vpop.f32.mrf.mxu0
  %v3338 = vadd.f32 %v3013, %v3337
  %3339 = vmatmul.f32.gmra.mxu0 %v2773
  %v3340 = vpop.f32.mrf.mxu0
  %v3341 = vadd.f32 %v3018, %v3340
  %3342 = vmatmul.f32.gmra.mxu0 %v2775
  %v3343 = vpop.f32.mrf.mxu0
  %v3344 = vadd.f32 %v3023, %v3343
  %3345 = vmatmul.f32.gmra.mxu0 %v2777
  %v3346 = vpop.f32.mrf.mxu0
  %v3347 = vadd.f32 %v3028, %v3346
  %3348 = vmatmul.f32.gmra.mxu0 %v2779
  %v3349 = vpop.f32.mrf.mxu0
  %v3350 = vadd.f32 %v3033, %v3349
  %3351 = vmatmul.f32.gmra.mxu0 %v2781
  %v3352 = vpop.f32.mrf.mxu0
  %v3353 = vadd.f32 %v3038, %v3352
  %3354 = vmatmul.f32.gmra.mxu0 %v2783
  %v3355 = vpop.f32.mrf.mxu0
  %v3356 = vadd.f32 %v3043, %v3355
  %3357 = vmatmul.f32.gmra.mxu0 %v2785
  %v3358 = vpop.f32.mrf.mxu0
  %v3359 = vadd.f32 %v3048, %v3358
  %3360 = vmatmul.f32.gmra.mxu0 %v2787
  %v3361 = vpop.f32.mrf.mxu0
  %v3362 = vadd.f32 %v3053, %v3361
  %3363 = vmatmul.f32.gmra.mxu0 %v2789
  %v3364 = vpop.f32.mrf.mxu0
  %v3365 = vadd.f32 %v3058, %v3364
  %3366 = vmatmul.f32.gmra.mxu0 %v2791
  %v3367 = vpop.f32.mrf.mxu0
  %v3368 = vadd.f32 %v3063, %v3367
  %3369 = vmatmul.f32.gmra.mxu0 %v2793
  %v3370 = vpop.f32.mrf.mxu0
  %v3371 = vadd.f32 %v3068, %v3370
  %3372 = vmatmul.f32.gmra.mxu0 %v2795
  %v3373 = vpop.f32.mrf.mxu0
  %v3374 = vadd.f32 %v3073, %v3373
  %3375 = vmatmul.f32.gmra.mxu0 %v2797
  %v3376 = vpop.f32.mrf.mxu0
  %v3377 = vadd.f32 %v3078, %v3376
  %3378 = vmatmul.f32.gmra.mxu0 %v2799
  %v3379 = vpop.f32.mrf.mxu0
  %v3380 = vadd.f32 %v3083, %v3379
  %3381 = vmatmul.f32.gmra.mxu0 %v2801
  %v3382 = vpop.f32.mrf.mxu0
  %v3383 = vadd.f32 %v3088, %v3382
  %3384 = vmatmul.f32.gmra.mxu0 %v2803
  %v3385 = vpop.f32.mrf.mxu0
  %v3386 = vadd.f32 %v3093, %v3385
  %3387 = vmatmul.f32.gmra.mxu0 %v2805
  %v3388 = vpop.f32.mrf.mxu0
  %v3389 = vadd.f32 %v3098, %v3388
  %3390 = vmatmul.f32.gmra.mxu0 %v2807
  %v3391 = vpop.f32.mrf.mxu0
  %v3392 = vadd.f32 %v3103, %v3391
  %3393 = vmatmul.f32.gmra.mxu0 %v2809
  %v3394 = vpop.f32.mrf.mxu0
  %v3395 = vadd.f32 %v3108, %v3394
  %3396 = vmatmul.f32.gmra.mxu0 %v2811
  %v3397 = vpop.f32.mrf.mxu0
  %v3398 = vadd.f32 %v3113, %v3397
  %3399 = vmatmul.f32.gmra.mxu0 %v2813
  %v3400 = vpop.f32.mrf.mxu0
  %v3401 = vadd.f32 %v3118, %v3400
  %3402 = vmatmul.f32.gmra.mxu0 %v2815
  %v3403 = vpop.f32.mrf.mxu0
  %v3404 = vadd.f32 %v3123, %v3403
  %3405 = vmatmul.f32.gmra.mxu0 %v2817
  %v3406 = vpop.f32.mrf.mxu0
  %v3407 = vadd.f32 %v3128, %v3406
  %3408 = vmatmul.f32.gmra.mxu0 %v2819
  %v3409 = vpop.f32.mrf.mxu0
  %v3410 = vadd.f32 %v3133, %v3409
  %3411 = vmatmul.f32.gmra.mxu0 %v2821
  %v3412 = vpop.f32.mrf.mxu0
  %v3413 = vadd.f32 %v3138, %v3412
  %3414 = vmatmul.f32.gmra.mxu0 %v2823
  %v3415 = vpop.f32.mrf.mxu0
  %v3416 = vadd.f32 %v3143, %v3415
  %3417 = vmatmul.f32.gmra.mxu0 %v2825
  %v3418 = vpop.f32.mrf.mxu0
  %v3419 = vadd.f32 %v3148, %v3418
  %3420 = vmatmul.f32.gmra.mxu0 %v2827
  %v3421 = vpop.f32.mrf.mxu0
  %v3422 = vadd.f32 %v3153, %v3421
  %3423 = vmatmul.f32.gmra.mxu0 %v2829
  %v3424 = vpop.f32.mrf.mxu0
  %v3425 = vadd.f32 %v3158, %v3424
  %3426 = vmatmul.f32.gmra.mxu0 %v2831
  %v3427 = vpop.f32.mrf.mxu0
  %v3428 = vadd.f32 %v3163, %v3427
  %3429 = vmatmul.f32.gmra.mxu0 %v2833
  %v3430 = vpop.f32.mrf.mxu0
  %v3431 = vadd.f32 %v3168, %v3430
  %3432 = vmatmul.f32.gmra.mxu0 %v2835
  %v3433 = vpop.f32.mrf.mxu0
  %v3434 = vadd.f32 %v3173, %v3433
  %3435 = vmatmul.f32.gmra.mxu0 %v2837
  %v3436 = vpop.f32.mrf.mxu0
  %v3437 = vadd.f32 %v3178, %v3436
  %3438 = vmatmul.f32.gmra.mxu0 %v2839
  %v3439 = vpop.f32.mrf.mxu0
  %v3440 = vadd.f32 %v3183, %v3439
  %3441 = vmatmul.f32.gmra.mxu0 %v2841
  %v3442 = vpop.f32.mrf.mxu0
  %v3443 = vadd.f32 %v3188, %v3442
  %3444 = vmatmul.f32.gmra.mxu0 %v2843
  %v3445 = vpop.f32.mrf.mxu0
  %v3446 = vadd.f32 %v3193, %v3445
  %3447 = vmatmul.f32.gmra.mxu0 %v2845
  %v3448 = vpop.f32.mrf.mxu0
  %v3449 = vadd.f32 %v3198, %v3448
  %3450 = vmatmul.f32.gmra.mxu0 %v2847
  %v3451 = vpop.f32.mrf.mxu0
  %v3452 = vadd.f32 %v3203, %v3451
  %3453 = vmatmul.f32.gmra.mxu0 %v2849
  %v3454 = vpop.f32.mrf.mxu0
  %v3455 = vadd.f32 %v3208, %v3454
  %3456 = vmatmul.f32.gmra.mxu0 %v2851
  %v3457 = vpop.f32.mrf.mxu0
  %v3458 = vadd.f32 %v3213, %v3457
  %3459 = vmatmul.f32.gmra.mxu0 %v2853
  %v3460 = vpop.f32.mrf.mxu0
  %v3461 = vadd.f32 %v3218, %v3460
  %3462 = vmatmul.f32.gmra.mxu0 %v2855
  %v3463 = vpop.f32.mrf.mxu0
  %v3464 = vadd.f32 %v3223, %v3463
  %3465 = vmatmul.f32.gmra.mxu0 %v2857
  %v3466 = vpop.f32.mrf.mxu0
  %v3467 = vadd.f32 %v3228, %v3466
  %3468 = vmatmul.f32.gmra.mxu0 %v2859
  %v3469 = vpop.f32.mrf.mxu0
  %v3470 = vadd.f32 %v3233, %v3469
  %3471 = vmatmul.f32.gmra.mxu0 %v2861
  %v3472 = vpop.f32.mrf.mxu0
  %v3473 = vadd.f32 %v3238, %v3472
  %3474 = vmatmul.f32.gmra.mxu0 %v2863
  %v3475 = vpop.f32.mrf.mxu0
  %v3476 = vadd.f32 %v3243, %v3475
  %3477 = vmatmul.f32.gmra.mxu0 %v2865
  %v3478 = vpop.f32.mrf.mxu0
  %v3479 = vadd.f32 %v3248, %v3478
  %3480 = vmatmul.f32.gmra.mxu0 %v2867
  %v3481 = vpop.f32.mrf.mxu0
  %v3482 = vadd.f32 %v3253, %v3481
  %3483 = vmatmul.f32.gmra.mxu0 %v2869
  %v3484 = vpop.f32.mrf.mxu0
  %v3485 = vadd.f32 %v3258, %v3484
  %3486 = vmatmul.f32.gmra.mxu0 %v2871
  %v3487 = vpop.f32.mrf.mxu0
  %v3488 = vadd.f32 %v3263, %v3487
  %3489 = vmatmul.f32.gmra.mxu0 %v2873
  %v3490 = vpop.f32.mrf.mxu0
  %v3491 = vadd.f32 %v3268, %v3490
  %3492 = vmatmul.f32.gmra.mxu0 %v2875
  %v3493 = vpop.f32.mrf.mxu0
  %v3494 = vadd.f32 %v3273, %v3493
  %3495 = vmatmul.f32.gmra.mxu0 %v2877
  %v3496 = vpop.f32.mrf.mxu0
  %v3497 = vadd.f32 %v3278, %v3496
  %3498 = vmatmul.f32.gmra.mxu0 %v2879
  %v3499 = vpop.f32.mrf.mxu0
  %v3500 = vadd.f32 %v3283, %v3499
  %3501 = vmatmul.f32.gmra.mxu0 %v2881
  %v3502 = vpop.f32.mrf.mxu0
  %v3503 = vadd.f32 %v3288, %v3502
  %3504 = vmatmul.f32.gmra.mxu0 %v2883
  %v3505 = vpop.f32.mrf.mxu0
  %v3506 = vadd.f32 %v3293, %v3505
  %3507 = vmatmul.f32.gmra.mxu0 %v2885
  %v3508 = vpop.f32.mrf.mxu0
  %v3509 = vadd.f32 %v3298, %v3508
  %3510 = vmatmul.f32.gmra.mxu0 %v2887
  %v3511 = vpop.f32.mrf.mxu0
  %v3512 = vadd.f32 %v3303, %v3511
  %3513 = vdwg.mxu0
  %3514 = vmatpush.msra.mxu0 %v2920
  %3515 = vmatpush.msra.mxu0 %v2919
  %3516 = vmatpush.msra.mxu0 %v2918
  %3517 = vmatpush.msra.mxu0 %v2917
  %3518 = vmatpush.msra.mxu0 %v2916
  %3519 = vmatpush.msra.mxu0 %v2915
  %3520 = vmatpush.msra.mxu0 %v2914
  %3521 = vmatpush.msra.mxu0 %v2913
  %3522 = vmatpush.msra.mxu0 %v2912
  %3523 = vmatpush.msra.mxu0 %v2911
  %3524 = vmatpush.msra.mxu0 %v2910
  %3525 = vmatpush.msra.mxu0 %v2909
  %3526 = vmatpush.msra.mxu0 %v2908
  %3527 = vmatpush.msra.mxu0 %v2907
  %3528 = vmatpush.msra.mxu0 %v2906
  %3529 = vmatpush.msra.mxu0 %v2905
  %3530 = vmatmul.f32.gmra.mxu0 %v2762
  %v3531 = vpop.f32.mrf.mxu0
  %v3532 = vadd.f32 %v3323, %v3531
  %3533 = vmatmul.f32.gmra.mxu0 %v2764
  %v3534 = vpop.f32.mrf.mxu0
  %v3535 = vadd.f32 %v3326, %v3534
  %3536 = vmatmul.f32.gmra.mxu0 %v2766
  %v3537 = vpop.f32.mrf.mxu0
  %v3538 = vadd.f32 %v3329, %v3537
  %3539 = vmatmul.f32.gmra.mxu0 %v2768
  %v3540 = vpop.f32.mrf.mxu0
  %v3541 = vadd.f32 %v3332, %v3540
  %3542 = vmatmul.f32.gmra.mxu0 %v2770
  %v3543 = vpop.f32.mrf.mxu0
  %v3544 = vadd.f32 %v3335, %v3543
  %3545 = vmatmul.f32.gmra.mxu0 %v2772
  %v3546 = vpop.f32.mrf.mxu0
  %v3547 = vadd.f32 %v3338, %v3546
  %3548 = vmatmul.f32.gmra.mxu0 %v2774
  %v3549 = vpop.f32.mrf.mxu0
  %v3550 = vadd.f32 %v3341, %v3549
  %3551 = vmatmul.f32.gmra.mxu0 %v2776
  %v3552 = vpop.f32.mrf.mxu0
  %v3553 = vadd.f32 %v3344, %v3552
  %3554 = vmatmul.f32.gmra.mxu0 %v2778
  %v3555 = vpop.f32.mrf.mxu0
  %v3556 = vadd.f32 %v3347, %v3555
  %3557 = vmatmul.f32.gmra.mxu0 %v2780
  %v3558 = vpop.f32.mrf.mxu0
  %v3559 = vadd.f32 %v3350, %v3558
  %3560 = vmatmul.f32.gmra.mxu0 %v2782
  %v3561 = vpop.f32.mrf.mxu0
  %v3562 = vadd.f32 %v3353, %v3561
  %3563 = vmatmul.f32.gmra.mxu0 %v2784
  %v3564 = vpop.f32.mrf.mxu0
  %v3565 = vadd.f32 %v3356, %v3564
  %3566 = vmatmul.f32.gmra.mxu0 %v2786
  %v3567 = vpop.f32.mrf.mxu0
  %v3568 = vadd.f32 %v3359, %v3567
  %3569 = vmatmul.f32.gmra.mxu0 %v2788
  %v3570 = vpop.f32.mrf.mxu0
  %v3571 = vadd.f32 %v3362, %v3570
  %3572 = vmatmul.f32.gmra.mxu0 %v2790
  %v3573 = vpop.f32.mrf.mxu0
  %v3574 = vadd.f32 %v3365, %v3573
  %3575 = vmatmul.f32.gmra.mxu0 %v2792
  %v3576 = vpop.f32.mrf.mxu0
  %v3577 = vadd.f32 %v3368, %v3576
  %3578 = vmatmul.f32.gmra.mxu0 %v2794
  %v3579 = vpop.f32.mrf.mxu0
  %v3580 = vadd.f32 %v3371, %v3579
  %3581 = vmatmul.f32.gmra.mxu0 %v2796
  %v3582 = vpop.f32.mrf.mxu0
  %v3583 = vadd.f32 %v3374, %v3582
  %3584 = vmatmul.f32.gmra.mxu0 %v2798
  %v3585 = vpop.f32.mrf.mxu0
  %v3586 = vadd.f32 %v3377, %v3585
  %3587 = vmatmul.f32.gmra.mxu0 %v2800
  %v3588 = vpop.f32.mrf.mxu0
  %v3589 = vadd.f32 %v3380, %v3588
  %3590 = vmatmul.f32.gmra.mxu0 %v2802
  %v3591 = vpop.f32.mrf.mxu0
  %v3592 = vadd.f32 %v3383, %v3591
  %3593 = vmatmul.f32.gmra.mxu0 %v2804
  %v3594 = vpop.f32.mrf.mxu0
  %v3595 = vadd.f32 %v3386, %v3594
  %3596 = vmatmul.f32.gmra.mxu0 %v2806
  %v3597 = vpop.f32.mrf.mxu0
  %v3598 = vadd.f32 %v3389, %v3597
  %3599 = vmatmul.f32.gmra.mxu0 %v2808
  %v3600 = vpop.f32.mrf.mxu0
  %v3601 = vadd.f32 %v3392, %v3600
  %3602 = vmatmul.f32.gmra.mxu0 %v2810
  %v3603 = vpop.f32.mrf.mxu0
  %v3604 = vadd.f32 %v3395, %v3603
  %3605 = vmatmul.f32.gmra.mxu0 %v2812
  %v3606 = vpop.f32.mrf.mxu0
  %v3607 = vadd.f32 %v3398, %v3606
  %3608 = vmatmul.f32.gmra.mxu0 %v2814
  %v3609 = vpop.f32.mrf.mxu0
  %v3610 = vadd.f32 %v3401, %v3609
  %3611 = vmatmul.f32.gmra.mxu0 %v2816
  %v3612 = vpop.f32.mrf.mxu0
  %v3613 = vadd.f32 %v3404, %v3612
  %3614 = vmatmul.f32.gmra.mxu0 %v2818
  %v3615 = vpop.f32.mrf.mxu0
  %v3616 = vadd.f32 %v3407, %v3615
  %3617 = vmatmul.f32.gmra.mxu0 %v2820
  %v3618 = vpop.f32.mrf.mxu0
  %v3619 = vadd.f32 %v3410, %v3618
  %3620 = vmatmul.f32.gmra.mxu0 %v2822
  %v3621 = vpop.f32.mrf.mxu0
  %v3622 = vadd.f32 %v3413, %v3621
  %3623 = vmatmul.f32.gmra.mxu0 %v2824
  %v3624 = vpop.f32.mrf.mxu0
  %v3625 = vadd.f32 %v3416, %v3624
  %3626 = vmatmul.f32.gmra.mxu0 %v2826
  %v3627 = vpop.f32.mrf.mxu0
  %v3628 = vadd.f32 %v3419, %v3627
  %3629 = vmatmul.f32.gmra.mxu0 %v2828
  %v3630 = vpop.f32.mrf.mxu0
  %v3631 = vadd.f32 %v3422, %v3630
  %3632 = vmatmul.f32.gmra.mxu0 %v2830
  %v3633 = vpop.f32.mrf.mxu0
  %v3634 = vadd.f32 %v3425, %v3633
  %3635 = vmatmul.f32.gmra.mxu0 %v2832
  %v3636 = vpop.f32.mrf.mxu0
  %v3637 = vadd.f32 %v3428, %v3636
  %3638 = vmatmul.f32.gmra.mxu0 %v2834
  %v3639 = vpop.f32.mrf.mxu0
  %v3640 = vadd.f32 %v3431, %v3639
  %3641 = vmatmul.f32.gmra.mxu0 %v2836
  %v3642 = vpop.f32.mrf.mxu0
  %v3643 = vadd.f32 %v3434, %v3642
  %3644 = vmatmul.f32.gmra.mxu0 %v2838
  %v3645 = vpop.f32.mrf.mxu0
  %v3646 = vadd.f32 %v3437, %v3645
  %3647 = vmatmul.f32.gmra.mxu0 %v2840
  %v3648 = vpop.f32.mrf.mxu0
  %v3649 = vadd.f32 %v3440, %v3648
  %3650 = vmatmul.f32.gmra.mxu0 %v2842
  %v3651 = vpop.f32.mrf.mxu0
  %v3652 = vadd.f32 %v3443, %v3651
  %3653 = vmatmul.f32.gmra.mxu0 %v2844
  %v3654 = vpop.f32.mrf.mxu0
  %v3655 = vadd.f32 %v3446, %v3654
  %3656 = vmatmul.f32.gmra.mxu0 %v2846
  %v3657 = vpop.f32.mrf.mxu0
  %v3658 = vadd.f32 %v3449, %v3657
  %3659 = vmatmul.f32.gmra.mxu0 %v2848
  %v3660 = vpop.f32.mrf.mxu0
  %v3661 = vadd.f32 %v3452, %v3660
  %3662 = vmatmul.f32.gmra.mxu0 %v2850
  %v3663 = vpop.f32.mrf.mxu0
  %v3664 = vadd.f32 %v3455, %v3663
  %3665 = vmatmul.f32.gmra.mxu0 %v2852
  %v3666 = vpop.f32.mrf.mxu0
  %v3667 = vadd.f32 %v3458, %v3666
  %3668 = vmatmul.f32.gmra.mxu0 %v2854
  %v3669 = vpop.f32.mrf.mxu0
  %v3670 = vadd.f32 %v3461, %v3669
  %3671 = vmatmul.f32.gmra.mxu0 %v2856
  %v3672 = vpop.f32.mrf.mxu0
  %v3673 = vadd.f32 %v3464, %v3672
  %3674 = vmatmul.f32.gmra.mxu0 %v2858
  %v3675 = vpop.f32.mrf.mxu0
  %v3676 = vadd.f32 %v3467, %v3675
  %3677 = vmatmul.f32.gmra.mxu0 %v2860
  %v3678 = vpop.f32.mrf.mxu0
  %v3679 = vadd.f32 %v3470, %v3678
  %3680 = vmatmul.f32.gmra.mxu0 %v2862
  %v3681 = vpop.f32.mrf.mxu0
  %v3682 = vadd.f32 %v3473, %v3681
  %3683 = vmatmul.f32.gmra.mxu0 %v2864
  %v3684 = vpop.f32.mrf.mxu0
  %v3685 = vadd.f32 %v3476, %v3684
  %3686 = vmatmul.f32.gmra.mxu0 %v2866
  %v3687 = vpop.f32.mrf.mxu0
  %v3688 = vadd.f32 %v3479, %v3687
  %3689 = vmatmul.f32.gmra.mxu0 %v2868
  %v3690 = vpop.f32.mrf.mxu0
  %v3691 = vadd.f32 %v3482, %v3690
  %3692 = vmatmul.f32.gmra.mxu0 %v2870
  %v3693 = vpop.f32.mrf.mxu0
  %v3694 = vadd.f32 %v3485, %v3693
  %3695 = vmatmul.f32.gmra.mxu0 %v2872
  %v3696 = vpop.f32.mrf.mxu0
  %v3697 = vadd.f32 %v3488, %v3696
  %3698 = vmatmul.f32.gmra.mxu0 %v2874
  %v3699 = vpop.f32.mrf.mxu0
  %v3700 = vadd.f32 %v3491, %v3699
  %3701 = vmatmul.f32.gmra.mxu0 %v2876
  %v3702 = vpop.f32.mrf.mxu0
  %v3703 = vadd.f32 %v3494, %v3702
  %3704 = vmatmul.f32.gmra.mxu0 %v2878
  %v3705 = vpop.f32.mrf.mxu0
  %v3706 = vadd.f32 %v3497, %v3705
  %3707 = vmatmul.f32.gmra.mxu0 %v2880
  %v3708 = vpop.f32.mrf.mxu0
  %v3709 = vadd.f32 %v3500, %v3708
  %3710 = vmatmul.f32.gmra.mxu0 %v2882
  %v3711 = vpop.f32.mrf.mxu0
  %v3712 = vadd.f32 %v3503, %v3711
  %3713 = vmatmul.f32.gmra.mxu0 %v2884
  %v3714 = vpop.f32.mrf.mxu0
  %v3715 = vadd.f32 %v3506, %v3714
  %3716 = vmatmul.f32.gmra.mxu0 %v2886
  %v3717 = vpop.f32.mrf.mxu0
  %v3718 = vadd.f32 %v3509, %v3717
  %3719 = vmatmul.f32.gmra.mxu0 %v2888
  %v3720 = vpop.f32.mrf.mxu0
  %v3721 = vadd.f32 %v3512, %v3720
  %3722 = vdwg.mxu0
  %vm3723 = vcmp.gt.f32.partialorder %v3532, 0.0
  %vm3724 = vcmp.gt.f32.partialorder %v3535, 0.0
  %vm3725 = vcmp.gt.f32.partialorder %v3538, 0.0
  %vm3726 = vcmp.gt.f32.partialorder %v3541, 0.0
  %vm3727 = vcmp.gt.f32.partialorder %v3544, 0.0
  %vm3728 = vcmp.gt.f32.partialorder %v3547, 0.0
  %vm3729 = vcmp.gt.f32.partialorder %v3550, 0.0
  %vm3730 = vcmp.gt.f32.partialorder %v3553, 0.0
  %vm3731 = vcmp.gt.f32.partialorder %v3556, 0.0
  %vm3732 = vcmp.gt.f32.partialorder %v3559, 0.0
  %vm3733 = vcmp.gt.f32.partialorder %v3562, 0.0
  %vm3734 = vcmp.gt.f32.partialorder %v3565, 0.0
  %vm3735 = vcmp.gt.f32.partialorder %v3568, 0.0
  %vm3736 = vcmp.gt.f32.partialorder %v3571, 0.0
  %vm3737 = vcmp.gt.f32.partialorder %v3574, 0.0
  %vm3738 = vcmp.gt.f32.partialorder %v3577, 0.0
  %vm3739 = vcmp.gt.f32.partialorder %v3580, 0.0
  %vm3740 = vcmp.gt.f32.partialorder %v3583, 0.0
  %vm3741 = vcmp.gt.f32.partialorder %v3586, 0.0
  %vm3742 = vcmp.gt.f32.partialorder %v3589, 0.0
  %vm3743 = vcmp.gt.f32.partialorder %v3592, 0.0
  %vm3744 = vcmp.gt.f32.partialorder %v3595, 0.0
  %vm3745 = vcmp.gt.f32.partialorder %v3598, 0.0
  %vm3746 = vcmp.gt.f32.partialorder %v3601, 0.0
  %vm3747 = vcmp.gt.f32.partialorder %v3604, 0.0
  %vm3748 = vcmp.gt.f32.partialorder %v3607, 0.0
  %vm3749 = vcmp.gt.f32.partialorder %v3610, 0.0
  %vm3750 = vcmp.gt.f32.partialorder %v3613, 0.0
  %vm3751 = vcmp.gt.f32.partialorder %v3616, 0.0
  %vm3752 = vcmp.gt.f32.partialorder %v3619, 0.0
  %vm3753 = vcmp.gt.f32.partialorder %v3622, 0.0
  %vm3754 = vcmp.gt.f32.partialorder %v3625, 0.0
  %vm3755 = vcmp.gt.f32.partialorder %v3628, 0.0
  %vm3756 = vcmp.gt.f32.partialorder %v3631, 0.0
  %vm3757 = vcmp.gt.f32.partialorder %v3634, 0.0
  %vm3758 = vcmp.gt.f32.partialorder %v3637, 0.0
  %vm3759 = vcmp.gt.f32.partialorder %v3640, 0.0
  %vm3760 = vcmp.gt.f32.partialorder %v3643, 0.0
  %vm3761 = vcmp.gt.f32.partialorder %v3646, 0.0
  %vm3762 = vcmp.gt.f32.partialorder %v3649, 0.0
  %vm3763 = vcmp.gt.f32.partialorder %v3652, 0.0
  %vm3764 = vcmp.gt.f32.partialorder %v3655, 0.0
  %vm3765 = vcmp.gt.f32.partialorder %v3658, 0.0
  %vm3766 = vcmp.gt.f32.partialorder %v3661, 0.0
  %vm3767 = vcmp.gt.f32.partialorder %v3664, 0.0
  %vm3768 = vcmp.gt.f32.partialorder %v3667, 0.0
  %vm3769 = vcmp.gt.f32.partialorder %v3670, 0.0
  %vm3770 = vcmp.gt.f32.partialorder %v3673, 0.0
  %vm3771 = vcmp.gt.f32.partialorder %v3676, 0.0
  %vm3772 = vcmp.gt.f32.partialorder %v3679, 0.0
  %vm3773 = vcmp.gt.f32.partialorder %v3682, 0.0
  %vm3774 = vcmp.gt.f32.partialorder %v3685, 0.0
  %vm3775 = vcmp.gt.f32.partialorder %v3688, 0.0
  %vm3776 = vcmp.gt.f32.partialorder %v3691, 0.0
  %vm3777 = vcmp.gt.f32.partialorder %v3694, 0.0
  %vm3778 = vcmp.gt.f32.partialorder %v3697, 0.0
  %vm3779 = vcmp.gt.f32.partialorder %v3700, 0.0
  %vm3780 = vcmp.gt.f32.partialorder %v3703, 0.0
  %vm3781 = vcmp.gt.f32.partialorder %v3706, 0.0
  %vm3782 = vcmp.gt.f32.partialorder %v3709, 0.0
  %vm3783 = vcmp.gt.f32.partialorder %v3712, 0.0
  %vm3784 = vcmp.gt.f32.partialorder %v3715, 0.0
  %vm3785 = vcmp.gt.f32.partialorder %v3718, 0.0
  %vm3786 = vcmp.gt.f32.partialorder %v3721, 0.0
  %v3787 = vmin.f32 %v3532, 0.0
  %v3788 = vmin.f32 %v3535, 0.0
  %v3789 = vmin.f32 %v3538, 0.0
  %v3790 = vmin.f32 %v3541, 0.0
  %v3791 = vmin.f32 %v3544, 0.0
  %v3792 = vmin.f32 %v3547, 0.0
  %v3793 = vmin.f32 %v3550, 0.0
  %v3794 = vmin.f32 %v3553, 0.0
  %v3795 = vmin.f32 %v3556, 0.0
  %v3796 = vmin.f32 %v3559, 0.0
  %v3797 = vmin.f32 %v3562, 0.0
  %v3798 = vmin.f32 %v3565, 0.0
  %v3799 = vmin.f32 %v3568, 0.0
  %v3800 = vmin.f32 %v3571, 0.0
  %v3801 = vmin.f32 %v3574, 0.0
  %v3802 = vmin.f32 %v3577, 0.0
  %v3803 = vmin.f32 %v3580, 0.0
  %v3804 = vmin.f32 %v3583, 0.0
  %v3805 = vmin.f32 %v3586, 0.0
  %v3806 = vmin.f32 %v3589, 0.0
  %v3807 = vmin.f32 %v3592, 0.0
  %v3808 = vmin.f32 %v3595, 0.0
  %v3809 = vmin.f32 %v3598, 0.0
  %v3810 = vmin.f32 %v3601, 0.0
  %v3811 = vmin.f32 %v3604, 0.0
  %v3812 = vmin.f32 %v3607, 0.0
  %v3813 = vmin.f32 %v3610, 0.0
  %v3814 = vmin.f32 %v3613, 0.0
  %v3815 = vmin.f32 %v3616, 0.0
  %v3816 = vmin.f32 %v3619, 0.0
  %v3817 = vmin.f32 %v3622, 0.0
  %v3818 = vmin.f32 %v3625, 0.0
  %v3819 = vmin.f32 %v3628, 0.0
  %v3820 = vmin.f32 %v3631, 0.0
  %v3821 = vmin.f32 %v3634, 0.0
  %v3822 = vmin.f32 %v3637, 0.0
  %v3823 = vmin.f32 %v3640, 0.0
  %v3824 = vmin.f32 %v3643, 0.0
  %v3825 = vmin.f32 %v3646, 0.0
  %v3826 = vmin.f32 %v3649, 0.0
  %v3827 = vmin.f32 %v3652, 0.0
  %v3828 = vmin.f32 %v3655, 0.0
  %v3829 = vmin.f32 %v3658, 0.0
  %v3830 = vmin.f32 %v3661, 0.0
  %v3831 = vmin.f32 %v3664, 0.0
  %v3832 = vmin.f32 %v3667, 0.0
  %v3833 = vmin.f32 %v3670, 0.0
  %v3834 = vmin.f32 %v3673, 0.0
  %v3835 = vmin.f32 %v3676, 0.0
  %v3836 = vmin.f32 %v3679, 0.0
  %v3837 = vmin.f32 %v3682, 0.0
  %v3838 = vmin.f32 %v3685, 0.0
  %v3839 = vmin.f32 %v3688, 0.0
  %v3840 = vmin.f32 %v3691, 0.0
  %v3841 = vmin.f32 %v3694, 0.0
  %v3842 = vmin.f32 %v3697, 0.0
  %v3843 = vmin.f32 %v3700, 0.0
  %v3844 = vmin.f32 %v3703, 0.0
  %v3845 = vmin.f32 %v3706, 0.0
  %v3846 = vmin.f32 %v3709, 0.0
  %v3847 = vmin.f32 %v3712, 0.0
  %v3848 = vmin.f32 %v3715, 0.0
  %v3849 = vmin.f32 %v3718, 0.0
  %v3850 = vmin.f32 %v3721, 0.0
  %v3851 = vmul.f32 %v3787, 1.442695
  %v3852 = vpow.pop %v3851
  %v3853 = vmul.f32 %v3788, 1.442695
  %v3854 = vpow.pop %v3853
  %v3855 = vmul.f32 %v3789, 1.442695
  %v3856 = vpow.pop %v3855
  %v3857 = vmul.f32 %v3790, 1.442695
  %v3858 = vpow.pop %v3857
  %v3859 = vmul.f32 %v3791, 1.442695
  %v3860 = vpow.pop %v3859
  %v3861 = vmul.f32 %v3792, 1.442695
  %v3862 = vpow.pop %v3861
  %v3863 = vmul.f32 %v3793, 1.442695
  %v3864 = vpow.pop %v3863
  %v3865 = vmul.f32 %v3794, 1.442695
  %v3866 = vpow.pop %v3865
  %v3867 = vmul.f32 %v3795, 1.442695
  %v3868 = vpow.pop %v3867
  %v3869 = vmul.f32 %v3796, 1.442695
  %v3870 = vpow.pop %v3869
  %v3871 = vmul.f32 %v3797, 1.442695
  %v3872 = vpow.pop %v3871
  %v3873 = vmul.f32 %v3798, 1.442695
  %v3874 = vpow.pop %v3873
  %v3875 = vmul.f32 %v3799, 1.442695
  %v3876 = vpow.pop %v3875
  %v3877 = vmul.f32 %v3800, 1.442695
  %v3878 = vpow.pop %v3877
  %v3879 = vmul.f32 %v3801, 1.442695
  %v3880 = vpow.pop %v3879
  %v3881 = vmul.f32 %v3802, 1.442695
  %v3882 = vpow.pop %v3881
  %v3883 = vmul.f32 %v3803, 1.442695
  %v3884 = vpow.pop %v3883
  %v3885 = vmul.f32 %v3804, 1.442695
  %v3886 = vpow.pop %v3885
  %v3887 = vmul.f32 %v3805, 1.442695
  %v3888 = vpow.pop %v3887
  %v3889 = vmul.f32 %v3806, 1.442695
  %v3890 = vpow.pop %v3889
  %v3891 = vmul.f32 %v3807, 1.442695
  %v3892 = vpow.pop %v3891
  %v3893 = vmul.f32 %v3808, 1.442695
  %v3894 = vpow.pop %v3893
  %v3895 = vmul.f32 %v3809, 1.442695
  %v3896 = vpow.pop %v3895
  %v3897 = vmul.f32 %v3810, 1.442695
  %v3898 = vpow.pop %v3897
  %v3899 = vmul.f32 %v3811, 1.442695
  %v3900 = vpow.pop %v3899
  %v3901 = vmul.f32 %v3812, 1.442695
  %v3902 = vpow.pop %v3901
  %v3903 = vmul.f32 %v3813, 1.442695
  %v3904 = vpow.pop %v3903
  %v3905 = vmul.f32 %v3814, 1.442695
  %v3906 = vpow.pop %v3905
  %v3907 = vmul.f32 %v3815, 1.442695
  %v3908 = vpow.pop %v3907
  %v3909 = vmul.f32 %v3816, 1.442695
  %v3910 = vpow.pop %v3909
  %v3911 = vmul.f32 %v3817, 1.442695
  %v3912 = vpow.pop %v3911
  %v3913 = vmul.f32 %v3818, 1.442695
  %v3914 = vpow.pop %v3913
  %v3915 = vmul.f32 %v3819, 1.442695
  %v3916 = vpow.pop %v3915
  %v3917 = vmul.f32 %v3820, 1.442695
  %v3918 = vpow.pop %v3917
  %v3919 = vmul.f32 %v3821, 1.442695
  %v3920 = vpow.pop %v3919
  %v3921 = vmul.f32 %v3822, 1.442695
  %v3922 = vpow.pop %v3921
  %v3923 = vmul.f32 %v3823, 1.442695
  %v3924 = vpow.pop %v3923
  %v3925 = vmul.f32 %v3824, 1.442695
  %v3926 = vpow.pop %v3925
  %v3927 = vmul.f32 %v3825, 1.442695
  %v3928 = vpow.pop %v3927
  %v3929 = vmul.f32 %v3826, 1.442695
  %v3930 = vpow.pop %v3929
  %v3931 = vmul.f32 %v3827, 1.442695
  %v3932 = vpow.pop %v3931
  %v3933 = vmul.f32 %v3828, 1.442695
  %v3934 = vpow.pop %v3933
  %v3935 = vmul.f32 %v3829, 1.442695
  %v3936 = vpow.pop %v3935
  %v3937 = vmul.f32 %v3830, 1.442695
  %v3938 = vpow.pop %v3937
  %v3939 = vmul.f32 %v3831, 1.442695
  %v3940 = vpow.pop %v3939
  %v3941 = vmul.f32 %v3832, 1.442695
  %v3942 = vpow.pop %v3941
  %v3943 = vmul.f32 %v3833, 1.442695
  %v3944 = vpow.pop %v3943
  %v3945 = vmul.f32 %v3834, 1.442695
  %v3946 = vpow.pop %v3945
  %v3947 = vmul.f32 %v3835, 1.442695
  %v3948 = vpow.pop %v3947
  %v3949 = vmul.f32 %v3836, 1.442695
  %v3950 = vpow.pop %v3949
  %v3951 = vmul.f32 %v3837, 1.442695
  %v3952 = vpow.pop %v3951
  %v3953 = vmul.f32 %v3838, 1.442695
  %v3954 = vpow.pop %v3953
  %v3955 = vmul.f32 %v3839, 1.442695
  %v3956 = vpow.pop %v3955
  %v3957 = vmul.f32 %v3840, 1.442695
  %v3958 = vpow.pop %v3957
  %v3959 = vmul.f32 %v3841, 1.442695
  %v3960 = vpow.pop %v3959
  %v3961 = vmul.f32 %v3842, 1.442695
  %v3962 = vpow.pop %v3961
  %v3963 = vmul.f32 %v3843, 1.442695
  %v3964 = vpow.pop %v3963
  %v3965 = vmul.f32 %v3844, 1.442695
  %v3966 = vpow.pop %v3965
  %v3967 = vmul.f32 %v3845, 1.442695
  %v3968 = vpow.pop %v3967
  %v3969 = vmul.f32 %v3846, 1.442695
  %v3970 = vpow.pop %v3969
  %v3971 = vmul.f32 %v3847, 1.442695
  %v3972 = vpow.pop %v3971
  %v3973 = vmul.f32 %v3848, 1.442695
  %v3974 = vpow.pop %v3973
  %v3975 = vmul.f32 %v3849, 1.442695
  %v3976 = vpow.pop %v3975
  %v3977 = vmul.f32 %v3850, 1.442695
  %v3978 = vpow.pop %v3977
  %v3979 = vsub.f32 %v3852, 1.0
  %v3980 = vsub.f32 %v3854, 1.0
  %v3981 = vsub.f32 %v3856, 1.0
  %v3982 = vsub.f32 %v3858, 1.0
  %v3983 = vsub.f32 %v3860, 1.0
  %v3984 = vsub.f32 %v3862, 1.0
  %v3985 = vsub.f32 %v3864, 1.0
  %v3986 = vsub.f32 %v3866, 1.0
  %v3987 = vsub.f32 %v3868, 1.0
  %v3988 = vsub.f32 %v3870, 1.0
  %v3989 = vsub.f32 %v3872, 1.0
  %v3990 = vsub.f32 %v3874, 1.0
  %v3991 = vsub.f32 %v3876, 1.0
  %v3992 = vsub.f32 %v3878, 1.0
  %v3993 = vsub.f32 %v3880, 1.0
  %v3994 = vsub.f32 %v3882, 1.0
  %v3995 = vsub.f32 %v3884, 1.0
  %v3996 = vsub.f32 %v3886, 1.0
  %v3997 = vsub.f32 %v3888, 1.0
  %v3998 = vsub.f32 %v3890, 1.0
  %v3999 = vsub.f32 %v3892, 1.0
  %v4000 = vsub.f32 %v3894, 1.0
  %v4001 = vsub.f32 %v3896, 1.0
  %v4002 = vsub.f32 %v3898, 1.0
  %v4003 = vsub.f32 %v3900, 1.0
  %v4004 = vsub.f32 %v3902, 1.0
  %v4005 = vsub.f32 %v3904, 1.0
  %v4006 = vsub.f32 %v3906, 1.0
  %v4007 = vsub.f32 %v3908, 1.0
  %v4008 = vsub.f32 %v3910, 1.0
  %v4009 = vsub.f32 %v3912, 1.0
  %v4010 = vsub.f32 %v3914, 1.0
  %v4011 = vsub.f32 %v3916, 1.0
  %v4012 = vsub.f32 %v3918, 1.0
  %v4013 = vsub.f32 %v3920, 1.0
  %v4014 = vsub.f32 %v3922, 1.0
  %v4015 = vsub.f32 %v3924, 1.0
  %v4016 = vsub.f32 %v3926, 1.0
  %v4017 = vsub.f32 %v3928, 1.0
  %v4018 = vsub.f32 %v3930, 1.0
  %v4019 = vsub.f32 %v3932, 1.0
  %v4020 = vsub.f32 %v3934, 1.0
  %v4021 = vsub.f32 %v3936, 1.0
  %v4022 = vsub.f32 %v3938, 1.0
  %v4023 = vsub.f32 %v3940, 1.0
  %v4024 = vsub.f32 %v3942, 1.0
  %v4025 = vsub.f32 %v3944, 1.0
  %v4026 = vsub.f32 %v3946, 1.0
  %v4027 = vsub.f32 %v3948, 1.0
  %v4028 = vsub.f32 %v3950, 1.0
  %v4029 = vsub.f32 %v3952, 1.0
  %v4030 = vsub.f32 %v3954, 1.0
  %v4031 = vsub.f32 %v3956, 1.0
  %v4032 = vsub.f32 %v3958, 1.0
  %v4033 = vsub.f32 %v3960, 1.0
  %v4034 = vsub.f32 %v3962, 1.0
  %v4035 = vsub.f32 %v3964, 1.0
  %v4036 = vsub.f32 %v3966, 1.0
  %v4037 = vsub.f32 %v3968, 1.0
  %v4038 = vsub.f32 %v3970, 1.0
  %v4039 = vsub.f32 %v3972, 1.0
  %v4040 = vsub.f32 %v3974, 1.0
  %v4041 = vsub.f32 %v3976, 1.0
  %v4042 = vsub.f32 %v3978, 1.0
  %v4043 = vsel %vm3723, %v3532, %v3979
  %v4044 = vsel %vm3724, %v3535, %v3980
  %v4045 = vsel %vm3725, %v3538, %v3981
  %v4046 = vsel %vm3726, %v3541, %v3982
  %v4047 = vsel %vm3727, %v3544, %v3983
  %v4048 = vsel %vm3728, %v3547, %v3984
  %v4049 = vsel %vm3729, %v3550, %v3985
  %v4050 = vsel %vm3730, %v3553, %v3986
  %v4051 = vsel %vm3731, %v3556, %v3987
  %v4052 = vsel %vm3732, %v3559, %v3988
  %v4053 = vsel %vm3733, %v3562, %v3989
  %v4054 = vsel %vm3734, %v3565, %v3990
  %v4055 = vsel %vm3735, %v3568, %v3991
  %v4056 = vsel %vm3736, %v3571, %v3992
  %v4057 = vsel %vm3737, %v3574, %v3993
  %v4058 = vsel %vm3738, %v3577, %v3994
  %v4059 = vsel %vm3739, %v3580, %v3995
  %v4060 = vsel %vm3740, %v3583, %v3996
  %v4061 = vsel %vm3741, %v3586, %v3997
  %v4062 = vsel %vm3742, %v3589, %v3998
  %v4063 = vsel %vm3743, %v3592, %v3999
  %v4064 = vsel %vm3744, %v3595, %v4000
  %v4065 = vsel %vm3745, %v3598, %v4001
  %v4066 = vsel %vm3746, %v3601, %v4002
  %v4067 = vsel %vm3747, %v3604, %v4003
  %v4068 = vsel %vm3748, %v3607, %v4004
  %v4069 = vsel %vm3749, %v3610, %v4005
  %v4070 = vsel %vm3750, %v3613, %v4006
  %v4071 = vsel %vm3751, %v3616, %v4007
  %v4072 = vsel %vm3752, %v3619, %v4008
  %v4073 = vsel %vm3753, %v3622, %v4009
  %v4074 = vsel %vm3754, %v3625, %v4010
  %v4075 = vsel %vm3755, %v3628, %v4011
  %v4076 = vsel %vm3756, %v3631, %v4012
  %v4077 = vsel %vm3757, %v3634, %v4013
  %v4078 = vsel %vm3758, %v3637, %v4014
  %v4079 = vsel %vm3759, %v3640, %v4015
  %v4080 = vsel %vm3760, %v3643, %v4016
  %v4081 = vsel %vm3761, %v3646, %v4017
  %v4082 = vsel %vm3762, %v3649, %v4018
  %v4083 = vsel %vm3763, %v3652, %v4019
  %v4084 = vsel %vm3764, %v3655, %v4020
  %v4085 = vsel %vm3765, %v3658, %v4021
  %v4086 = vsel %vm3766, %v3661, %v4022
  %v4087 = vsel %vm3767, %v3664, %v4023
  %v4088 = vsel %vm3768, %v3667, %v4024
  %v4089 = vsel %vm3769, %v3670, %v4025
  %v4090 = vsel %vm3770, %v3673, %v4026
  %v4091 = vsel %vm3771, %v3676, %v4027
  %v4092 = vsel %vm3772, %v3679, %v4028
  %v4093 = vsel %vm3773, %v3682, %v4029
  %v4094 = vsel %vm3774, %v3685, %v4030
  %v4095 = vsel %vm3775, %v3688, %v4031
  %v4096 = vsel %vm3776, %v3691, %v4032
  %v4097 = vsel %vm3777, %v3694, %v4033
  %v4098 = vsel %vm3778, %v3697, %v4034
  %v4099 = vsel %vm3779, %v3700, %v4035
  %v4100 = vsel %vm3780, %v3703, %v4036
  %v4101 = vsel %vm3781, %v3706, %v4037
  %v4102 = vsel %vm3782, %v3709, %v4038
  %v4103 = vsel %vm3783, %v3712, %v4039
  %v4104 = vsel %vm3784, %v3715, %v4040
  %v4105 = vsel %vm3785, %v3718, %v4041
  %v4106 = vsel %vm3786, %v3721, %v4042
  %v4107 = vld [vmem:[%s8] sm:$0xff]
  %v4108 = vld [vmem:[%s8 + $0x8] sm:$0xff]
  %v4109 = vld [vmem:[%s8 + $0x10] sm:$0xff]
  %v4110 = vld [vmem:[%s8 + $0x18] sm:$0xff]
  %v4111 = vld [vmem:[%s9] sm:$0xff]
  %4113 = vset.pattern.permute.xlu0 0
  %4114 = vperm.xlu0 %4113, %v4111
  %v4115 = vpop.permute.xlu0 %4114
  %4117 = vmatpush.msra.mxu0 %v4058
  %4118 = vmatpush.msra.mxu0 %v4057
  %4119 = vmatpush.msra.mxu0 %v4056
  %4120 = vmatpush.msra.mxu0 %v4055
  %4121 = vmatpush.msra.mxu0 %v4054
  %4122 = vmatpush.msra.mxu0 %v4053
  %4123 = vmatpush.msra.mxu0 %v4052
  %4124 = vmatpush.msra.mxu0 %v4051
  %4125 = vmatpush.msra.mxu0 %v4050
  %4126 = vmatpush.msra.mxu0 %v4049
  %4127 = vmatpush.msra.mxu0 %v4048
  %4128 = vmatpush.msra.mxu0 %v4047
  %4129 = vmatpush.msra.mxu0 %v4046
  %4130 = vmatpush.msra.mxu0 %v4045
  %4131 = vmatpush.msra.mxu0 %v4044
  %4132 = vmatpush.msra.mxu0 %v4043
  %4133 = vmatmul.f32.gmra.mxu0 %v4107
  %v4134 = vpop.f32.mrf.mxu0
  %v4135 = vadd.f32 %v4115, %v4134
  %4136 = vdwg.mxu0
  %4137 = vmatpush.msra.mxu0 %v4074
  %4138 = vmatpush.msra.mxu0 %v4073
  %4139 = vmatpush.msra.mxu0 %v4072
  %4140 = vmatpush.msra.mxu0 %v4071
  %4141 = vmatpush.msra.mxu0 %v4070
  %4142 = vmatpush.msra.mxu0 %v4069
  %4143 = vmatpush.msra.mxu0 %v4068
  %4144 = vmatpush.msra.mxu0 %v4067
  %4145 = vmatpush.msra.mxu0 %v4066
  %4146 = vmatpush.msra.mxu0 %v4065
  %4147 = vmatpush.msra.mxu0 %v4064
  %4148 = vmatpush.msra.mxu0 %v4063
  %4149 = vmatpush.msra.mxu0 %v4062
  %4150 = vmatpush.msra.mxu0 %v4061
  %4151 = vmatpush.msra.mxu0 %v4060
  %4152 = vmatpush.msra.mxu0 %v4059
  %4153 = vmatmul.f32.gmra.mxu0 %v4108
  %v4154 = vpop.f32.mrf.mxu0
  %v4155 = vadd.f32 %v4135, %v4154
  %4156 = vdwg.mxu0
  %4157 = vmatpush.msra.mxu0 %v4090
  %4158 = vmatpush.msra.mxu0 %v4089
  %4159 = vmatpush.msra.mxu0 %v4088
  %4160 = vmatpush.msra.mxu0 %v4087
  %4161 = vmatpush.msra.mxu0 %v4086
  %4162 = vmatpush.msra.mxu0 %v4085
  %4163 = vmatpush.msra.mxu0 %v4084
  %4164 = vmatpush.msra.mxu0 %v4083
  %4165 = vmatpush.msra.mxu0 %v4082
  %4166 = vmatpush.msra.mxu0 %v4081
  %4167 = vmatpush.msra.mxu0 %v4080
  %4168 = vmatpush.msra.mxu0 %v4079
  %4169 = vmatpush.msra.mxu0 %v4078
  %4170 = vmatpush.msra.mxu0 %v4077
  %4171 = vmatpush.msra.mxu0 %v4076
  %4172 = vmatpush.msra.mxu0 %v4075
  %4173 = vmatmul.f32.gmra.mxu0 %v4109
  %v4174 = vpop.f32.mrf.mxu0
  %v4175 = vadd.f32 %v4155, %v4174
  %4176 = vdwg.mxu0
  %4177 = vmatpush.msra.mxu0 %v4106
  %4178 = vmatpush.msra.mxu0 %v4105
  %4179 = vmatpush.msra.mxu0 %v4104
  %4180 = vmatpush.msra.mxu0 %v4103
  %4181 = vmatpush.msra.mxu0 %v4102
  %4182 = vmatpush.msra.mxu0 %v4101
  %4183 = vmatpush.msra.mxu0 %v4100
  %4184 = vmatpush.msra.mxu0 %v4099
  %4185 = vmatpush.msra.mxu0 %v4098
  %4186 = vmatpush.msra.mxu0 %v4097
  %4187 = vmatpush.msra.mxu0 %v4096
  %4188 = vmatpush.msra.mxu0 %v4095
  %4189 = vmatpush.msra.mxu0 %v4094
  %4190 = vmatpush.msra.mxu0 %v4093
  %4191 = vmatpush.msra.mxu0 %v4092
  %4192 = vmatpush.msra.mxu0 %v4091
  %4193 = vmatmul.f32.gmra.mxu0 %v4110
  %v4194 = vpop.f32.mrf.mxu0
  %v4195 = vadd.f32 %v4175, %v4194
  %4196 = vdwg.mxu0
  %v4197 = vmax.f32 %v4195, 0.0
  %v4198 = vand.u32 2147483647, %v4195
  %v4199 = vsub.f32 0.0, %v4198
  %v4200 = vmul.f32 %v4199, 1.442695
  %v4201 = vpow.pop %v4200
  %v4202 = vadd.f32 %v4201, 1.0
  %v4203 = vlog2.pop %v4202
  %v4204 = vmul.f32 %v4203, 0.6931472
  %v4205 = vadd.f32 %v4197, %v4204
  %vm4206 = vcmask 31744
  %v4207 = vsel %vm4206, %v4205, 0.0
  %v4208 = vrot.slane %v4207, 4
  %v4209 = vadd.f32 %v4207, %v4208
  %v4210 = vrot.slane %v4209, 2
  %v4211 = vadd.f32 %v4209, %v4210
  %v4212 = vrot.slane %v4211, 1
  %v4213 = vadd.f32 %v4211, %v4212
  %v4214 = vrcp.pop %v4213
  %v4215 = vmul.f32 %v4213, %v4214
  %v4216 = vsub.f32 1.0, %v4215
  %v4217 = vmul.f32 %v4214, %v4216
  %v4218 = vadd.f32 %v4214, %v4217
  %vm4219 = vweird.f32 %v4213
  %vm4220 = vweird.f32 %v4214
  %vm4221 = vmor %vm4219, %vm4220
  %v4222 = vsel %vm4221, %v4214, %v4218
  %v4223 = vand.u32 2147483647, %v4213
  %vm4224 = vcmp.eq.f32.partialorder %v4223, 8.507059e+37
  %v4225 = vand.u32 %v4213, 2147483648
  %v4226 = vor.u32 1.1754944e-38, %v4225
  %v4227 = vsel %vm4224, %v4226, %v4222
  %v4228 = vmul.f32 %v4205, %v4227
  %4229 = vst.msk [vmem:[%s10] sm:$0xff] %vm4206, %v4228
  // Predicated region
  $region42: #{tpu_custom_call.1} parent=0 // pred_check
    _
  $region43: #{tpu_custom_call.1} parent=0 // pred_check_branch
    %4231 = sbr.rel (0) target = $region45
  $region44: #{tpu_custom_call.1} parent=0 // pred_region
    _
  $region45: #{tpu_custom_call.1} parent=0 // pred_fallthru
    _
  // Predicated region
  $region46: #{tpu_custom_call.1} parent=0 // pred_check
    _
  $region47: #{tpu_custom_call.1} parent=0 // pred_check_branch
    %4233 = sbr.rel (0) target = $region49
  $region48: #{tpu_custom_call.1} parent=0 // pred_region
    _
  $region49: #{tpu_custom_call.1} parent=0 // pred_fallthru
    _

</llo_original>
